<compile_context>
chip_gen: v7x
topology: tpu7x:2x2x1
jax: 0.10.0
libtpu: 0.0.40
codegen_flags: <defaults>
</compile_context>

<pallas_src>
import functools

import numpy as np
import jax
import jax.numpy as jnp
from jax import lax
from jax.experimental import pallas as pl
from jax.experimental.pallas import tpu as pltpu

NUM_GROUPS = 32
EPS = 1e-6


# --------------------------------------------------------------------------------------
# In-kernel helpers
# --------------------------------------------------------------------------------------
def _swish(v):
    # x * sigmoid(x), written with exp/div only (always-supported EUP/VPU ops)
    return v * (1.0 / (1.0 + jnp.exp(-v)))


def _group_norm(h, p_ref, gamma_ref, beta_ref, eps):
    """GroupNorm on h (C, HW).

    p_ref is a constant (C, C) matrix with entries 1/(group_size*HW) for channel pairs in
    the same group and 0 otherwise, so P @ [sum_x | sum_x^2] yields per-channel group
    mean and E[x^2] directly — no (C,HW) reshape / relayout and a single pass over h.
    """
    C = h.shape[0]
    s1 = jnp.sum(h, axis=1, keepdims=True)        # (C, 1)  sum over spatial
    s2 = jnp.sum(h * h, axis=1, keepdims=True)    # (C, 1)  sum of squares
    lane = lax.broadcasted_iota(jnp.int32, (C, 128), 1)
    stats = jnp.where(lane == 0, s1, 0.0) + jnp.where(lane == 1, s2, 0.0)     # (C, 128)
    g = jnp.dot(p_ref[...], stats, preferred_element_type=jnp.float32)        # (C, 128)
    mean = g[:, 0:1]
    var = g[:, 1:2] - mean * mean
    inv = lax.rsqrt(var + eps)
    return (h - mean) * inv * gamma_ref[...] + beta_ref[...]


def _conv3x3(h, w_ref, b_ref, masks_ref, W):
    """3x3 'same' convolution.

    h: (Cin, HW) f32; w_ref: (9, Cout, Cin) bf16; b_ref: (Cout, 1) f32;
    masks_ref: (9, 1, HW) bf16 zeroing output positions whose tap falls outside the image.
    Implemented as 9 lane-shifted bf16 matmuls with f32 accumulation on the MXU.
    """
    h16 = h.astype(jnp.bfloat16)
    _, HW = h.shape
    Cout = w_ref.shape[1]
    acc = jnp.zeros((Cout, HW), jnp.float32)
    for t in range(9):
        dy, dx = t // 3 - 1, t % 3 - 1
        d = dy * W + dx
        if d == 0:
            shifted = h16                                   # center tap: mask is all-ones
        else:
            # shifted[p] = h[p + d] (wrapped entries are zeroed by the mask)
            shifted = jnp.roll(h16, -d, axis=1) * masks_ref[t]
        acc = acc + jnp.dot(w_ref[t], shifted, preferred_element_type=jnp.float32)
    return acc + b_ref[...]


def _resnet_block_kernel(*refs, W, eps, has_nin):
    if has_nin:
        (x_ref, temb_ref, masks_ref,
         p1_ref, g1_ref, be1_ref, w1_ref, b1_ref,
         wt_ref, bt_ref,
         p2_ref, g2_ref, be2_ref, w2_ref, b2_ref,
         wsc_ref, bsc_ref, o_ref) = refs
    else:
        (x_ref, temb_ref, masks_ref,
         p1_ref, g1_ref, be1_ref, w1_ref, b1_ref,
         wt_ref, bt_ref,
         p2_ref, g2_ref, be2_ref, w2_ref, b2_ref,
         o_ref) = refs
        wsc_ref = bsc_ref = None

    x = x_ref[0]                                            # (Cin, HW) f32

    # norm1 -> swish -> conv1
    h = _swish(_group_norm(x, p1_ref, g1_ref, be1_ref, eps))
    h = _conv3x3(h, w1_ref, b1_ref, masks_ref, W)           # (Cout, HW)

    # + temp_proj(swish(temb))[:, :, None, None]   (tiny: VPU broadcast-mul + lane reduce)
    st = _swish(temb_ref[0])                                # (1, Tc)
    tproj = jnp.sum(wt_ref[...] * st, axis=1, keepdims=True) + bt_ref[...]    # (Cout, 1)
    h = h + tproj

    # norm2 -> swish -> dropout(identity) -> conv2
    h = _swish(_group_norm(h, p2_ref, g2_ref, be2_ref, eps))
    # TODO(synk): nn.Dropout is treated as identity (eval mode); no in-kernel RNG mask.
    h = _conv3x3(h, w2_ref, b2_ref, masks_ref, W)           # (Cout, HW)

    # shortcut (identity or 1x1 nin_shortcut) + residual
    if has_nin:
        xs = jnp.dot(wsc_ref[...], x.astype(jnp.bfloat16),
                     preferred_element_type=jnp.float32) + bsc_ref[...]
    else:
        xs = x
    # TODO(synk): conv_shortcut=True (3x3 shortcut) variant not implemented.
    o_ref[0] = xs + h


# --------------------------------------------------------------------------------------
# Host-side constant builders
# --------------------------------------------------------------------------------------
def _conv_masks(H, W):
    """(9, 1, HW) bf16 validity masks for the 9 taps of a padding=1 3x3 conv."""
    HW = H * W
    yy, xx = np.meshgrid(np.arange(H), np.arange(W), indexing="ij")
    m = np.zeros((9, 1, HW), np.float32)
    for t in range(9):
        dy, dx = t // 3 - 1, t % 3 - 1
        valid = (yy + dy >= 0) & (yy + dy < H) & (xx + dx >= 0) & (xx + dx < W)
        m[t, 0, :] = valid.reshape(-1).astype(np.float32)
    return jnp.asarray(m, dtype=jnp.bfloat16)


def _group_mean_matrix(C, num_groups, HW):
    """(C, C) matrix: 1/(group_size*HW) for same-group channel pairs, else 0."""
    gs = C // num_groups
    gid = np.arange(C) // gs
    p = (gid[:, None] == gid[None, :]).astype(np.float32) / float(gs * HW)
    return jnp.asarray(p)


# --------------------------------------------------------------------------------------
# Wrapper
# --------------------------------------------------------------------------------------
def resnet_block_pallas(x_nchw, temb, params, *, num_groups=NUM_GROUPS, eps=EPS):
    B, Cin, H, W = x_nchw.shape
    HW = H * W
    Cout = params["conv1_w"].shape[0]
    Tc = params["temb_w"].shape[1]
    assert Cin % num_groups == 0 and Cout % num_groups == 0, \
        "channel counts must be multiples of num_groups"
    has_nin = Cin != Cout

    x = x_nchw.reshape(B, Cin, HW).astype(jnp.float32)
    temb3 = temb.reshape(B, 1, Tc).astype(jnp.float32)

    masks = _conv_masks(H, W)                                  # (9, 1, HW) bf16
    P1 = _group_mean_matrix(Cin, num_groups, HW)               # (Cin, Cin) f32
    P2 = _group_mean_matrix(Cout, num_groups, HW)              # (Cout, Cout) f32

    bf16 = jnp.bfloat16
    w1_k = jnp.transpose(params["conv1_w"], (2, 3, 0, 1)).reshape(9, Cout, Cin).astype(bf16)
    w2_k = jnp.transpose(params["conv2_w"], (2, 3, 0, 1)).reshape(9, Cout, Cout).astype(bf16)
    b1_k = params["conv1_b"].reshape(Cout, 1).astype(jnp.float32)
    b2_k = params["conv2_b"].reshape(Cout, 1).astype(jnp.float32)
    g1_k = params["gn1_gamma"].reshape(Cin, 1).astype(jnp.float32)
    be1_k = params["gn1_beta"].reshape(Cin, 1).astype(jnp.float32)
    g2_k = params["gn2_gamma"].reshape(Cout, 1).astype(jnp.float32)
    be2_k = params["gn2_beta"].reshape(Cout, 1).astype(jnp.float32)
    wt_k = params["temb_w"].astype(jnp.float32)                # (Cout, Tc)
    bt_k = params["temb_b"].reshape(Cout, 1).astype(jnp.float32)

    def const_spec(arr):
        nd = arr.ndim
        return pl.BlockSpec(arr.shape, lambda b, _nd=nd: (0,) * _nd)

    operands = [x, temb3, masks, P1, g1_k, be1_k, w1_k, b1_k,
                wt_k, bt_k, P2, g2_k, be2_k, w2_k, b2_k]
    in_specs = [
        pl.BlockSpec((1, Cin, HW), lambda b: (b, 0, 0)),       # x, one batch per step
        pl.BlockSpec((1, 1, Tc), lambda b: (b, 0, 0)),         # temb
        const_spec(masks), const_spec(P1), const_spec(g1_k), const_spec(be1_k),
        const_spec(w1_k), const_spec(b1_k), const_spec(wt_k), const_spec(bt_k),
        const_spec(P2), const_spec(g2_k), const_spec(be2_k),
        const_spec(w2_k), const_spec(b2_k),
    ]
    if has_nin:
        wsc_k = params["nin_w"].astype(bf16)                   # (Cout, Cin)
        bsc_k = params["nin_b"].reshape(Cout, 1).astype(jnp.float32)
        operands += [wsc_k, bsc_k]
        in_specs += [const_spec(wsc_k), const_spec(bsc_k)]

    kernel = functools.partial(_resnet_block_kernel, W=W, eps=eps, has_nin=has_nin)
    out = pl.pallas_call(
        kernel,
        out_shape=jax.ShapeDtypeStruct((B, Cout, HW), jnp.float32),
        grid=(B,),
        in_specs=in_specs,
        out_specs=pl.BlockSpec((1, Cout, HW), lambda b: (b, 0, 0)),
        compiler_params=pltpu.CompilerParams(
            dimension_semantics=("parallel",),
            vmem_limit_bytes=48 * 1024 * 1024),
    )(*operands)
    return out.reshape(B, Cout, H, W)


# --------------------------------------------------------------------------------------
# Parameters (deterministic synthetic init; conv/nin weights rounded to bf16 grid since
# the kernel consumes them as bf16)
# --------------------------------------------------------------------------------------
def init_params(key, Cin, Cout, Tc):
    def uni(k, shape, fan_in):
        bound = 1.0 / np.sqrt(float(fan_in))
        return jax.random.uniform(k, shape, jnp.float32, -bound, bound)

    bf = lambda a: a.astype(jnp.bfloat16).astype(jnp.float32)
    ks = jax.random.split(key, 12)
    p = {
        "gn1_gamma": 1.0 + 0.1 * jax.random.normal(ks[0], (Cin,), jnp.float32),
        "gn1_beta": 0.1 * jax.random.normal(ks[1], (Cin,), jnp.float32),
        "conv1_w": bf(uni(ks[2], (Cout, Cin, 3, 3), Cin * 9)),
        "conv1_b": uni(ks[3], (Cout,), Cin * 9),
        "temb_w": uni(ks[4], (Cout, Tc), Tc),
        "temb_b": uni(ks[5], (Cout,), Tc),
        "gn2_gamma": 1.0 + 0.1 * jax.random.normal(ks[6], (Cout,), jnp.float32),
        "gn2_beta": 0.1 * jax.random.normal(ks[7], (Cout,), jnp.float32),
        "conv2_w": bf(uni(ks[8], (Cout, Cout, 3, 3), Cout * 9)),
        "conv2_b": uni(ks[9], (Cout,), Cout * 9),
    }
    if Cin != Cout:
        p["nin_w"] = bf(uni(ks[10], (Cout, Cin), Cin))
        p["nin_b"] = uni(ks[11], (Cout,), Cin)
    return p


# --------------------------------------------------------------------------------------
# Pure-JAX reference mirroring the PyTorch forward exactly
# --------------------------------------------------------------------------------------
def resnet_block_reference(x, temb, params, *, num_groups=NUM_GROUPS, eps=EPS):
    B, Cin, H, W = x.shape
    Cout = params["conv1_w"].shape[0]

    def gn(h, gamma, beta):
        Bh, C, Hh, Wh = h.shape
        g = h.reshape(Bh, num_groups, (C // num_groups) * Hh * Wh)
        m = jnp.mean(g, axis=2, keepdims=True)
        v = jnp.mean((g - m) ** 2, axis=2, keepdims=True)
        g = (g - m) / jnp.sqrt(v + eps)
        g = g.reshape(Bh, C, Hh, Wh)
        return g * gamma[None, :, None, None] + beta[None, :, None, None]

    def sw(v):
        return v * jax.nn.sigmoid(v)

    def conv3(h, w, b):
        y = lax.conv_general_dilated(h, w, (1, 1), ((1, 1), (1, 1)),
                                     dimension_numbers=("NCHW", "OIHW", "NCHW"),
                                     precision="highest")
        return y + b[None, :, None, None]

    h = conv3(sw(gn(x, params["gn1_gamma"], params["gn1_beta"])),
              params["conv1_w"], params["conv1_b"])
    tp = jnp.dot(sw(temb), params["temb_w"].T, precision="highest") + params["temb_b"]
    h = h + tp[:, :, None, None]
    h = sw(gn(h, params["gn2_gamma"], params["gn2_beta"]))
    # dropout: identity in eval mode
    h = conv3(h, params["conv2_w"], params["conv2_b"])
    if Cin != Cout:
        xs = jnp.einsum("oc,bchw->bohw", params["nin_w"], x, precision="highest")
        xs = xs + params["nin_b"][None, :, None, None]
    else:
        xs = x
    return xs + h


if __name__ == "__main__":
    # Small shapes consistent with the module: channels must be multiples of 32.
    B, Cin, Cout, H, W, Tc = 2, 32, 64, 8, 8, 64
    key = jax.random.PRNGKey(0)
    kx, kt, kp = jax.random.split(key, 3)
    x = jax.random.normal(kx, (B, Cin, H, W), jnp.float32)
    temb = jax.random.normal(kt, (B, Tc), jnp.float32)
    params = init_params(kp, Cin, Cout, Tc)

    out = resnet_block_pallas(x, temb, params)
    out = jax.block_until_ready(out)

    ref = resnet_block_reference(x, temb, params)
    assert out.shape == (B, Cout, H, W)
    # bf16 matmul inputs with f32 accumulation -> loosened tolerance vs fp32 reference
    assert jnp.allclose(out, ref, atol=2e-2, rtol=2e-2), "mismatch vs reference"

    print("KERNEL_OK")
</pallas_src>

<mosaic_0001>
module attributes {stable_mosaic.version = 11 : i64} {
  func.func @_resnet_block_kernel(%arg0: i32, %arg1: memref<1x32x64xf32, #tpu.memory_space<vmem>>, %arg2: memref<1x1x64xf32, #tpu.memory_space<vmem>>, %arg3: memref<9x1x64xbf16, #tpu.memory_space<vmem>>, %arg4: memref<32x32xf32, #tpu.memory_space<vmem>>, %arg5: memref<32x1xf32, #tpu.memory_space<vmem>>, %arg6: memref<32x1xf32, #tpu.memory_space<vmem>>, %arg7: memref<9x64x32xbf16, #tpu.memory_space<vmem>>, %arg8: memref<64x1xf32, #tpu.memory_space<vmem>>, %arg9: memref<64x64xf32, #tpu.memory_space<vmem>>, %arg10: memref<64x1xf32, #tpu.memory_space<vmem>>, %arg11: memref<64x64xf32, #tpu.memory_space<vmem>>, %arg12: memref<64x1xf32, #tpu.memory_space<vmem>>, %arg13: memref<64x1xf32, #tpu.memory_space<vmem>>, %arg14: memref<9x64x64xbf16, #tpu.memory_space<vmem>>, %arg15: memref<64x1xf32, #tpu.memory_space<vmem>>, %arg16: memref<64x32xbf16, #tpu.memory_space<vmem>>, %arg17: memref<64x1xf32, #tpu.memory_space<vmem>>, %arg18: memref<1x64x64xf32, #tpu.memory_space<vmem>>) attributes {dimension_semantics = [#tpu.dimension_semantics<parallel>], iteration_bounds = array<i64: 2>, scalar_prefetch = 0 : i64, scratch_operands = 0 : i64, tpu.core_type = #tpu.core_type<tc>, window_params = [{transform_indices = @transform_0, window_bounds = array<i64: 1, 32, 64>}, {transform_indices = @transform_1, window_bounds = array<i64: 1, 1, 64>}, {pipeline_mode = #tpu.pipeline_mode<synchronous>, transform_indices = @transform_2, window_bounds = array<i64: 9, 1, 64>}, {pipeline_mode = #tpu.pipeline_mode<synchronous>, transform_indices = @transform_3, window_bounds = array<i64: 32, 32>}, {pipeline_mode = #tpu.pipeline_mode<synchronous>, transform_indices = @transform_4, window_bounds = array<i64: 32, 1>}, {pipeline_mode = #tpu.pipeline_mode<synchronous>, transform_indices = @transform_5, window_bounds = array<i64: 32, 1>}, {pipeline_mode = #tpu.pipeline_mode<synchronous>, transform_indices = @transform_6, window_bounds = array<i64: 9, 64, 32>}, {pipeline_mode = #tpu.pipeline_mode<synchronous>, transform_indices = @transform_7, window_bounds = array<i64: 64, 1>}, {pipeline_mode = #tpu.pipeline_mode<synchronous>, transform_indices = @transform_8, window_bounds = array<i64: 64, 64>}, {pipeline_mode = #tpu.pipeline_mode<synchronous>, transform_indices = @transform_9, window_bounds = array<i64: 64, 1>}, {pipeline_mode = #tpu.pipeline_mode<synchronous>, transform_indices = @transform_10, window_bounds = array<i64: 64, 64>}, {pipeline_mode = #tpu.pipeline_mode<synchronous>, transform_indices = @transform_11, window_bounds = array<i64: 64, 1>}, {pipeline_mode = #tpu.pipeline_mode<synchronous>, transform_indices = @transform_12, window_bounds = array<i64: 64, 1>}, {pipeline_mode = #tpu.pipeline_mode<synchronous>, transform_indices = @transform_13, window_bounds = array<i64: 9, 64, 64>}, {pipeline_mode = #tpu.pipeline_mode<synchronous>, transform_indices = @transform_14, window_bounds = array<i64: 64, 1>}, {pipeline_mode = #tpu.pipeline_mode<synchronous>, transform_indices = @transform_15, window_bounds = array<i64: 64, 32>}, {pipeline_mode = #tpu.pipeline_mode<synchronous>, transform_indices = @transform_16, window_bounds = array<i64: 64, 1>}, {transform_indices = @transform_17, window_bounds = array<i64: 1, 64, 64>}]} {
    %c0 = arith.constant 0 : index
    %c0_0 = arith.constant 0 : index
    %c0_1 = arith.constant 0 : index
    %0 = vector.load %arg1[%c0, %c0_0, %c0_1] : memref<1x32x64xf32, #tpu.memory_space<vmem>>, vector<1x32x64xf32>
    %1 = vector.shape_cast %0 : vector<1x32x64xf32> to vector<32x64xf32>
    %cst = arith.constant dense<0.000000e+00> : vector<32xf32>
    %2 = vector.multi_reduction <add>, %1, %cst [1] : vector<32x64xf32> to vector<32xf32>
    %3 = vector.shape_cast %2 : vector<32xf32> to vector<32x1xf32>
    %4 = arith.mulf %1, %1 : vector<32x64xf32>
    %cst_2 = arith.constant dense<0.000000e+00> : vector<32xf32>
    %5 = vector.multi_reduction <add>, %4, %cst_2 [1] : vector<32x64xf32> to vector<32xf32>
    %6 = vector.shape_cast %5 : vector<32xf32> to vector<32x1xf32>
    %7 = tpu.iota {dimensions = array<i32: 1>} : vector<32x128xi32>
    %c0_i32 = arith.constant 0 : i32
    %8 = vector.broadcast %c0_i32 : i32 to vector<32x128xi32>
    %9 = arith.cmpi eq, %7, %8 : vector<32x128xi32>
    %cst_3 = arith.constant 0.000000e+00 : f32
    %10 = vector.shape_cast %3 : vector<32x1xf32> to vector<32x1xf32>
    %11 = vector.broadcast %10 : vector<32x1xf32> to vector<32x128xf32>
    %12 = vector.broadcast %cst_3 : f32 to vector<32x128xf32>
    %13 = arith.select %9, %11, %12 : vector<32x128xi1>, vector<32x128xf32>
    %c1_i32 = arith.constant 1 : i32
    %14 = vector.broadcast %c1_i32 : i32 to vector<32x128xi32>
    %15 = arith.cmpi eq, %7, %14 : vector<32x128xi32>
    %cst_4 = arith.constant 0.000000e+00 : f32
    %16 = vector.shape_cast %6 : vector<32x1xf32> to vector<32x1xf32>
    %17 = vector.broadcast %16 : vector<32x1xf32> to vector<32x128xf32>
    %18 = vector.broadcast %cst_4 : f32 to vector<32x128xf32>
    %19 = arith.select %15, %17, %18 : vector<32x128xi1>, vector<32x128xf32>
    %20 = arith.addf %13, %19 : vector<32x128xf32>
    %c0_5 = arith.constant 0 : index
    %c0_6 = arith.constant 0 : index
    %21 = vector.load %arg4[%c0_5, %c0_6] : memref<32x32xf32, #tpu.memory_space<vmem>>, vector<32x32xf32>
    %cst_7 = arith.constant dense<0.000000e+00> : vector<32x128xf32>
    %22 = tpu.matmul %21, %20, %cst_7 {dimension_numbers = #tpu.dot_dimension_numbers<[1], [0], [0], [1], [0, 0, 1, 1], [], []>} : vector<32x32xf32>, vector<32x128xf32>, vector<32x128xf32> -> vector<32x128xf32>
    %23 = vector.extract_strided_slice %22 {offsets = [0, 0], sizes = [32, 1], strides = [1, 1]} : vector<32x128xf32> to vector<32x1xf32>
    %24 = vector.extract_strided_slice %22 {offsets = [0, 1], sizes = [32, 1], strides = [1, 1]} : vector<32x128xf32> to vector<32x1xf32>
    %25 = arith.mulf %23, %23 : vector<32x1xf32>
    %26 = arith.subf %24, %25 : vector<32x1xf32>
    %cst_8 = arith.constant 9.99999997E-7 : f32
    %27 = vector.broadcast %cst_8 : f32 to vector<32x1xf32>
    %28 = arith.addf %26, %27 : vector<32x1xf32>
    %29 = math.rsqrt %28 : vector<32x1xf32>
    %30 = vector.broadcast %23 : vector<32x1xf32> to vector<32x64xf32>
    %31 = arith.subf %1, %30 : vector<32x64xf32>
    %32 = vector.broadcast %29 : vector<32x1xf32> to vector<32x64xf32>
    %33 = arith.mulf %31, %32 : vector<32x64xf32>
    %c0_9 = arith.constant 0 : index
    %c0_10 = arith.constant 0 : index
    %34 = vector.load %arg5[%c0_9, %c0_10] : memref<32x1xf32, #tpu.memory_space<vmem>>, vector<32x1xf32>
    %35 = vector.broadcast %34 : vector<32x1xf32> to vector<32x64xf32>
    %36 = arith.mulf %33, %35 : vector<32x64xf32>
    %c0_11 = arith.constant 0 : index
    %c0_12 = arith.constant 0 : index
    %37 = vector.load %arg6[%c0_11, %c0_12] : memref<32x1xf32, #tpu.memory_space<vmem>>, vector<32x1xf32>
    %38 = vector.broadcast %37 : vector<32x1xf32> to vector<32x64xf32>
    %39 = arith.addf %36, %38 : vector<32x64xf32>
    %cst_13 = arith.constant 0.000000e+00 : f32
    %40 = vector.broadcast %cst_13 : f32 to vector<32x64xf32>
    %41 = arith.subf %40, %39 : vector<32x64xf32>
    %42 = math.exp %41 : vector<32x64xf32>
    %cst_14 = arith.constant 1.000000e+00 : f32
    %43 = vector.broadcast %cst_14 : f32 to vector<32x64xf32>
    %44 = arith.addf %43, %42 : vector<32x64xf32>
    %cst_15 = arith.constant 1.000000e+00 : f32
    %45 = vector.broadcast %cst_15 : f32 to vector<32x64xf32>
    %46 = arith.divf %45, %44 : vector<32x64xf32>
    %47 = arith.mulf %39, %46 : vector<32x64xf32>
    %48 = arith.truncf %47 : vector<32x64xf32> to vector<32x64xbf16>
    %cst_16 = arith.constant 0.000000e+00 : f32
    %49 = vector.broadcast %cst_16 : f32 to vector<64x64xf32>
    %50 = vector.extract_strided_slice %48 {offsets = [0, 55], sizes = [32, 9], strides = [1, 1]} : vector<32x64xbf16> to vector<32x9xbf16>
    %51 = vector.extract_strided_slice %48 {offsets = [0, 0], sizes = [32, 55], strides = [1, 1]} : vector<32x64xbf16> to vector<32x55xbf16>
    %52 = tpu.concatenate %50, %51 in 1 : vector<32x9xbf16>, vector<32x55xbf16> -> vector<32x64xbf16>
    %c0_17 = arith.constant 0 : index
    %c0_18 = arith.constant 0 : index
    %c0_19 = arith.constant 0 : index
    %53 = vector.load %arg3[%c0_17, %c0_18, %c0_19] : memref<9x1x64xbf16, #tpu.memory_space<vmem>>, vector<1x1x64xbf16>
    %54 = vector.shape_cast %53 : vector<1x1x64xbf16> to vector<1x64xbf16>
    %55 = vector.broadcast %54 : vector<1x64xbf16> to vector<32x64xbf16>
    %56 = arith.mulf %52, %55 : vector<32x64xbf16>
    %c0_20 = arith.constant 0 : index
    %c0_21 = arith.constant 0 : index
    %c0_22 = arith.constant 0 : index
    %57 = vector.load %arg7[%c0_20, %c0_21, %c0_22] : memref<9x64x32xbf16, #tpu.memory_space<vmem>>, vector<1x64x32xbf16>
    %58 = vector.shape_cast %57 : vector<1x64x32xbf16> to vector<64x32xbf16>
    %cst_23 = arith.constant dense<0.000000e+00> : vector<64x64xf32>
    %59 = tpu.matmul %58, %56, %cst_23 {dimension_numbers = #tpu.dot_dimension_numbers<[1], [0], [0], [1], [0, 0, 1, 1], [], []>} : vector<64x32xbf16>, vector<32x64xbf16>, vector<64x64xf32> -> vector<64x64xf32>
    %60 = arith.addf %49, %59 : vector<64x64xf32>
    %61 = vector.extract_strided_slice %48 {offsets = [0, 56], sizes = [32, 8], strides = [1, 1]} : vector<32x64xbf16> to vector<32x8xbf16>
    %62 = vector.extract_strided_slice %48 {offsets = [0, 0], sizes = [32, 56], strides = [1, 1]} : vector<32x64xbf16> to vector<32x56xbf16>
    %63 = tpu.concatenate %61, %62 in 1 : vector<32x8xbf16>, vector<32x56xbf16> -> vector<32x64xbf16>
    %c1 = arith.constant 1 : index
    %c0_24 = arith.constant 0 : index
    %c0_25 = arith.constant 0 : index
    %64 = vector.load %arg3[%c1, %c0_24, %c0_25] : memref<9x1x64xbf16, #tpu.memory_space<vmem>>, vector<1x1x64xbf16>
    %65 = vector.shape_cast %64 : vector<1x1x64xbf16> to vector<1x64xbf16>
    %66 = vector.broadcast %65 : vector<1x64xbf16> to vector<32x64xbf16>
    %67 = arith.mulf %63, %66 : vector<32x64xbf16>
    %c1_26 = arith.constant 1 : index
    %c0_27 = arith.constant 0 : index
    %c0_28 = arith.constant 0 : index
    %68 = vector.load %arg7[%c1_26, %c0_27, %c0_28] : memref<9x64x32xbf16, #tpu.memory_space<vmem>>, vector<1x64x32xbf16>
    %69 = vector.shape_cast %68 : vector<1x64x32xbf16> to vector<64x32xbf16>
    %cst_29 = arith.constant dense<0.000000e+00> : vector<64x64xf32>
    %70 = tpu.matmul %69, %67, %cst_29 {dimension_numbers = #tpu.dot_dimension_numbers<[1], [0], [0], [1], [0, 0, 1, 1], [], []>} : vector<64x32xbf16>, vector<32x64xbf16>, vector<64x64xf32> -> vector<64x64xf32>
    %71 = arith.addf %60, %70 : vector<64x64xf32>
    %72 = vector.extract_strided_slice %48 {offsets = [0, 57], sizes = [32, 7], strides = [1, 1]} : vector<32x64xbf16> to vector<32x7xbf16>
    %73 = vector.extract_strided_slice %48 {offsets = [0, 0], sizes = [32, 57], strides = [1, 1]} : vector<32x64xbf16> to vector<32x57xbf16>
    %74 = tpu.concatenate %72, %73 in 1 : vector<32x7xbf16>, vector<32x57xbf16> -> vector<32x64xbf16>
    %c2 = arith.constant 2 : index
    %c0_30 = arith.constant 0 : index
    %c0_31 = arith.constant 0 : index
    %75 = vector.load %arg3[%c2, %c0_30, %c0_31] : memref<9x1x64xbf16, #tpu.memory_space<vmem>>, vector<1x1x64xbf16>
    %76 = vector.shape_cast %75 : vector<1x1x64xbf16> to vector<1x64xbf16>
    %77 = vector.broadcast %76 : vector<1x64xbf16> to vector<32x64xbf16>
    %78 = arith.mulf %74, %77 : vector<32x64xbf16>
    %c2_32 = arith.constant 2 : index
    %c0_33 = arith.constant 0 : index
    %c0_34 = arith.constant 0 : index
    %79 = vector.load %arg7[%c2_32, %c0_33, %c0_34] : memref<9x64x32xbf16, #tpu.memory_space<vmem>>, vector<1x64x32xbf16>
    %80 = vector.shape_cast %79 : vector<1x64x32xbf16> to vector<64x32xbf16>
    %cst_35 = arith.constant dense<0.000000e+00> : vector<64x64xf32>
    %81 = tpu.matmul %80, %78, %cst_35 {dimension_numbers = #tpu.dot_dimension_numbers<[1], [0], [0], [1], [0, 0, 1, 1], [], []>} : vector<64x32xbf16>, vector<32x64xbf16>, vector<64x64xf32> -> vector<64x64xf32>
    %82 = arith.addf %71, %81 : vector<64x64xf32>
    %83 = vector.extract_strided_slice %48 {offsets = [0, 63], sizes = [32, 1], strides = [1, 1]} : vector<32x64xbf16> to vector<32x1xbf16>
    %84 = vector.extract_strided_slice %48 {offsets = [0, 0], sizes = [32, 63], strides = [1, 1]} : vector<32x64xbf16> to vector<32x63xbf16>
    %85 = tpu.concatenate %83, %84 in 1 : vector<32x1xbf16>, vector<32x63xbf16> -> vector<32x64xbf16>
    %c3 = arith.constant 3 : index
    %c0_36 = arith.constant 0 : index
    %c0_37 = arith.constant 0 : index
    %86 = vector.load %arg3[%c3, %c0_36, %c0_37] : memref<9x1x64xbf16, #tpu.memory_space<vmem>>, vector<1x1x64xbf16>
    %87 = vector.shape_cast %86 : vector<1x1x64xbf16> to vector<1x64xbf16>
    %88 = vector.broadcast %87 : vector<1x64xbf16> to vector<32x64xbf16>
    %89 = arith.mulf %85, %88 : vector<32x64xbf16>
    %c3_38 = arith.constant 3 : index
    %c0_39 = arith.constant 0 : index
    %c0_40 = arith.constant 0 : index
    %90 = vector.load %arg7[%c3_38, %c0_39, %c0_40] : memref<9x64x32xbf16, #tpu.memory_space<vmem>>, vector<1x64x32xbf16>
    %91 = vector.shape_cast %90 : vector<1x64x32xbf16> to vector<64x32xbf16>
    %cst_41 = arith.constant dense<0.000000e+00> : vector<64x64xf32>
    %92 = tpu.matmul %91, %89, %cst_41 {dimension_numbers = #tpu.dot_dimension_numbers<[1], [0], [0], [1], [0, 0, 1, 1], [], []>} : vector<64x32xbf16>, vector<32x64xbf16>, vector<64x64xf32> -> vector<64x64xf32>
    %93 = arith.addf %82, %92 : vector<64x64xf32>
    %c4 = arith.constant 4 : index
    %c0_42 = arith.constant 0 : index
    %c0_43 = arith.constant 0 : index
    %94 = vector.load %arg7[%c4, %c0_42, %c0_43] : memref<9x64x32xbf16, #tpu.memory_space<vmem>>, vector<1x64x32xbf16>
    %95 = vector.shape_cast %94 : vector<1x64x32xbf16> to vector<64x32xbf16>
    %cst_44 = arith.constant dense<0.000000e+00> : vector<64x64xf32>
    %96 = tpu.matmul %95, %48, %cst_44 {dimension_numbers = #tpu.dot_dimension_numbers<[1], [0], [0], [1], [0, 0, 1, 1], [], []>} : vector<64x32xbf16>, vector<32x64xbf16>, vector<64x64xf32> -> vector<64x64xf32>
    %97 = arith.addf %93, %96 : vector<64x64xf32>
    %98 = vector.extract_strided_slice %48 {offsets = [0, 1], sizes = [32, 63], strides = [1, 1]} : vector<32x64xbf16> to vector<32x63xbf16>
    %99 = vector.extract_strided_slice %48 {offsets = [0, 0], sizes = [32, 1], strides = [1, 1]} : vector<32x64xbf16> to vector<32x1xbf16>
    %100 = tpu.concatenate %98, %99 in 1 : vector<32x63xbf16>, vector<32x1xbf16> -> vector<32x64xbf16>
    %c5 = arith.constant 5 : index
    %c0_45 = arith.constant 0 : index
    %c0_46 = arith.constant 0 : index
    %101 = vector.load %arg3[%c5, %c0_45, %c0_46] : memref<9x1x64xbf16, #tpu.memory_space<vmem>>, vector<1x1x64xbf16>
    %102 = vector.shape_cast %101 : vector<1x1x64xbf16> to vector<1x64xbf16>
    %103 = vector.broadcast %102 : vector<1x64xbf16> to vector<32x64xbf16>
    %104 = arith.mulf %100, %103 : vector<32x64xbf16>
    %c5_47 = arith.constant 5 : index
    %c0_48 = arith.constant 0 : index
    %c0_49 = arith.constant 0 : index
    %105 = vector.load %arg7[%c5_47, %c0_48, %c0_49] : memref<9x64x32xbf16, #tpu.memory_space<vmem>>, vector<1x64x32xbf16>
    %106 = vector.shape_cast %105 : vector<1x64x32xbf16> to vector<64x32xbf16>
    %cst_50 = arith.constant dense<0.000000e+00> : vector<64x64xf32>
    %107 = tpu.matmul %106, %104, %cst_50 {dimension_numbers = #tpu.dot_dimension_numbers<[1], [0], [0], [1], [0, 0, 1, 1], [], []>} : vector<64x32xbf16>, vector<32x64xbf16>, vector<64x64xf32> -> vector<64x64xf32>
    %108 = arith.addf %97, %107 : vector<64x64xf32>
    %109 = vector.extract_strided_slice %48 {offsets = [0, 7], sizes = [32, 57], strides = [1, 1]} : vector<32x64xbf16> to vector<32x57xbf16>
    %110 = vector.extract_strided_slice %48 {offsets = [0, 0], sizes = [32, 7], strides = [1, 1]} : vector<32x64xbf16> to vector<32x7xbf16>
    %111 = tpu.concatenate %109, %110 in 1 : vector<32x57xbf16>, vector<32x7xbf16> -> vector<32x64xbf16>
    %c6 = arith.constant 6 : index
    %c0_51 = arith.constant 0 : index
    %c0_52 = arith.constant 0 : index
    %112 = vector.load %arg3[%c6, %c0_51, %c0_52] : memref<9x1x64xbf16, #tpu.memory_space<vmem>>, vector<1x1x64xbf16>
    %113 = vector.shape_cast %112 : vector<1x1x64xbf16> to vector<1x64xbf16>
    %114 = vector.broadcast %113 : vector<1x64xbf16> to vector<32x64xbf16>
    %115 = arith.mulf %111, %114 : vector<32x64xbf16>
    %c6_53 = arith.constant 6 : index
    %c0_54 = arith.constant 0 : index
    %c0_55 = arith.constant 0 : index
    %116 = vector.load %arg7[%c6_53, %c0_54, %c0_55] : memref<9x64x32xbf16, #tpu.memory_space<vmem>>, vector<1x64x32xbf16>
    %117 = vector.shape_cast %116 : vector<1x64x32xbf16> to vector<64x32xbf16>
    %cst_56 = arith.constant dense<0.000000e+00> : vector<64x64xf32>
    %118 = tpu.matmul %117, %115, %cst_56 {dimension_numbers = #tpu.dot_dimension_numbers<[1], [0], [0], [1], [0, 0, 1, 1], [], []>} : vector<64x32xbf16>, vector<32x64xbf16>, vector<64x64xf32> -> vector<64x64xf32>
    %119 = arith.addf %108, %118 : vector<64x64xf32>
    %120 = vector.extract_strided_slice %48 {offsets = [0, 8], sizes = [32, 56], strides = [1, 1]} : vector<32x64xbf16> to vector<32x56xbf16>
    %121 = vector.extract_strided_slice %48 {offsets = [0, 0], sizes = [32, 8], strides = [1, 1]} : vector<32x64xbf16> to vector<32x8xbf16>
    %122 = tpu.concatenate %120, %121 in 1 : vector<32x56xbf16>, vector<32x8xbf16> -> vector<32x64xbf16>
    %c7 = arith.constant 7 : index
    %c0_57 = arith.constant 0 : index
    %c0_58 = arith.constant 0 : index
    %123 = vector.load %arg3[%c7, %c0_57, %c0_58] : memref<9x1x64xbf16, #tpu.memory_space<vmem>>, vector<1x1x64xbf16>
    %124 = vector.shape_cast %123 : vector<1x1x64xbf16> to vector<1x64xbf16>
    %125 = vector.broadcast %124 : vector<1x64xbf16> to vector<32x64xbf16>
    %126 = arith.mulf %122, %125 : vector<32x64xbf16>
    %c7_59 = arith.constant 7 : index
    %c0_60 = arith.constant 0 : index
    %c0_61 = arith.constant 0 : index
    %127 = vector.load %arg7[%c7_59, %c0_60, %c0_61] : memref<9x64x32xbf16, #tpu.memory_space<vmem>>, vector<1x64x32xbf16>
    %128 = vector.shape_cast %127 : vector<1x64x32xbf16> to vector<64x32xbf16>
    %cst_62 = arith.constant dense<0.000000e+00> : vector<64x64xf32>
    %129 = tpu.matmul %128, %126, %cst_62 {dimension_numbers = #tpu.dot_dimension_numbers<[1], [0], [0], [1], [0, 0, 1, 1], [], []>} : vector<64x32xbf16>, vector<32x64xbf16>, vector<64x64xf32> -> vector<64x64xf32>
    %130 = arith.addf %119, %129 : vector<64x64xf32>
    %131 = vector.extract_strided_slice %48 {offsets = [0, 9], sizes = [32, 55], strides = [1, 1]} : vector<32x64xbf16> to vector<32x55xbf16>
    %132 = vector.extract_strided_slice %48 {offsets = [0, 0], sizes = [32, 9], strides = [1, 1]} : vector<32x64xbf16> to vector<32x9xbf16>
    %133 = tpu.concatenate %131, %132 in 1 : vector<32x55xbf16>, vector<32x9xbf16> -> vector<32x64xbf16>
    %c8 = arith.constant 8 : index
    %c0_63 = arith.constant 0 : index
    %c0_64 = arith.constant 0 : index
    %134 = vector.load %arg3[%c8, %c0_63, %c0_64] : memref<9x1x64xbf16, #tpu.memory_space<vmem>>, vector<1x1x64xbf16>
    %135 = vector.shape_cast %134 : vector<1x1x64xbf16> to vector<1x64xbf16>
    %136 = vector.broadcast %135 : vector<1x64xbf16> to vector<32x64xbf16>
    %137 = arith.mulf %133, %136 : vector<32x64xbf16>
    %c8_65 = arith.constant 8 : index
    %c0_66 = arith.constant 0 : index
    %c0_67 = arith.constant 0 : index
    %138 = vector.load %arg7[%c8_65, %c0_66, %c0_67] : memref<9x64x32xbf16, #tpu.memory_space<vmem>>, vector<1x64x32xbf16>
    %139 = vector.shape_cast %138 : vector<1x64x32xbf16> to vector<64x32xbf16>
    %cst_68 = arith.constant dense<0.000000e+00> : vector<64x64xf32>
    %140 = tpu.matmul %139, %137, %cst_68 {dimension_numbers = #tpu.dot_dimension_numbers<[1], [0], [0], [1], [0, 0, 1, 1], [], []>} : vector<64x32xbf16>, vector<32x64xbf16>, vector<64x64xf32> -> vector<64x64xf32>
    %141 = arith.addf %130, %140 : vector<64x64xf32>
    %c0_69 = arith.constant 0 : index
    %c0_70 = arith.constant 0 : index
    %142 = vector.load %arg8[%c0_69, %c0_70] : memref<64x1xf32, #tpu.memory_space<vmem>>, vector<64x1xf32>
    %143 = vector.broadcast %142 : vector<64x1xf32> to vector<64x64xf32>
    %144 = arith.addf %141, %143 : vector<64x64xf32>
    %c0_71 = arith.constant 0 : index
    %c0_72 = arith.constant 0 : index
    %c0_73 = arith.constant 0 : index
    %145 = vector.load %arg2[%c0_71, %c0_72, %c0_73] : memref<1x1x64xf32, #tpu.memory_space<vmem>>, vector<1x1x64xf32>
    %146 = vector.shape_cast %145 : vector<1x1x64xf32> to vector<1x64xf32>
    %cst_74 = arith.constant 0.000000e+00 : f32
    %147 = vector.broadcast %cst_74 : f32 to vector<1x64xf32>
    %148 = arith.subf %147, %146 : vector<1x64xf32>
    %149 = math.exp %148 : vector<1x64xf32>
    %cst_75 = arith.constant 1.000000e+00 : f32
    %150 = vector.broadcast %cst_75 : f32 to vector<1x64xf32>
    %151 = arith.addf %150, %149 : vector<1x64xf32>
    %cst_76 = arith.constant 1.000000e+00 : f32
    %152 = vector.broadcast %cst_76 : f32 to vector<1x64xf32>
    %153 = arith.divf %152, %151 : vector<1x64xf32>
    %154 = arith.mulf %146, %153 : vector<1x64xf32>
    %c0_77 = arith.constant 0 : index
    %c0_78 = arith.constant 0 : index
    %155 = vector.load %arg9[%c0_77, %c0_78] : memref<64x64xf32, #tpu.memory_space<vmem>>, vector<64x64xf32>
    %156 = vector.broadcast %154 : vector<1x64xf32> to vector<64x64xf32>
    %157 = arith.mulf %155, %156 : vector<64x64xf32>
    %cst_79 = arith.constant dense<0.000000e+00> : vector<64xf32>
    %158 = vector.multi_reduction <add>, %157, %cst_79 [1] : vector<64x64xf32> to vector<64xf32>
    %159 = vector.shape_cast %158 : vector<64xf32> to vector<64x1xf32>
    %c0_80 = arith.constant 0 : index
    %c0_81 = arith.constant 0 : index
    %160 = vector.load %arg10[%c0_80, %c0_81] : memref<64x1xf32, #tpu.memory_space<vmem>>, vector<64x1xf32>
    %161 = arith.addf %159, %160 : vector<64x1xf32>
    %162 = vector.broadcast %161 : vector<64x1xf32> to vector<64x64xf32>
    %163 = arith.addf %144, %162 : vector<64x64xf32>
    %cst_82 = arith.constant dense<0.000000e+00> : vector<64xf32>
    %164 = vector.multi_reduction <add>, %163, %cst_82 [1] : vector<64x64xf32> to vector<64xf32>
    %165 = vector.shape_cast %164 : vector<64xf32> to vector<64x1xf32>
    %166 = arith.mulf %163, %163 : vector<64x64xf32>
    %cst_83 = arith.constant dense<0.000000e+00> : vector<64xf32>
    %167 = vector.multi_reduction <add>, %166, %cst_83 [1] : vector<64x64xf32> to vector<64xf32>
    %168 = vector.shape_cast %167 : vector<64xf32> to vector<64x1xf32>
    %169 = tpu.iota {dimensions = array<i32: 1>} : vector<64x128xi32>
    %c0_i32_84 = arith.constant 0 : i32
    %170 = vector.broadcast %c0_i32_84 : i32 to vector<64x128xi32>
    %171 = arith.cmpi eq, %169, %170 : vector<64x128xi32>
    %cst_85 = arith.constant 0.000000e+00 : f32
    %172 = vector.shape_cast %165 : vector<64x1xf32> to vector<64x1xf32>
    %173 = vector.broadcast %172 : vector<64x1xf32> to vector<64x128xf32>
    %174 = vector.broadcast %cst_85 : f32 to vector<64x128xf32>
    %175 = arith.select %171, %173, %174 : vector<64x128xi1>, vector<64x128xf32>
    %c1_i32_86 = arith.constant 1 : i32
    %176 = vector.broadcast %c1_i32_86 : i32 to vector<64x128xi32>
    %177 = arith.cmpi eq, %169, %176 : vector<64x128xi32>
    %cst_87 = arith.constant 0.000000e+00 : f32
    %178 = vector.shape_cast %168 : vector<64x1xf32> to vector<64x1xf32>
    %179 = vector.broadcast %178 : vector<64x1xf32> to vector<64x128xf32>
    %180 = vector.broadcast %cst_87 : f32 to vector<64x128xf32>
    %181 = arith.select %177, %179, %180 : vector<64x128xi1>, vector<64x128xf32>
    %182 = arith.addf %175, %181 : vector<64x128xf32>
    %c0_88 = arith.constant 0 : index
    %c0_89 = arith.constant 0 : index
    %183 = vector.load %arg11[%c0_88, %c0_89] : memref<64x64xf32, #tpu.memory_space<vmem>>, vector<64x64xf32>
    %cst_90 = arith.constant dense<0.000000e+00> : vector<64x128xf32>
    %184 = tpu.matmul %183, %182, %cst_90 {dimension_numbers = #tpu.dot_dimension_numbers<[1], [0], [0], [1], [0, 0, 1, 1], [], []>} : vector<64x64xf32>, vector<64x128xf32>, vector<64x128xf32> -> vector<64x128xf32>
    %185 = vector.extract_strided_slice %184 {offsets = [0, 0], sizes = [64, 1], strides = [1, 1]} : vector<64x128xf32> to vector<64x1xf32>
    %186 = vector.extract_strided_slice %184 {offsets = [0, 1], sizes = [64, 1], strides = [1, 1]} : vector<64x128xf32> to vector<64x1xf32>
    %187 = arith.mulf %185, %185 : vector<64x1xf32>
    %188 = arith.subf %186, %187 : vector<64x1xf32>
    %cst_91 = arith.constant 9.99999997E-7 : f32
    %189 = vector.broadcast %cst_91 : f32 to vector<64x1xf32>
    %190 = arith.addf %188, %189 : vector<64x1xf32>
    %191 = math.rsqrt %190 : vector<64x1xf32>
    %192 = vector.broadcast %185 : vector<64x1xf32> to vector<64x64xf32>
    %193 = arith.subf %163, %192 : vector<64x64xf32>
    %194 = vector.broadcast %191 : vector<64x1xf32> to vector<64x64xf32>
    %195 = arith.mulf %193, %194 : vector<64x64xf32>
    %c0_92 = arith.constant 0 : index
    %c0_93 = arith.constant 0 : index
    %196 = vector.load %arg12[%c0_92, %c0_93] : memref<64x1xf32, #tpu.memory_space<vmem>>, vector<64x1xf32>
    %197 = vector.broadcast %196 : vector<64x1xf32> to vector<64x64xf32>
    %198 = arith.mulf %195, %197 : vector<64x64xf32>
    %c0_94 = arith.constant 0 : index
    %c0_95 = arith.constant 0 : index
    %199 = vector.load %arg13[%c0_94, %c0_95] : memref<64x1xf32, #tpu.memory_space<vmem>>, vector<64x1xf32>
    %200 = vector.broadcast %199 : vector<64x1xf32> to vector<64x64xf32>
    %201 = arith.addf %198, %200 : vector<64x64xf32>
    %cst_96 = arith.constant 0.000000e+00 : f32
    %202 = vector.broadcast %cst_96 : f32 to vector<64x64xf32>
    %203 = arith.subf %202, %201 : vector<64x64xf32>
    %204 = math.exp %203 : vector<64x64xf32>
    %cst_97 = arith.constant 1.000000e+00 : f32
    %205 = vector.broadcast %cst_97 : f32 to vector<64x64xf32>
    %206 = arith.addf %205, %204 : vector<64x64xf32>
    %cst_98 = arith.constant 1.000000e+00 : f32
    %207 = vector.broadcast %cst_98 : f32 to vector<64x64xf32>
    %208 = arith.divf %207, %206 : vector<64x64xf32>
    %209 = arith.mulf %201, %208 : vector<64x64xf32>
    %210 = arith.truncf %209 : vector<64x64xf32> to vector<64x64xbf16>
    %cst_99 = arith.constant 0.000000e+00 : f32
    %211 = vector.broadcast %cst_99 : f32 to vector<64x64xf32>
    %212 = vector.extract_strided_slice %210 {offsets = [0, 55], sizes = [64, 9], strides = [1, 1]} : vector<64x64xbf16> to vector<64x9xbf16>
    %213 = vector.extract_strided_slice %210 {offsets = [0, 0], sizes = [64, 55], strides = [1, 1]} : vector<64x64xbf16> to vector<64x55xbf16>
    %214 = tpu.concatenate %212, %213 in 1 : vector<64x9xbf16>, vector<64x55xbf16> -> vector<64x64xbf16>
    %c0_100 = arith.constant 0 : index
    %c0_101 = arith.constant 0 : index
    %c0_102 = arith.constant 0 : index
    %215 = vector.load %arg3[%c0_100, %c0_101, %c0_102] : memref<9x1x64xbf16, #tpu.memory_space<vmem>>, vector<1x1x64xbf16>
    %216 = vector.shape_cast %215 : vector<1x1x64xbf16> to vector<1x64xbf16>
    %217 = vector.broadcast %216 : vector<1x64xbf16> to vector<64x64xbf16>
    %218 = arith.mulf %214, %217 : vector<64x64xbf16>
    %c0_103 = arith.constant 0 : index
    %c0_104 = arith.constant 0 : index
    %c0_105 = arith.constant 0 : index
    %219 = vector.load %arg14[%c0_103, %c0_104, %c0_105] : memref<9x64x64xbf16, #tpu.memory_space<vmem>>, vector<1x64x64xbf16>
    %220 = vector.shape_cast %219 : vector<1x64x64xbf16> to vector<64x64xbf16>
    %cst_106 = arith.constant dense<0.000000e+00> : vector<64x64xf32>
    %221 = tpu.matmul %220, %218, %cst_106 {dimension_numbers = #tpu.dot_dimension_numbers<[1], [0], [0], [1], [0, 0, 1, 1], [], []>} : vector<64x64xbf16>, vector<64x64xbf16>, vector<64x64xf32> -> vector<64x64xf32>
    %222 = arith.addf %211, %221 : vector<64x64xf32>
    %223 = vector.extract_strided_slice %210 {offsets = [0, 56], sizes = [64, 8], strides = [1, 1]} : vector<64x64xbf16> to vector<64x8xbf16>
    %224 = vector.extract_strided_slice %210 {offsets = [0, 0], sizes = [64, 56], strides = [1, 1]} : vector<64x64xbf16> to vector<64x56xbf16>
    %225 = tpu.concatenate %223, %224 in 1 : vector<64x8xbf16>, vector<64x56xbf16> -> vector<64x64xbf16>
    %c1_107 = arith.constant 1 : index
    %c0_108 = arith.constant 0 : index
    %c0_109 = arith.constant 0 : index
    %226 = vector.load %arg3[%c1_107, %c0_108, %c0_109] : memref<9x1x64xbf16, #tpu.memory_space<vmem>>, vector<1x1x64xbf16>
    %227 = vector.shape_cast %226 : vector<1x1x64xbf16> to vector<1x64xbf16>
    %228 = vector.broadcast %227 : vector<1x64xbf16> to vector<64x64xbf16>
    %229 = arith.mulf %225, %228 : vector<64x64xbf16>
    %c1_110 = arith.constant 1 : index
    %c0_111 = arith.constant 0 : index
    %c0_112 = arith.constant 0 : index
    %230 = vector.load %arg14[%c1_110, %c0_111, %c0_112] : memref<9x64x64xbf16, #tpu.memory_space<vmem>>, vector<1x64x64xbf16>
    %231 = vector.shape_cast %230 : vector<1x64x64xbf16> to vector<64x64xbf16>
    %cst_113 = arith.constant dense<0.000000e+00> : vector<64x64xf32>
    %232 = tpu.matmul %231, %229, %cst_113 {dimension_numbers = #tpu.dot_dimension_numbers<[1], [0], [0], [1], [0, 0, 1, 1], [], []>} : vector<64x64xbf16>, vector<64x64xbf16>, vector<64x64xf32> -> vector<64x64xf32>
    %233 = arith.addf %222, %232 : vector<64x64xf32>
    %234 = vector.extract_strided_slice %210 {offsets = [0, 57], sizes = [64, 7], strides = [1, 1]} : vector<64x64xbf16> to vector<64x7xbf16>
    %235 = vector.extract_strided_slice %210 {offsets = [0, 0], sizes = [64, 57], strides = [1, 1]} : vector<64x64xbf16> to vector<64x57xbf16>
    %236 = tpu.concatenate %234, %235 in 1 : vector<64x7xbf16>, vector<64x57xbf16> -> vector<64x64xbf16>
    %c2_114 = arith.constant 2 : index
    %c0_115 = arith.constant 0 : index
    %c0_116 = arith.constant 0 : index
    %237 = vector.load %arg3[%c2_114, %c0_115, %c0_116] : memref<9x1x64xbf16, #tpu.memory_space<vmem>>, vector<1x1x64xbf16>
    %238 = vector.shape_cast %237 : vector<1x1x64xbf16> to vector<1x64xbf16>
    %239 = vector.broadcast %238 : vector<1x64xbf16> to vector<64x64xbf16>
    %240 = arith.mulf %236, %239 : vector<64x64xbf16>
    %c2_117 = arith.constant 2 : index
    %c0_118 = arith.constant 0 : index
    %c0_119 = arith.constant 0 : index
    %241 = vector.load %arg14[%c2_117, %c0_118, %c0_119] : memref<9x64x64xbf16, #tpu.memory_space<vmem>>, vector<1x64x64xbf16>
    %242 = vector.shape_cast %241 : vector<1x64x64xbf16> to vector<64x64xbf16>
    %cst_120 = arith.constant dense<0.000000e+00> : vector<64x64xf32>
    %243 = tpu.matmul %242, %240, %cst_120 {dimension_numbers = #tpu.dot_dimension_numbers<[1], [0], [0], [1], [0, 0, 1, 1], [], []>} : vector<64x64xbf16>, vector<64x64xbf16>, vector<64x64xf32> -> vector<64x64xf32>
    %244 = arith.addf %233, %243 : vector<64x64xf32>
    %245 = vector.extract_strided_slice %210 {offsets = [0, 63], sizes = [64, 1], strides = [1, 1]} : vector<64x64xbf16> to vector<64x1xbf16>
    %246 = vector.extract_strided_slice %210 {offsets = [0, 0], sizes = [64, 63], strides = [1, 1]} : vector<64x64xbf16> to vector<64x63xbf16>
    %247 = tpu.concatenate %245, %246 in 1 : vector<64x1xbf16>, vector<64x63xbf16> -> vector<64x64xbf16>
    %c3_121 = arith.constant 3 : index
    %c0_122 = arith.constant 0 : index
    %c0_123 = arith.constant 0 : index
    %248 = vector.load %arg3[%c3_121, %c0_122, %c0_123] : memref<9x1x64xbf16, #tpu.memory_space<vmem>>, vector<1x1x64xbf16>
    %249 = vector.shape_cast %248 : vector<1x1x64xbf16> to vector<1x64xbf16>
    %250 = vector.broadcast %249 : vector<1x64xbf16> to vector<64x64xbf16>
    %251 = arith.mulf %247, %250 : vector<64x64xbf16>
    %c3_124 = arith.constant 3 : index
    %c0_125 = arith.constant 0 : index
    %c0_126 = arith.constant 0 : index
    %252 = vector.load %arg14[%c3_124, %c0_125, %c0_126] : memref<9x64x64xbf16, #tpu.memory_space<vmem>>, vector<1x64x64xbf16>
    %253 = vector.shape_cast %252 : vector<1x64x64xbf16> to vector<64x64xbf16>
    %cst_127 = arith.constant dense<0.000000e+00> : vector<64x64xf32>
    %254 = tpu.matmul %253, %251, %cst_127 {dimension_numbers = #tpu.dot_dimension_numbers<[1], [0], [0], [1], [0, 0, 1, 1], [], []>} : vector<64x64xbf16>, vector<64x64xbf16>, vector<64x64xf32> -> vector<64x64xf32>
    %255 = arith.addf %244, %254 : vector<64x64xf32>
    %c4_128 = arith.constant 4 : index
    %c0_129 = arith.constant 0 : index
    %c0_130 = arith.constant 0 : index
    %256 = vector.load %arg14[%c4_128, %c0_129, %c0_130] : memref<9x64x64xbf16, #tpu.memory_space<vmem>>, vector<1x64x64xbf16>
    %257 = vector.shape_cast %256 : vector<1x64x64xbf16> to vector<64x64xbf16>
    %cst_131 = arith.constant dense<0.000000e+00> : vector<64x64xf32>
    %258 = tpu.matmul %257, %210, %cst_131 {dimension_numbers = #tpu.dot_dimension_numbers<[1], [0], [0], [1], [0, 0, 1, 1], [], []>} : vector<64x64xbf16>, vector<64x64xbf16>, vector<64x64xf32> -> vector<64x64xf32>
    %259 = arith.addf %255, %258 : vector<64x64xf32>
    %260 = vector.extract_strided_slice %210 {offsets = [0, 1], sizes = [64, 63], strides = [1, 1]} : vector<64x64xbf16> to vector<64x63xbf16>
    %261 = vector.extract_strided_slice %210 {offsets = [0, 0], sizes = [64, 1], strides = [1, 1]} : vector<64x64xbf16> to vector<64x1xbf16>
    %262 = tpu.concatenate %260, %261 in 1 : vector<64x63xbf16>, vector<64x1xbf16> -> vector<64x64xbf16>
    %c5_132 = arith.constant 5 : index
    %c0_133 = arith.constant 0 : index
    %c0_134 = arith.constant 0 : index
    %263 = vector.load %arg3[%c5_132, %c0_133, %c0_134] : memref<9x1x64xbf16, #tpu.memory_space<vmem>>, vector<1x1x64xbf16>
    %264 = vector.shape_cast %263 : vector<1x1x64xbf16> to vector<1x64xbf16>
    %265 = vector.broadcast %264 : vector<1x64xbf16> to vector<64x64xbf16>
    %266 = arith.mulf %262, %265 : vector<64x64xbf16>
    %c5_135 = arith.constant 5 : index
    %c0_136 = arith.constant 0 : index
    %c0_137 = arith.constant 0 : index
    %267 = vector.load %arg14[%c5_135, %c0_136, %c0_137] : memref<9x64x64xbf16, #tpu.memory_space<vmem>>, vector<1x64x64xbf16>
    %268 = vector.shape_cast %267 : vector<1x64x64xbf16> to vector<64x64xbf16>
    %cst_138 = arith.constant dense<0.000000e+00> : vector<64x64xf32>
    %269 = tpu.matmul %268, %266, %cst_138 {dimension_numbers = #tpu.dot_dimension_numbers<[1], [0], [0], [1], [0, 0, 1, 1], [], []>} : vector<64x64xbf16>, vector<64x64xbf16>, vector<64x64xf32> -> vector<64x64xf32>
    %270 = arith.addf %259, %269 : vector<64x64xf32>
    %271 = vector.extract_strided_slice %210 {offsets = [0, 7], sizes = [64, 57], strides = [1, 1]} : vector<64x64xbf16> to vector<64x57xbf16>
    %272 = vector.extract_strided_slice %210 {offsets = [0, 0], sizes = [64, 7], strides = [1, 1]} : vector<64x64xbf16> to vector<64x7xbf16>
    %273 = tpu.concatenate %271, %272 in 1 : vector<64x57xbf16>, vector<64x7xbf16> -> vector<64x64xbf16>
    %c6_139 = arith.constant 6 : index
    %c0_140 = arith.constant 0 : index
    %c0_141 = arith.constant 0 : index
    %274 = vector.load %arg3[%c6_139, %c0_140, %c0_141] : memref<9x1x64xbf16, #tpu.memory_space<vmem>>, vector<1x1x64xbf16>
    %275 = vector.shape_cast %274 : vector<1x1x64xbf16> to vector<1x64xbf16>
    %276 = vector.broadcast %275 : vector<1x64xbf16> to vector<64x64xbf16>
    %277 = arith.mulf %273, %276 : vector<64x64xbf16>
    %c6_142 = arith.constant 6 : index
    %c0_143 = arith.constant 0 : index
    %c0_144 = arith.constant 0 : index
    %278 = vector.load %arg14[%c6_142, %c0_143, %c0_144] : memref<9x64x64xbf16, #tpu.memory_space<vmem>>, vector<1x64x64xbf16>
    %279 = vector.shape_cast %278 : vector<1x64x64xbf16> to vector<64x64xbf16>
    %cst_145 = arith.constant dense<0.000000e+00> : vector<64x64xf32>
    %280 = tpu.matmul %279, %277, %cst_145 {dimension_numbers = #tpu.dot_dimension_numbers<[1], [0], [0], [1], [0, 0, 1, 1], [], []>} : vector<64x64xbf16>, vector<64x64xbf16>, vector<64x64xf32> -> vector<64x64xf32>
    %281 = arith.addf %270, %280 : vector<64x64xf32>
    %282 = vector.extract_strided_slice %210 {offsets = [0, 8], sizes = [64, 56], strides = [1, 1]} : vector<64x64xbf16> to vector<64x56xbf16>
    %283 = vector.extract_strided_slice %210 {offsets = [0, 0], sizes = [64, 8], strides = [1, 1]} : vector<64x64xbf16> to vector<64x8xbf16>
    %284 = tpu.concatenate %282, %283 in 1 : vector<64x56xbf16>, vector<64x8xbf16> -> vector<64x64xbf16>
    %c7_146 = arith.constant 7 : index
    %c0_147 = arith.constant 0 : index
    %c0_148 = arith.constant 0 : index
    %285 = vector.load %arg3[%c7_146, %c0_147, %c0_148] : memref<9x1x64xbf16, #tpu.memory_space<vmem>>, vector<1x1x64xbf16>
    %286 = vector.shape_cast %285 : vector<1x1x64xbf16> to vector<1x64xbf16>
    %287 = vector.broadcast %286 : vector<1x64xbf16> to vector<64x64xbf16>
    %288 = arith.mulf %284, %287 : vector<64x64xbf16>
    %c7_149 = arith.constant 7 : index
    %c0_150 = arith.constant 0 : index
    %c0_151 = arith.constant 0 : index
    %289 = vector.load %arg14[%c7_149, %c0_150, %c0_151] : memref<9x64x64xbf16, #tpu.memory_space<vmem>>, vector<1x64x64xbf16>
    %290 = vector.shape_cast %289 : vector<1x64x64xbf16> to vector<64x64xbf16>
    %cst_152 = arith.constant dense<0.000000e+00> : vector<64x64xf32>
    %291 = tpu.matmul %290, %288, %cst_152 {dimension_numbers = #tpu.dot_dimension_numbers<[1], [0], [0], [1], [0, 0, 1, 1], [], []>} : vector<64x64xbf16>, vector<64x64xbf16>, vector<64x64xf32> -> vector<64x64xf32>
    %292 = arith.addf %281, %291 : vector<64x64xf32>
    %293 = vector.extract_strided_slice %210 {offsets = [0, 9], sizes = [64, 55], strides = [1, 1]} : vector<64x64xbf16> to vector<64x55xbf16>
    %294 = vector.extract_strided_slice %210 {offsets = [0, 0], sizes = [64, 9], strides = [1, 1]} : vector<64x64xbf16> to vector<64x9xbf16>
    %295 = tpu.concatenate %293, %294 in 1 : vector<64x55xbf16>, vector<64x9xbf16> -> vector<64x64xbf16>
    %c8_153 = arith.constant 8 : index
    %c0_154 = arith.constant 0 : index
    %c0_155 = arith.constant 0 : index
    %296 = vector.load %arg3[%c8_153, %c0_154, %c0_155] : memref<9x1x64xbf16, #tpu.memory_space<vmem>>, vector<1x1x64xbf16>
    %297 = vector.shape_cast %296 : vector<1x1x64xbf16> to vector<1x64xbf16>
    %298 = vector.broadcast %297 : vector<1x64xbf16> to vector<64x64xbf16>
    %299 = arith.mulf %295, %298 : vector<64x64xbf16>
    %c8_156 = arith.constant 8 : index
    %c0_157 = arith.constant 0 : index
    %c0_158 = arith.constant 0 : index
    %300 = vector.load %arg14[%c8_156, %c0_157, %c0_158] : memref<9x64x64xbf16, #tpu.memory_space<vmem>>, vector<1x64x64xbf16>
    %301 = vector.shape_cast %300 : vector<1x64x64xbf16> to vector<64x64xbf16>
    %cst_159 = arith.constant dense<0.000000e+00> : vector<64x64xf32>
    %302 = tpu.matmul %301, %299, %cst_159 {dimension_numbers = #tpu.dot_dimension_numbers<[1], [0], [0], [1], [0, 0, 1, 1], [], []>} : vector<64x64xbf16>, vector<64x64xbf16>, vector<64x64xf32> -> vector<64x64xf32>
    %303 = arith.addf %292, %302 : vector<64x64xf32>
    %c0_160 = arith.constant 0 : index
    %c0_161 = arith.constant 0 : index
    %304 = vector.load %arg15[%c0_160, %c0_161] : memref<64x1xf32, #tpu.memory_space<vmem>>, vector<64x1xf32>
    %305 = vector.broadcast %304 : vector<64x1xf32> to vector<64x64xf32>
    %306 = arith.addf %303, %305 : vector<64x64xf32>
    %c0_162 = arith.constant 0 : index
    %c0_163 = arith.constant 0 : index
    %307 = vector.load %arg16[%c0_162, %c0_163] : memref<64x32xbf16, #tpu.memory_space<vmem>>, vector<64x32xbf16>
    %308 = arith.truncf %1 : vector<32x64xf32> to vector<32x64xbf16>
    %cst_164 = arith.constant dense<0.000000e+00> : vector<64x64xf32>
    %309 = tpu.matmul %307, %308, %cst_164 {dimension_numbers = #tpu.dot_dimension_numbers<[1], [0], [0], [1], [0, 0, 1, 1], [], []>} : vector<64x32xbf16>, vector<32x64xbf16>, vector<64x64xf32> -> vector<64x64xf32>
    %c0_165 = arith.constant 0 : index
    %c0_166 = arith.constant 0 : index
    %310 = vector.load %arg17[%c0_165, %c0_166] : memref<64x1xf32, #tpu.memory_space<vmem>>, vector<64x1xf32>
    %311 = vector.broadcast %310 : vector<64x1xf32> to vector<64x64xf32>
    %312 = arith.addf %309, %311 : vector<64x64xf32>
    %313 = arith.addf %312, %306 : vector<64x64xf32>
    %c0_167 = arith.constant 0 : index
    %c0_168 = arith.constant 0 : index
    %c0_169 = arith.constant 0 : index
    %314 = vector.load %arg18[%c0_167, %c0_168, %c0_169] : memref<1x64x64xf32, #tpu.memory_space<vmem>>, vector<1x64x64xf32>
    %315 = vector.shape_cast %314 : vector<1x64x64xf32> to vector<64x64xf32>
    %316 = vector.shape_cast %313 : vector<64x64xf32> to vector<1x64x64xf32>
    tpu.vector_store %arg18[%c0_167, %c0_168, %c0_169], %316 {strides = array<i32>} : memref<1x64x64xf32, #tpu.memory_space<vmem>>, vector<1x64x64xf32>,
    return
  }
  func.func @transform_0(%arg0: i32) -> (i32, i32, i32) {
    %c0_i32 = arith.constant 0 : i32
    %c0_i32_0 = arith.constant 0 : i32
    %c0_i32_1 = arith.constant 0 : i32
    return %arg0, %c0_i32, %c0_i32_0 : i32, i32, i32
  }
  func.func @transform_1(%arg0: i32) -> (i32, i32, i32) {
    %c0_i32 = arith.constant 0 : i32
    %c0_i32_0 = arith.constant 0 : i32
    %c0_i32_1 = arith.constant 0 : i32
    return %arg0, %c0_i32, %c0_i32_0 : i32, i32, i32
  }
  func.func @transform_2(%arg0: i32) -> (i32, i32, i32) {
    %c0_i32 = arith.constant 0 : i32
    %c0_i32_0 = arith.constant 0 : i32
    %c0_i32_1 = arith.constant 0 : i32
    %c0_i32_2 = arith.constant 0 : i32
    return %c0_i32, %c0_i32_0, %c0_i32_1 : i32, i32, i32
  }
  func.func @transform_3(%arg0: i32) -> (i32, i32) {
    %c0_i32 = arith.constant 0 : i32
    %c0_i32_0 = arith.constant 0 : i32
    %c0_i32_1 = arith.constant 0 : i32
    return %c0_i32, %c0_i32_0 : i32, i32
  }
  func.func @transform_4(%arg0: i32) -> (i32, i32) {
    %c0_i32 = arith.constant 0 : i32
    %c0_i32_0 = arith.constant 0 : i32
    %c0_i32_1 = arith.constant 0 : i32
    return %c0_i32, %c0_i32_0 : i32, i32
  }
  func.func @transform_5(%arg0: i32) -> (i32, i32) {
    %c0_i32 = arith.constant 0 : i32
    %c0_i32_0 = arith.constant 0 : i32
    %c0_i32_1 = arith.constant 0 : i32
    return %c0_i32, %c0_i32_0 : i32, i32
  }
  func.func @transform_6(%arg0: i32) -> (i32, i32, i32) {
    %c0_i32 = arith.constant 0 : i32
    %c0_i32_0 = arith.constant 0 : i32
    %c0_i32_1 = arith.constant 0 : i32
    %c0_i32_2 = arith.constant 0 : i32
    return %c0_i32, %c0_i32_0, %c0_i32_1 : i32, i32, i32
  }
  func.func @transform_7(%arg0: i32) -> (i32, i32) {
    %c0_i32 = arith.constant 0 : i32
    %c0_i32_0 = arith.constant 0 : i32
    %c0_i32_1 = arith.constant 0 : i32
    return %c0_i32, %c0_i32_0 : i32, i32
  }
  func.func @transform_8(%arg0: i32) -> (i32, i32) {
    %c0_i32 = arith.constant 0 : i32
    %c0_i32_0 = arith.constant 0 : i32
    %c0_i32_1 = arith.constant 0 : i32
    return %c0_i32, %c0_i32_0 : i32, i32
  }
  func.func @transform_9(%arg0: i32) -> (i32, i32) {
    %c0_i32 = arith.constant 0 : i32
    %c0_i32_0 = arith.constant 0 : i32
    %c0_i32_1 = arith.constant 0 : i32
    return %c0_i32, %c0_i32_0 : i32, i32
  }
  func.func @transform_10(%arg0: i32) -> (i32, i32) {
    %c0_i32 = arith.constant 0 : i32
    %c0_i32_0 = arith.constant 0 : i32
    %c0_i32_1 = arith.constant 0 : i32
    return %c0_i32, %c0_i32_0 : i32, i32
  }
  func.func @transform_11(%arg0: i32) -> (i32, i32) {
    %c0_i32 = arith.constant 0 : i32
    %c0_i32_0 = arith.constant 0 : i32
    %c0_i32_1 = arith.constant 0 : i32
    return %c0_i32, %c0_i32_0 : i32, i32
  }
  func.func @transform_12(%arg0: i32) -> (i32, i32) {
    %c0_i32 = arith.constant 0 : i32
    %c0_i32_0 = arith.constant 0 : i32
    %c0_i32_1 = arith.constant 0 : i32
    return %c0_i32, %c0_i32_0 : i32, i32
  }
  func.func @transform_13(%arg0: i32) -> (i32, i32, i32) {
    %c0_i32 = arith.constant 0 : i32
    %c0_i32_0 = arith.constant 0 : i32
    %c0_i32_1 = arith.constant 0 : i32
    %c0_i32_2 = arith.constant 0 : i32
    return %c0_i32, %c0_i32_0, %c0_i32_1 : i32, i32, i32
  }
  func.func @transform_14(%arg0: i32) -> (i32, i32) {
    %c0_i32 = arith.constant 0 : i32
    %c0_i32_0 = arith.constant 0 : i32
    %c0_i32_1 = arith.constant 0 : i32
    return %c0_i32, %c0_i32_0 : i32, i32
  }
  func.func @transform_15(%arg0: i32) -> (i32, i32) {
    %c0_i32 = arith.constant 0 : i32
    %c0_i32_0 = arith.constant 0 : i32
    %c0_i32_1 = arith.constant 0 : i32
    return %c0_i32, %c0_i32_0 : i32, i32
  }
  func.func @transform_16(%arg0: i32) -> (i32, i32) {
    %c0_i32 = arith.constant 0 : i32
    %c0_i32_0 = arith.constant 0 : i32
    %c0_i32_1 = arith.constant 0 : i32
    return %c0_i32, %c0_i32_0 : i32, i32
  }
  func.func @transform_17(%arg0: i32) -> (i32, i32, i32) {
    %c0_i32 = arith.constant 0 : i32
    %c0_i32_0 = arith.constant 0 : i32
    %c0_i32_1 = arith.constant 0 : i32
    return %arg0, %c0_i32, %c0_i32_0 : i32, i32, i32
  }
}

</mosaic_0001>

<llo_original>
// kernel: tpu_custom_call.1
$region0: #{tpu_custom_call.1}
  #allocation0 [shape = 'u32[]', space=smem, size = 0x4, offset = 0x4, fixed_abs, tag = 'smem constant byte address 0x4 - core index']
  #allocation1 [shape = 'u32[144,128]{1,0:T(1,128)}', space=vmem, size = 0x12000, scoped, tag = 'internal scratch']
  %s0 = inlined_call_operand.vmem [shape: f32[2,32,64], index: 0, kind: input, shape index: {}]
  %s1 = inlined_call_operand.vmem [shape: f32[2,1,64], index: 1, kind: input, shape index: {}]
  %s2 = inlined_call_operand.vmem [shape: bf16[9,1,64], index: 2, kind: input, shape index: {}]
  %s3 = inlined_call_operand.vmem [shape: f32[32,32], index: 3, kind: input, shape index: {}]
  %s4 = inlined_call_operand.vmem [shape: f32[32,1], index: 4, kind: input, shape index: {}]
  %s5 = inlined_call_operand.vmem [shape: f32[32,1], index: 5, kind: input, shape index: {}]
  %s6 = inlined_call_operand.vmem [shape: bf16[9,64,32], index: 6, kind: input, shape index: {}]
  %s7 = inlined_call_operand.vmem [shape: f32[64,1], index: 7, kind: input, shape index: {}]
  %s8 = inlined_call_operand.vmem [shape: f32[64,64], index: 8, kind: input, shape index: {}]
  %s9 = inlined_call_operand.vmem [shape: f32[64,1], index: 9, kind: input, shape index: {}]
  %s10 = inlined_call_operand.vmem [shape: f32[64,64], index: 10, kind: input, shape index: {}]
  %s11 = inlined_call_operand.vmem [shape: f32[64,1], index: 11, kind: input, shape index: {}]
  %s12 = inlined_call_operand.vmem [shape: f32[64,1], index: 12, kind: input, shape index: {}]
  %s13 = inlined_call_operand.vmem [shape: bf16[9,64,64], index: 13, kind: input, shape index: {}]
  %s14 = inlined_call_operand.vmem [shape: f32[64,1], index: 14, kind: input, shape index: {}]
  %s15 = inlined_call_operand.vmem [shape: bf16[64,32], index: 15, kind: input, shape index: {}]
  %s16 = inlined_call_operand.vmem [shape: f32[64,1], index: 16, kind: input, shape index: {}]
  %s17 = inlined_call_operand.hbm [shape: f32[2,64,64], index: 17, kind: output, shape index: {}]
  %s18 = sld [smem:[#allocation0]]
  $region101: #{tpu_custom_call.1} parent=0
    _
  %s20 = ssub.s32 1, %s18
  %s21 = scalar_select 0, %s20, %s18
  $region1: #{tpu_custom_call.1} parent=0
    #allocation2 [shape = 'u8[65536]{0}', space=vmem, size = 0x10000, scoped, tag = 'output window, operand 0']
    #allocation3 [shape = 's32[2]{0}', space=sflag, size = 0x8, scoped, tag = 'scoped memory for tpu_custom_call.1']
    %22 = vsyncpa [#allocation3], 0
    %s23 = scalar_lea.sflag [#allocation3], 1
    %24 = vsyncpa %s23, 0
    loop: start=0, step=1, limit=4
    $region2: #{tpu_custom_call.1} parent=1 // loop_pre_header
      _
    $region3: #{tpu_custom_call.1} parent=1 // loop_header
      %s26 = sphi 0, %s30
      %p27 = scmp.ge.s32.totalorder %s26, 4
      %s36 = sphi 0, %s38
      %s39 = sphi 0, %s36
      %s40 = sphi 0, %s39
      %s56 = sphi 0, %s40
      %s62 = sphi 0, %s64
      %s65 = sphi 0, %s62
      %s66 = sphi 0, %s65
      %s82 = sphi 0, %s66
      %s86 = sphi 0, %s86
      %s88 = sphi 0, %s86
      %s89 = sphi 0, %s88
      %s103 = sphi 0, %s89
      %s107 = sphi 0, %s107
      %s109 = sphi 0, %s107
      %s110 = sphi 0, %s109
      %s124 = sphi 0, %s110
      %s128 = sphi 0, %s128
      %s130 = sphi 0, %s128
      %s131 = sphi 0, %s130
      %s145 = sphi 0, %s131
      %s149 = sphi 0, %s149
      %s151 = sphi 0, %s149
      %s152 = sphi 0, %s151
      %s166 = sphi 0, %s152
      %s170 = sphi 0, %s170
      %s172 = sphi 0, %s170
      %s173 = sphi 0, %s172
      %s187 = sphi 0, %s173
      %s191 = sphi 0, %s191
      %s193 = sphi 0, %s191
      %s194 = sphi 0, %s193
      %s208 = sphi 0, %s194
      %s212 = sphi 0, %s212
      %s214 = sphi 0, %s212
      %s215 = sphi 0, %s214
      %s229 = sphi 0, %s215
      %s233 = sphi 0, %s233
      %s235 = sphi 0, %s233
      %s236 = sphi 0, %s235
      %s250 = sphi 0, %s236
      %s254 = sphi 0, %s254
      %s256 = sphi 0, %s254
      %s257 = sphi 0, %s256
      %s271 = sphi 0, %s257
      %s275 = sphi 0, %s275
      %s277 = sphi 0, %s275
      %s278 = sphi 0, %s277
      %s292 = sphi 0, %s278
      %s296 = sphi 0, %s296
      %s298 = sphi 0, %s296
      %s299 = sphi 0, %s298
      %s313 = sphi 0, %s299
      %s317 = sphi 0, %s317
      %s319 = sphi 0, %s317
      %s320 = sphi 0, %s319
      %s334 = sphi 0, %s320
      %s338 = sphi 0, %s338
      %s340 = sphi 0, %s338
      %s341 = sphi 0, %s340
      %s355 = sphi 0, %s341
      %s359 = sphi 0, %s359
      %s361 = sphi 0, %s359
      %s362 = sphi 0, %s361
      %s376 = sphi 0, %s362
      %s380 = sphi 0, %s380
      %s382 = sphi 0, %s380
      %s383 = sphi 0, %s382
      %s397 = sphi 0, %s383
      %s403 = sphi 0, %s405
      %s406 = sphi 0, %s403
      %s407 = sphi 0, %s406
      %s423 = sphi 0, %s407
    $region4: #{tpu_custom_call.1} parent=1 // loop_header_branch
      %29 = sbr.rel (%p27) target = $region8
    $region5: #{tpu_custom_call.1} parent=1 // loop_body
      %s31 = ssub.s32 %s26, 1
      %s32 = ssub.s32 %s26, 2
      %s33 = sadd.s32 %s26, 1
      %s34 = ssub.s32 %s26, %s33
      %p35 = scmp.eq.s32.totalorder %s34, 0
      %s37 = sadd.s32 %s36, 1
      %s38 = scalar_select %p35, %s36, %s37
      %p41 = pneg %p35
      %p42 = scmp.eq.s32.totalorder %s26, 1
      %p43 = por %p41, %p42
      %p44 = scmp.ne.s32.totalorder %s36, %s39
      %p45 = scmp.eq.s32.totalorder %s26, 0
      %p46 = por %p44, %p45
      %p47 = scmp.ne.s32.totalorder %s36, %s39
      %p48 = scmp.eq.s32.totalorder %s31, 1
      %p49 = por %p47, %p48
      %p50 = scmp.ne.s32.totalorder %s39, %s40
      %p51 = scmp.eq.s32.totalorder %s31, 0
      %p52 = por %p50, %p51
      %p53 = scmp.ne.s32.totalorder %s39, %s40
      %p54 = scmp.eq.s32.totalorder %s32, 1
      %p55 = por %p53, %p54
      %p57 = scmp.ne.s32.totalorder %s40, %s56
      %p58 = scmp.eq.s32.totalorder %s32, 0
      %p59 = por %p57, %p58
      %s60 = ssub.s32 %s26, %s33
      %p61 = scmp.eq.s32.totalorder %s60, 0
      %s63 = sadd.s32 %s62, 1
      %s64 = scalar_select %p61, %s62, %s63
      %p67 = pneg %p61
      %p68 = scmp.eq.s32.totalorder %s26, 1
      %p69 = por %p67, %p68
      %p70 = scmp.ne.s32.totalorder %s62, %s65
      %p71 = scmp.eq.s32.totalorder %s26, 0
      %p72 = por %p70, %p71
      %p73 = scmp.ne.s32.totalorder %s62, %s65
      %p74 = scmp.eq.s32.totalorder %s31, 1
      %p75 = por %p73, %p74
      %p76 = scmp.ne.s32.totalorder %s65, %s66
      %p77 = scmp.eq.s32.totalorder %s31, 0
      %p78 = por %p76, %p77
      %p79 = scmp.ne.s32.totalorder %s65, %s66
      %p80 = scmp.eq.s32.totalorder %s32, 1
      %p81 = por %p79, %p80
      %p83 = scmp.ne.s32.totalorder %s66, %s82
      %p84 = scmp.eq.s32.totalorder %s32, 0
      %p85 = por %p83, %p84
      %s87 = sadd.s32 %s86, 1
      %p90 = scmp.eq.s32.totalorder %s26, 1
      %p91 = scmp.ne.s32.totalorder %s86, %s88
      %p92 = scmp.eq.s32.totalorder %s26, 0
      %p93 = por %p91, %p92
      %p94 = scmp.ne.s32.totalorder %s86, %s88
      %p95 = scmp.eq.s32.totalorder %s31, 1
      %p96 = por %p94, %p95
      %p97 = scmp.ne.s32.totalorder %s88, %s89
      %p98 = scmp.eq.s32.totalorder %s31, 0
      %p99 = por %p97, %p98
      %p100 = scmp.ne.s32.totalorder %s88, %s89
      %p101 = scmp.eq.s32.totalorder %s32, 1
      %p102 = por %p100, %p101
      %p104 = scmp.ne.s32.totalorder %s89, %s103
      %p105 = scmp.eq.s32.totalorder %s32, 0
      %p106 = por %p104, %p105
      %s108 = sadd.s32 %s107, 1
      %p111 = scmp.eq.s32.totalorder %s26, 1
      %p112 = scmp.ne.s32.totalorder %s107, %s109
      %p113 = scmp.eq.s32.totalorder %s26, 0
      %p114 = por %p112, %p113
      %p115 = scmp.ne.s32.totalorder %s107, %s109
      %p116 = scmp.eq.s32.totalorder %s31, 1
      %p117 = por %p115, %p116
      %p118 = scmp.ne.s32.totalorder %s109, %s110
      %p119 = scmp.eq.s32.totalorder %s31, 0
      %p120 = por %p118, %p119
      %p121 = scmp.ne.s32.totalorder %s109, %s110
      %p122 = scmp.eq.s32.totalorder %s32, 1
      %p123 = por %p121, %p122
      %p125 = scmp.ne.s32.totalorder %s110, %s124
      %p126 = scmp.eq.s32.totalorder %s32, 0
      %p127 = por %p125, %p126
      %s129 = sadd.s32 %s128, 1
      %p132 = scmp.eq.s32.totalorder %s26, 1
      %p133 = scmp.ne.s32.totalorder %s128, %s130
      %p134 = scmp.eq.s32.totalorder %s26, 0
      %p135 = por %p133, %p134
      %p136 = scmp.ne.s32.totalorder %s128, %s130
      %p137 = scmp.eq.s32.totalorder %s31, 1
      %p138 = por %p136, %p137
      %p139 = scmp.ne.s32.totalorder %s130, %s131
      %p140 = scmp.eq.s32.totalorder %s31, 0
      %p141 = por %p139, %p140
      %p142 = scmp.ne.s32.totalorder %s130, %s131
      %p143 = scmp.eq.s32.totalorder %s32, 1
      %p144 = por %p142, %p143
      %p146 = scmp.ne.s32.totalorder %s131, %s145
      %p147 = scmp.eq.s32.totalorder %s32, 0
      %p148 = por %p146, %p147
      %s150 = sadd.s32 %s149, 1
      %p153 = scmp.eq.s32.totalorder %s26, 1
      %p154 = scmp.ne.s32.totalorder %s149, %s151
      %p155 = scmp.eq.s32.totalorder %s26, 0
      %p156 = por %p154, %p155
      %p157 = scmp.ne.s32.totalorder %s149, %s151
      %p158 = scmp.eq.s32.totalorder %s31, 1
      %p159 = por %p157, %p158
      %p160 = scmp.ne.s32.totalorder %s151, %s152
      %p161 = scmp.eq.s32.totalorder %s31, 0
      %p162 = por %p160, %p161
      %p163 = scmp.ne.s32.totalorder %s151, %s152
      %p164 = scmp.eq.s32.totalorder %s32, 1
      %p165 = por %p163, %p164
      %p167 = scmp.ne.s32.totalorder %s152, %s166
      %p168 = scmp.eq.s32.totalorder %s32, 0
      %p169 = por %p167, %p168
      %s171 = sadd.s32 %s170, 1
      %p174 = scmp.eq.s32.totalorder %s26, 1
      %p175 = scmp.ne.s32.totalorder %s170, %s172
      %p176 = scmp.eq.s32.totalorder %s26, 0
      %p177 = por %p175, %p176
      %p178 = scmp.ne.s32.totalorder %s170, %s172
      %p179 = scmp.eq.s32.totalorder %s31, 1
      %p180 = por %p178, %p179
      %p181 = scmp.ne.s32.totalorder %s172, %s173
      %p182 = scmp.eq.s32.totalorder %s31, 0
      %p183 = por %p181, %p182
      %p184 = scmp.ne.s32.totalorder %s172, %s173
      %p185 = scmp.eq.s32.totalorder %s32, 1
      %p186 = por %p184, %p185
      %p188 = scmp.ne.s32.totalorder %s173, %s187
      %p189 = scmp.eq.s32.totalorder %s32, 0
      %p190 = por %p188, %p189
      %s192 = sadd.s32 %s191, 1
      %p195 = scmp.eq.s32.totalorder %s26, 1
      %p196 = scmp.ne.s32.totalorder %s191, %s193
      %p197 = scmp.eq.s32.totalorder %s26, 0
      %p198 = por %p196, %p197
      %p199 = scmp.ne.s32.totalorder %s191, %s193
      %p200 = scmp.eq.s32.totalorder %s31, 1
      %p201 = por %p199, %p200
      %p202 = scmp.ne.s32.totalorder %s193, %s194
      %p203 = scmp.eq.s32.totalorder %s31, 0
      %p204 = por %p202, %p203
      %p205 = scmp.ne.s32.totalorder %s193, %s194
      %p206 = scmp.eq.s32.totalorder %s32, 1
      %p207 = por %p205, %p206
      %p209 = scmp.ne.s32.totalorder %s194, %s208
      %p210 = scmp.eq.s32.totalorder %s32, 0
      %p211 = por %p209, %p210
      %s213 = sadd.s32 %s212, 1
      %p216 = scmp.eq.s32.totalorder %s26, 1
      %p217 = scmp.ne.s32.totalorder %s212, %s214
      %p218 = scmp.eq.s32.totalorder %s26, 0
      %p219 = por %p217, %p218
      %p220 = scmp.ne.s32.totalorder %s212, %s214
      %p221 = scmp.eq.s32.totalorder %s31, 1
      %p222 = por %p220, %p221
      %p223 = scmp.ne.s32.totalorder %s214, %s215
      %p224 = scmp.eq.s32.totalorder %s31, 0
      %p225 = por %p223, %p224
      %p226 = scmp.ne.s32.totalorder %s214, %s215
      %p227 = scmp.eq.s32.totalorder %s32, 1
      %p228 = por %p226, %p227
      %p230 = scmp.ne.s32.totalorder %s215, %s229
      %p231 = scmp.eq.s32.totalorder %s32, 0
      %p232 = por %p230, %p231
      %s234 = sadd.s32 %s233, 1
      %p237 = scmp.eq.s32.totalorder %s26, 1
      %p238 = scmp.ne.s32.totalorder %s233, %s235
      %p239 = scmp.eq.s32.totalorder %s26, 0
      %p240 = por %p238, %p239
      %p241 = scmp.ne.s32.totalorder %s233, %s235
      %p242 = scmp.eq.s32.totalorder %s31, 1
      %p243 = por %p241, %p242
      %p244 = scmp.ne.s32.totalorder %s235, %s236
      %p245 = scmp.eq.s32.totalorder %s31, 0
      %p246 = por %p244, %p245
      %p247 = scmp.ne.s32.totalorder %s235, %s236
      %p248 = scmp.eq.s32.totalorder %s32, 1
      %p249 = por %p247, %p248
      %p251 = scmp.ne.s32.totalorder %s236, %s250
      %p252 = scmp.eq.s32.totalorder %s32, 0
      %p253 = por %p251, %p252
      %s255 = sadd.s32 %s254, 1
      %p258 = scmp.eq.s32.totalorder %s26, 1
      %p259 = scmp.ne.s32.totalorder %s254, %s256
      %p260 = scmp.eq.s32.totalorder %s26, 0
      %p261 = por %p259, %p260
      %p262 = scmp.ne.s32.totalorder %s254, %s256
      %p263 = scmp.eq.s32.totalorder %s31, 1
      %p264 = por %p262, %p263
      %p265 = scmp.ne.s32.totalorder %s256, %s257
      %p266 = scmp.eq.s32.totalorder %s31, 0
      %p267 = por %p265, %p266
      %p268 = scmp.ne.s32.totalorder %s256, %s257
      %p269 = scmp.eq.s32.totalorder %s32, 1
      %p270 = por %p268, %p269
      %p272 = scmp.ne.s32.totalorder %s257, %s271
      %p273 = scmp.eq.s32.totalorder %s32, 0
      %p274 = por %p272, %p273
      %s276 = sadd.s32 %s275, 1
      %p279 = scmp.eq.s32.totalorder %s26, 1
      %p280 = scmp.ne.s32.totalorder %s275, %s277
      %p281 = scmp.eq.s32.totalorder %s26, 0
      %p282 = por %p280, %p281
      %p283 = scmp.ne.s32.totalorder %s275, %s277
      %p284 = scmp.eq.s32.totalorder %s31, 1
      %p285 = por %p283, %p284
      %p286 = scmp.ne.s32.totalorder %s277, %s278
      %p287 = scmp.eq.s32.totalorder %s31, 0
      %p288 = por %p286, %p287
      %p289 = scmp.ne.s32.totalorder %s277, %s278
      %p290 = scmp.eq.s32.totalorder %s32, 1
      %p291 = por %p289, %p290
      %p293 = scmp.ne.s32.totalorder %s278, %s292
      %p294 = scmp.eq.s32.totalorder %s32, 0
      %p295 = por %p293, %p294
      %s297 = sadd.s32 %s296, 1
      %p300 = scmp.eq.s32.totalorder %s26, 1
      %p301 = scmp.ne.s32.totalorder %s296, %s298
      %p302 = scmp.eq.s32.totalorder %s26, 0
      %p303 = por %p301, %p302
      %p304 = scmp.ne.s32.totalorder %s296, %s298
      %p305 = scmp.eq.s32.totalorder %s31, 1
      %p306 = por %p304, %p305
      %p307 = scmp.ne.s32.totalorder %s298, %s299
      %p308 = scmp.eq.s32.totalorder %s31, 0
      %p309 = por %p307, %p308
      %p310 = scmp.ne.s32.totalorder %s298, %s299
      %p311 = scmp.eq.s32.totalorder %s32, 1
      %p312 = por %p310, %p311
      %p314 = scmp.ne.s32.totalorder %s299, %s313
      %p315 = scmp.eq.s32.totalorder %s32, 0
      %p316 = por %p314, %p315
      %s318 = sadd.s32 %s317, 1
      %p321 = scmp.eq.s32.totalorder %s26, 1
      %p322 = scmp.ne.s32.totalorder %s317, %s319
      %p323 = scmp.eq.s32.totalorder %s26, 0
      %p324 = por %p322, %p323
      %p325 = scmp.ne.s32.totalorder %s317, %s319
      %p326 = scmp.eq.s32.totalorder %s31, 1
      %p327 = por %p325, %p326
      %p328 = scmp.ne.s32.totalorder %s319, %s320
      %p329 = scmp.eq.s32.totalorder %s31, 0
      %p330 = por %p328, %p329
      %p331 = scmp.ne.s32.totalorder %s319, %s320
      %p332 = scmp.eq.s32.totalorder %s32, 1
      %p333 = por %p331, %p332
      %p335 = scmp.ne.s32.totalorder %s320, %s334
      %p336 = scmp.eq.s32.totalorder %s32, 0
      %p337 = por %p335, %p336
      %s339 = sadd.s32 %s338, 1
      %p342 = scmp.eq.s32.totalorder %s26, 1
      %p343 = scmp.ne.s32.totalorder %s338, %s340
      %p344 = scmp.eq.s32.totalorder %s26, 0
      %p345 = por %p343, %p344
      %p346 = scmp.ne.s32.totalorder %s338, %s340
      %p347 = scmp.eq.s32.totalorder %s31, 1
      %p348 = por %p346, %p347
      %p349 = scmp.ne.s32.totalorder %s340, %s341
      %p350 = scmp.eq.s32.totalorder %s31, 0
      %p351 = por %p349, %p350
      %p352 = scmp.ne.s32.totalorder %s340, %s341
      %p353 = scmp.eq.s32.totalorder %s32, 1
      %p354 = por %p352, %p353
      %p356 = scmp.ne.s32.totalorder %s341, %s355
      %p357 = scmp.eq.s32.totalorder %s32, 0
      %p358 = por %p356, %p357
      %s360 = sadd.s32 %s359, 1
      %p363 = scmp.eq.s32.totalorder %s26, 1
      %p364 = scmp.ne.s32.totalorder %s359, %s361
      %p365 = scmp.eq.s32.totalorder %s26, 0
      %p366 = por %p364, %p365
      %p367 = scmp.ne.s32.totalorder %s359, %s361
      %p368 = scmp.eq.s32.totalorder %s31, 1
      %p369 = por %p367, %p368
      %p370 = scmp.ne.s32.totalorder %s361, %s362
      %p371 = scmp.eq.s32.totalorder %s31, 0
      %p372 = por %p370, %p371
      %p373 = scmp.ne.s32.totalorder %s361, %s362
      %p374 = scmp.eq.s32.totalorder %s32, 1
      %p375 = por %p373, %p374
      %p377 = scmp.ne.s32.totalorder %s362, %s376
      %p378 = scmp.eq.s32.totalorder %s32, 0
      %p379 = por %p377, %p378
      %s381 = sadd.s32 %s380, 1
      %p384 = scmp.eq.s32.totalorder %s26, 1
      %p385 = scmp.ne.s32.totalorder %s380, %s382
      %p386 = scmp.eq.s32.totalorder %s26, 0
      %p387 = por %p385, %p386
      %p388 = scmp.ne.s32.totalorder %s380, %s382
      %p389 = scmp.eq.s32.totalorder %s31, 1
      %p390 = por %p388, %p389
      %p391 = scmp.ne.s32.totalorder %s382, %s383
      %p392 = scmp.eq.s32.totalorder %s31, 0
      %p393 = por %p391, %p392
      %p394 = scmp.ne.s32.totalorder %s382, %s383
      %p395 = scmp.eq.s32.totalorder %s32, 1
      %p396 = por %p394, %p395
      %p398 = scmp.ne.s32.totalorder %s383, %s397
      %p399 = scmp.eq.s32.totalorder %s32, 0
      %p400 = por %p398, %p399
      %s401 = ssub.s32 %s26, %s33
      %p402 = scmp.eq.s32.totalorder %s401, 0
      %s404 = sadd.s32 %s403, 1
      %s405 = scalar_select %p402, %s403, %s404
      %p408 = pneg %p402
      %p409 = scmp.eq.s32.totalorder %s26, 1
      %p410 = por %p408, %p409
      %p411 = scmp.ne.s32.totalorder %s403, %s406
      %p412 = scmp.eq.s32.totalorder %s26, 0
      %p413 = por %p411, %p412
      %p414 = scmp.ne.s32.totalorder %s403, %s406
      %p415 = scmp.eq.s32.totalorder %s31, 1
      %p416 = por %p414, %p415
      %p417 = scmp.ne.s32.totalorder %s406, %s407
      %p418 = scmp.eq.s32.totalorder %s31, 0
      %p419 = por %p417, %p418
      %p420 = scmp.ne.s32.totalorder %s406, %s407
      %p421 = scmp.eq.s32.totalorder %s32, 1
      %p422 = por %p420, %p421
      %p424 = scmp.ne.s32.totalorder %s407, %s423
      %p425 = scmp.eq.s32.totalorder %s32, 0
      %p426 = por %p424, %p425
      %p427 = scmp.le.s32.totalorder 1, %s26
      %p428 = scmp.lt.s32.totalorder %s26, 3
      %p429 = pnand %p427, %p428
      %p430 = pneg %p429
      // Predicated region
      $region9: #{tpu_custom_call.1} parent=5 // pred_check
        _
      $region10: #{tpu_custom_call.1} parent=5 // pred_check_branch
        %432 = sbr.rel (%p429) target = $region12
      $region11: #{tpu_custom_call.1} parent=5 // pred_region
        %s433 = ssub.s32 %s26, 1
        // Predicated region
        $region13: #{tpu_custom_call.1} parent=11 // pred_check
          %p434 = pneg %p99
        $region14: #{tpu_custom_call.1} parent=11 // pred_check_branch
          %436 = sbr.rel (%p434) target = $region16
        $region15: #{tpu_custom_call.1} parent=11 // pred_region
          _
        $region16: #{tpu_custom_call.1} parent=11 // pred_fallthru
          _
        // Predicated region
        $region17: #{tpu_custom_call.1} parent=11 // pred_check
          %p437 = pneg %p120
        $region18: #{tpu_custom_call.1} parent=11 // pred_check_branch
          %439 = sbr.rel (%p437) target = $region20
        $region19: #{tpu_custom_call.1} parent=11 // pred_region
          _
        $region20: #{tpu_custom_call.1} parent=11 // pred_fallthru
          _
        // Predicated region
        $region21: #{tpu_custom_call.1} parent=11 // pred_check
          %p440 = pneg %p141
        $region22: #{tpu_custom_call.1} parent=11 // pred_check_branch
          %442 = sbr.rel (%p440) target = $region24
        $region23: #{tpu_custom_call.1} parent=11 // pred_region
          _
        $region24: #{tpu_custom_call.1} parent=11 // pred_fallthru
          _
        // Predicated region
        $region25: #{tpu_custom_call.1} parent=11 // pred_check
          %p443 = pneg %p162
        $region26: #{tpu_custom_call.1} parent=11 // pred_check_branch
          %445 = sbr.rel (%p443) target = $region28
        $region27: #{tpu_custom_call.1} parent=11 // pred_region
          _
        $region28: #{tpu_custom_call.1} parent=11 // pred_fallthru
          _
        // Predicated region
        $region29: #{tpu_custom_call.1} parent=11 // pred_check
          %p446 = pneg %p183
        $region30: #{tpu_custom_call.1} parent=11 // pred_check_branch
          %448 = sbr.rel (%p446) target = $region32
        $region31: #{tpu_custom_call.1} parent=11 // pred_region
          _
        $region32: #{tpu_custom_call.1} parent=11 // pred_fallthru
          _
        // Predicated region
        $region33: #{tpu_custom_call.1} parent=11 // pred_check
          %p449 = pneg %p204
        $region34: #{tpu_custom_call.1} parent=11 // pred_check_branch
          %451 = sbr.rel (%p449) target = $region36
        $region35: #{tpu_custom_call.1} parent=11 // pred_region
          _
        $region36: #{tpu_custom_call.1} parent=11 // pred_fallthru
          _
        // Predicated region
        $region37: #{tpu_custom_call.1} parent=11 // pred_check
          %p452 = pneg %p225
        $region38: #{tpu_custom_call.1} parent=11 // pred_check_branch
          %454 = sbr.rel (%p452) target = $region40
        $region39: #{tpu_custom_call.1} parent=11 // pred_region
          _
        $region40: #{tpu_custom_call.1} parent=11 // pred_fallthru
          _
        // Predicated region
        $region41: #{tpu_custom_call.1} parent=11 // pred_check
          %p455 = pneg %p246
        $region42: #{tpu_custom_call.1} parent=11 // pred_check_branch
          %457 = sbr.rel (%p455) target = $region44
        $region43: #{tpu_custom_call.1} parent=11 // pred_region
          _
        $region44: #{tpu_custom_call.1} parent=11 // pred_fallthru
          _
        // Predicated region
        $region45: #{tpu_custom_call.1} parent=11 // pred_check
          %p458 = pneg %p267
        $region46: #{tpu_custom_call.1} parent=11 // pred_check_branch
          %460 = sbr.rel (%p458) target = $region48
        $region47: #{tpu_custom_call.1} parent=11 // pred_region
          _
        $region48: #{tpu_custom_call.1} parent=11 // pred_fallthru
          _
        // Predicated region
        $region49: #{tpu_custom_call.1} parent=11 // pred_check
          %p461 = pneg %p288
        $region50: #{tpu_custom_call.1} parent=11 // pred_check_branch
          %463 = sbr.rel (%p461) target = $region52
        $region51: #{tpu_custom_call.1} parent=11 // pred_region
          _
        $region52: #{tpu_custom_call.1} parent=11 // pred_fallthru
          _
        // Predicated region
        $region53: #{tpu_custom_call.1} parent=11 // pred_check
          %p464 = pneg %p309
        $region54: #{tpu_custom_call.1} parent=11 // pred_check_branch
          %466 = sbr.rel (%p464) target = $region56
        $region55: #{tpu_custom_call.1} parent=11 // pred_region
          _
        $region56: #{tpu_custom_call.1} parent=11 // pred_fallthru
          _
        // Predicated region
        $region57: #{tpu_custom_call.1} parent=11 // pred_check
          %p467 = pneg %p330
        $region58: #{tpu_custom_call.1} parent=11 // pred_check_branch
          %469 = sbr.rel (%p467) target = $region60
        $region59: #{tpu_custom_call.1} parent=11 // pred_region
          _
        $region60: #{tpu_custom_call.1} parent=11 // pred_fallthru
          _
        // Predicated region
        $region61: #{tpu_custom_call.1} parent=11 // pred_check
          %p470 = pneg %p351
        $region62: #{tpu_custom_call.1} parent=11 // pred_check_branch
          %472 = sbr.rel (%p470) target = $region64
        $region63: #{tpu_custom_call.1} parent=11 // pred_region
          _
        $region64: #{tpu_custom_call.1} parent=11 // pred_fallthru
          _
        // Predicated region
        $region65: #{tpu_custom_call.1} parent=11 // pred_check
          %p473 = pneg %p372
        $region66: #{tpu_custom_call.1} parent=11 // pred_check_branch
          %475 = sbr.rel (%p473) target = $region68
        $region67: #{tpu_custom_call.1} parent=11 // pred_region
          _
        $region68: #{tpu_custom_call.1} parent=11 // pred_fallthru
          _
        // Predicated region
        $region69: #{tpu_custom_call.1} parent=11 // pred_check
          %p476 = pneg %p393
        $region70: #{tpu_custom_call.1} parent=11 // pred_check_branch
          %478 = sbr.rel (%p476) target = $region72
        $region71: #{tpu_custom_call.1} parent=11 // pred_region
          _
        $region72: #{tpu_custom_call.1} parent=11 // pred_fallthru
          _
      $region12: #{tpu_custom_call.1} parent=5 // pred_fallthru
        _
      %p479 = scmp.lt.s32.totalorder %s26, 2
      // Predicated region
      $region73: #{tpu_custom_call.1} parent=5 // pred_check
        %p480 = pneg %p479
      $region74: #{tpu_custom_call.1} parent=5 // pred_check_branch
        %482 = sbr.rel (%p480) target = $region76
      $region75: #{tpu_custom_call.1} parent=5 // pred_region
        // Predicated region
        $region77: #{tpu_custom_call.1} parent=75 // pred_check
          %p483 = pneg %p46
        $region78: #{tpu_custom_call.1} parent=75 // pred_check_branch
          %485 = sbr.rel (%p483) target = $region80
        $region79: #{tpu_custom_call.1} parent=75 // pred_region
          %p486 = scmp.lt.s32.totalorder %s26, 1
          %s487 = scalar_select %p486, %s26, 1
          %s488 = smul.addr %s487, 4
          %s489 = smul.addr %s488, 8
          %s490 = scalar_lea.vmem %s0, %s489
        $region80: #{tpu_custom_call.1} parent=75 // pred_fallthru
          _
        // Predicated region
        $region81: #{tpu_custom_call.1} parent=75 // pred_check
          %p491 = pneg %p72
        $region82: #{tpu_custom_call.1} parent=75 // pred_check_branch
          %493 = sbr.rel (%p491) target = $region84
        $region83: #{tpu_custom_call.1} parent=75 // pred_region
          %p494 = scmp.lt.s32.totalorder %s26, 1
          %s495 = scalar_select %p494, %s26, 1
          %s496 = scalar_lea.vmem %s1, %s495
        $region84: #{tpu_custom_call.1} parent=75 // pred_fallthru
          _
      $region76: #{tpu_custom_call.1} parent=5 // pred_fallthru
        _
      %p497 = scmp.le.s32.totalorder 1, %s26
      %p498 = scmp.lt.s32.totalorder %s26, 3
      %p499 = pnand %p497, %p498
      %p500 = pneg %p499
      // Predicated region
      $region85: #{tpu_custom_call.1} parent=5 // pred_check
        _
      $region86: #{tpu_custom_call.1} parent=5 // pred_check_branch
        %502 = sbr.rel (%p499) target = $region88
      $region87: #{tpu_custom_call.1} parent=5 // pred_region
        %s503 = ssub.s32 %s26, 1
        %p504 = scmp.lt.s32.totalorder %s31, 1
        %s505 = scalar_select %p504, %s31, 1
        %s506 = smul.addr %s505, 4
        %s507 = smul.addr %s506, 8
        %s508 = scalar_lea.vmem %s0, %s507
        %p509 = pneg %p52
        %p510 = pneg %p49
        %p511 = scmp.lt.s32.totalorder %s31, 1
        %s512 = scalar_select %p511, %s31, 1
        %s513 = scalar_lea.vmem %s1, %s512
        %p514 = pneg %p78
        %p515 = pneg %p75
        %p516 = pneg %p99
        %p517 = pneg %p96
        %p518 = pneg %p120
        %p519 = pneg %p117
        %p520 = pneg %p141
        %p521 = pneg %p138
        %p522 = pneg %p162
        %p523 = pneg %p159
        %p524 = pneg %p183
        %p525 = pneg %p180
        %p526 = pneg %p204
        %p527 = pneg %p201
        %p528 = pneg %p225
        %p529 = pneg %p222
        %p530 = pneg %p246
        %p531 = pneg %p243
        %p532 = pneg %p267
        %p533 = pneg %p264
        %p534 = pneg %p288
        %p535 = pneg %p285
        %p536 = pneg %p309
        %p537 = pneg %p306
        %p538 = pneg %p330
        %p539 = pneg %p327
        %p540 = pneg %p351
        %p541 = pneg %p348
        %p542 = pneg %p372
        %p543 = pneg %p369
        %p544 = pneg %p393
        %p545 = pneg %p390
        %p546 = pneg %p419
        %p547 = pneg %p416
        %s548 = sand.u32 %s406, 1
        %s549 = scalar_lea.sflag [#allocation3], %s548
        %s550 = sand.u32 %s406, 1
        %s551 = smul.addr %s550, 64
        %s552 = scalar_lea.vmem [#allocation2], %s551
        %p553 = scmp.lt.s32.totalorder %s31, 1
        %s554 = scalar_select %p553, %s31, 1
        %s555 = smul.addr %s554, 4
        %s556 = smul.addr %s555, 8
        %s557 = scalar_lea.vmem %s0, %s556
        %p558 = scmp.lt.s32.totalorder %s31, 1
        %s559 = scalar_select %p558, %s31, 1
        %s560 = scalar_lea.vmem %s1, %s559
        %v562 = vld [vmem:[%s557] sm:$0xff]
        %v563 = vld [vmem:[%s557 + $0x8] sm:$0xff]
        %v564 = vld [vmem:[%s557 + $0x10] sm:$0xff]
        %v565 = vld [vmem:[%s557 + $0x18] sm:$0xff]
        %vm566 = vcmask 523264
        %v567 = vsel %vm566, %v562, 0.0
        %568 = vadd.xlane.f32.xlu0 %v567
        %v569 = vpop.xlane.xlu0 %568
        %v570 = vsel %vm566, %v563, 0.0
        %571 = vadd.xlane.f32.xlu0 %v570
        %v572 = vpop.xlane.xlu0 %571
        %v573 = vsel %vm566, %v564, 0.0
        %574 = vadd.xlane.f32.xlu0 %v573
        %v575 = vpop.xlane.xlu0 %574
        %v576 = vsel %vm566, %v565, 0.0
        %577 = vadd.xlane.f32.xlu0 %v576
        %v578 = vpop.xlane.xlu0 %577
        %v579 = vmul.f32 %v562, %v562
        %v580 = vmul.f32 %v563, %v563
        %v581 = vmul.f32 %v564, %v564
        %v582 = vmul.f32 %v565, %v565
        %v583 = vsel %vm566, %v579, 0.0
        %584 = vadd.xlane.f32.xlu0 %v583
        %v585 = vpop.xlane.xlu0 %584
        %v586 = vsel %vm566, %v580, 0.0
        %587 = vadd.xlane.f32.xlu0 %v586
        %v588 = vpop.xlane.xlu0 %587
        %v589 = vsel %vm566, %v581, 0.0
        %590 = vadd.xlane.f32.xlu0 %v589
        %v591 = vpop.xlane.xlu0 %590
        %v592 = vsel %vm566, %v582, 0.0
        %593 = vadd.xlane.f32.xlu0 %v592
        %v594 = vpop.xlane.xlu0 %593
        %v595 = vlaneseq
        %v596 = vand.u32 %v595, 127
        %vm597 = vcmp.eq.s32.totalorder %v596, 0
        %v598 = vsel %vm597, %v569, 0.0
        %v599 = vsel %vm597, %v572, 0.0
        %v600 = vsel %vm597, %v575, 0.0
        %v601 = vsel %vm597, %v578, 0.0
        %vm602 = vcmp.eq.s32.totalorder %v596, 1
        %v603 = vsel %vm602, %v585, 0.0
        %v604 = vsel %vm602, %v588, 0.0
        %v605 = vsel %vm602, %v591, 0.0
        %v606 = vsel %vm602, %v594, 0.0
        %v607 = vadd.f32 %v598, %v603
        %v608 = vadd.f32 %v599, %v604
        %v609 = vadd.f32 %v600, %v605
        %v610 = vadd.f32 %v601, %v606
        %v611 = vld [vmem:[%s3] sm:$0xff]
        %v612 = vld [vmem:[%s3 + $0x8] sm:$0xff]
        %v613 = vld [vmem:[%s3 + $0x10] sm:$0xff]
        %v614 = vld [vmem:[%s3 + $0x18] sm:$0xff]
        %vm615 = vcmask 261120
        %v617 = vsel %vm615, %v611, 0
        %v620 = vsel %vm615, %v612, 0
        %v623 = vsel %vm615, %v613, 0
        %v626 = vsel %vm615, %v614, 0
        %628 = vmatprep.subr.mxu0 0.0
        %629 = vmatpush1.msra.mxu0 %v607
        %630 = vmatprep.subr.mxu0 0.0
        %631 = vmatpush1.msra.mxu0 %v608
        %632 = vmatprep.subr.mxu0 0.0
        %633 = vmatpush1.msra.mxu0 %v609
        %634 = vmatprep.subr.mxu0 0.0
        %635 = vmatpush1.msra.mxu0 %v610
        %636 = vmatprep.subr.mxu0 0.0
        %637 = vmatpush1.msra.mxu0 0.0
        %638 = vmatprep.subr.mxu0 0.0
        %639 = vmatpush1.msra.mxu0 0.0
        %640 = vmatprep.subr.mxu0 0.0
        %641 = vmatpush1.msra.mxu0 0.0
        %642 = vmatprep.subr.mxu0 0.0
        %643 = vmatpush1.msra.mxu0 0.0
        %644 = vmatprep.subr.mxu0 0.0
        %645 = vmatpush1.msra.mxu0 0.0
        %646 = vmatprep.subr.mxu0 0.0
        %647 = vmatpush1.msra.mxu0 0.0
        %648 = vmatprep.subr.mxu0 0.0
        %649 = vmatpush1.msra.mxu0 0.0
        %650 = vmatprep.subr.mxu0 0.0
        %651 = vmatpush1.msra.mxu0 0.0
        %652 = vmatprep.subr.mxu0 0.0
        %653 = vmatpush1.msra.mxu0 0.0
        %654 = vmatprep.subr.mxu0 0.0
        %655 = vmatpush1.msra.mxu0 0.0
        %656 = vmatprep.subr.mxu0 0.0
        %657 = vmatpush1.msra.mxu0 0.0
        %658 = vmatprep.subr.mxu0 0.0
        %659 = vmatpush1.msra.mxu0 0.0
        %660 = vmatprep.subr.mxu0 0.0
        %661 = vmatpush1.msra.mxu0 0.0
        %662 = vmatprep.subr.mxu0 0.0
        %663 = vmatpush1.msra.mxu0 0.0
        %664 = vmatprep.subr.mxu0 0.0
        %665 = vmatpush1.msra.mxu0 0.0
        %666 = vmatprep.subr.mxu0 0.0
        %667 = vmatpush1.msra.mxu0 0.0
        %668 = vmatprep.subr.mxu0 0.0
        %669 = vmatpush1.msra.mxu0 0.0
        %670 = vmatprep.subr.mxu0 0.0
        %671 = vmatpush1.msra.mxu0 0.0
        %672 = vmatprep.subr.mxu0 0.0
        %673 = vmatpush1.msra.mxu0 0.0
        %674 = vmatprep.subr.mxu0 0.0
        %675 = vmatpush1.msra.mxu0 0.0
        %676 = vmatprep.subr.mxu0 0.0
        %677 = vmatpush1.msra.mxu0 0.0
        %678 = vmatprep.subr.mxu0 0.0
        %679 = vmatpush1.msra.mxu0 0.0
        %680 = vmatprep.subr.mxu0 0.0
        %681 = vmatpush1.msra.mxu0 0.0
        %682 = vmatprep.subr.mxu0 0.0
        %683 = vmatpush1.msra.mxu0 0.0
        %684 = vmatprep.subr.mxu0 0.0
        %685 = vmatpush1.msra.mxu0 0.0
        %686 = vmatprep.subr.mxu0 0.0
        %687 = vmatpush1.msra.mxu0 0.0
        %688 = vmatprep.subr.mxu0 0.0
        %689 = vmatpush1.msra.mxu0 0.0
        %690 = vmatprep.subr.mxu0 0.0
        %691 = vmatpush1.msra.mxu0 0.0
        %692 = vmatprep.mubr.f32.mxu0 0.0
        %693 = vmatmul.mubr.f32.gmra.mrb[0].mxu0 %v617
        %v694 = vpop.f32.mrb[0].mxu0
        %v695 = vadd.f32 0.0, %v694
        %v696 = vpop.f32.mrb[0].mxu0
        %697 = vmatprep.mubr.f32.mxu0 0.0
        %698 = vmatmul.mubr.f32.gmra.mrb[0].mxu0 %v620
        %v699 = vpop.f32.mrb[0].mxu0
        %v700 = vadd.f32 0.0, %v699
        %v701 = vpop.f32.mrb[0].mxu0
        %702 = vmatprep.mubr.f32.mxu0 0.0
        %703 = vmatmul.mubr.f32.gmra.mrb[0].mxu0 %v623
        %v704 = vpop.f32.mrb[0].mxu0
        %v705 = vadd.f32 0.0, %v704
        %v706 = vpop.f32.mrb[0].mxu0
        %707 = vmatprep.mubr.f32.mxu0 0.0
        %708 = vmatmul.mubr.f32.gmra.mrb[0].mxu0 %v626
        %v709 = vpop.f32.mrb[0].mxu0
        %v710 = vadd.f32 0.0, %v709
        %v711 = vpop.f32.mrb[0].mxu0
        %712 = vdwg.mxu0
        %v713 = vmul.f32 %v695, %v695
        %v714 = vmul.f32 %v700, %v700
        %v715 = vmul.f32 %v705, %v705
        %v716 = vmul.f32 %v710, %v710
        %721 = vrot.lane.b32.xlu0 %v713, 1
        %v722 = vpop.permute.xlu0 %721
        %723 = vrot.lane.b32.xlu0 %v714, 1
        %v724 = vpop.permute.xlu0 %723
        %725 = vrot.lane.b32.xlu0 %v715, 1
        %v726 = vpop.permute.xlu0 %725
        %727 = vrot.lane.b32.xlu0 %v716, 1
        %v728 = vpop.permute.xlu0 %727
        %v733 = vsub.f32 %v695, %v722
        %v734 = vsub.f32 %v700, %v724
        %v735 = vsub.f32 %v705, %v726
        %v736 = vsub.f32 %v710, %v728
        %v737 = vadd.f32 %v733, 1e-06
        %v738 = vadd.f32 %v734, 1e-06
        %v739 = vadd.f32 %v735, 1e-06
        %v740 = vadd.f32 %v736, 1e-06
        %v741 = vrsqrt.pop %v737
        %v742 = vrsqrt.pop %v738
        %v743 = vrsqrt.pop %v739
        %v744 = vrsqrt.pop %v740
        %746 = vset.pattern.permute.xlu0 0
        %747 = vperm.xlu0 %746, %v695
        %v748 = vpop.permute.xlu0 %747
        %751 = vset.pattern.permute.xlu0 0
        %752 = vperm.xlu0 %751, %v700
        %v753 = vpop.permute.xlu0 %752
        %756 = vset.pattern.permute.xlu0 0
        %757 = vperm.xlu0 %756, %v705
        %v758 = vpop.permute.xlu0 %757
        %761 = vset.pattern.permute.xlu0 0
        %762 = vperm.xlu0 %761, %v710
        %v763 = vpop.permute.xlu0 %762
        %v765 = vsub.f32 %v562, %v748
        %v766 = vsub.f32 %v563, %v753
        %v767 = vsub.f32 %v564, %v758
        %v768 = vsub.f32 %v565, %v763
        %770 = vset.pattern.permute.xlu0 1
        %771 = vperm.xlu0 %770, %v741
        %v772 = vpop.permute.xlu0 %771
        %775 = vset.pattern.permute.xlu0 1
        %776 = vperm.xlu0 %775, %v742
        %v777 = vpop.permute.xlu0 %776
        %780 = vset.pattern.permute.xlu0 1
        %781 = vperm.xlu0 %780, %v743
        %v782 = vpop.permute.xlu0 %781
        %785 = vset.pattern.permute.xlu0 1
        %786 = vperm.xlu0 %785, %v744
        %v787 = vpop.permute.xlu0 %786
        %v789 = vmul.f32 %v765, %v772
        %v790 = vmul.f32 %v766, %v777
        %v791 = vmul.f32 %v767, %v782
        %v792 = vmul.f32 %v768, %v787
        %v793 = vld [vmem:[%s4] sm:$0xff]
        %v794 = vld [vmem:[%s4 + $0x8] sm:$0xff]
        %v795 = vld [vmem:[%s4 + $0x10] sm:$0xff]
        %v796 = vld [vmem:[%s4 + $0x18] sm:$0xff]
        %798 = vset.pattern.permute.xlu0 0
        %799 = vperm.xlu0 %798, %v793
        %v800 = vpop.permute.xlu0 %799
        %803 = vset.pattern.permute.xlu0 0
        %804 = vperm.xlu0 %803, %v794
        %v805 = vpop.permute.xlu0 %804
        %808 = vset.pattern.permute.xlu0 0
        %809 = vperm.xlu0 %808, %v795
        %v810 = vpop.permute.xlu0 %809
        %813 = vset.pattern.permute.xlu0 0
        %814 = vperm.xlu0 %813, %v796
        %v815 = vpop.permute.xlu0 %814
        %v817 = vmul.f32 %v789, %v800
        %v818 = vmul.f32 %v790, %v805
        %v819 = vmul.f32 %v791, %v810
        %v820 = vmul.f32 %v792, %v815
        %v821 = vld [vmem:[%s5] sm:$0xff]
        %v822 = vld [vmem:[%s5 + $0x8] sm:$0xff]
        %v823 = vld [vmem:[%s5 + $0x10] sm:$0xff]
        %v824 = vld [vmem:[%s5 + $0x18] sm:$0xff]
        %826 = vset.pattern.permute.xlu0 0
        %827 = vperm.xlu0 %826, %v821
        %v828 = vpop.permute.xlu0 %827
        %831 = vset.pattern.permute.xlu0 0
        %832 = vperm.xlu0 %831, %v822
        %v833 = vpop.permute.xlu0 %832
        %836 = vset.pattern.permute.xlu0 0
        %837 = vperm.xlu0 %836, %v823
        %v838 = vpop.permute.xlu0 %837
        %841 = vset.pattern.permute.xlu0 0
        %842 = vperm.xlu0 %841, %v824
        %v843 = vpop.permute.xlu0 %842
        %v845 = vadd.f32 %v817, %v828
        %v846 = vadd.f32 %v818, %v833
        %v847 = vadd.f32 %v819, %v838
        %v848 = vadd.f32 %v820, %v843
        %v849 = vsub.f32 0.0, %v845
        %v850 = vsub.f32 0.0, %v846
        %v851 = vsub.f32 0.0, %v847
        %v852 = vsub.f32 0.0, %v848
        %v853 = vmul.f32 %v849, 1.442695
        %v854 = vpow.pop %v853
        %v855 = vmul.f32 %v850, 1.442695
        %v856 = vpow.pop %v855
        %v857 = vmul.f32 %v851, 1.442695
        %v858 = vpow.pop %v857
        %v859 = vmul.f32 %v852, 1.442695
        %v860 = vpow.pop %v859
        %v861 = vadd.f32 %v854, 1.0
        %v862 = vadd.f32 %v856, 1.0
        %v863 = vadd.f32 %v858, 1.0
        %v864 = vadd.f32 %v860, 1.0
        %v865 = vrcp.pop %v861
        %v866 = vmul.f32 1.0, %v865
        %v867 = vrcp.pop %v862
        %v868 = vmul.f32 1.0, %v867
        %v869 = vrcp.pop %v863
        %v870 = vmul.f32 1.0, %v869
        %v871 = vrcp.pop %v864
        %v872 = vmul.f32 1.0, %v871
        %v873 = vmul.f32 %v845, %v866
        %v874 = vmul.f32 %v846, %v868
        %v875 = vmul.f32 %v847, %v870
        %v876 = vmul.f32 %v848, %v872
        %v877 = vpack.c.bf16 %v874, %v873
        %v878 = vpack.c.bf16 %v876, %v875
        %881 = vrot.lane.b32.xlu0 %v877, 73
        %v882 = vpop.permute.xlu0 %881
        %883 = vrot.lane.b32.xlu0 %v878, 73
        %v884 = vpop.permute.xlu0 %883
        %885 = vrot.lane.b32.xlu0 %v877, 9
        %v886 = vpop.permute.xlu0 %885
        %887 = vrot.lane.b32.xlu0 %v878, 9
        %v888 = vpop.permute.xlu0 %887
        %vm889 = vcmask 72704
        %v892 = vsel %vm889, %v882, %v886
        %v896 = vsel %vm889, %v884, %v888
        %v898 = vld [vmem:[%s2] sm:$0x1]
        %v900 = vpack.i.b16 %v898, %v898
        %v902 = vlaneseq
        %v903 = vshrl.u32 %v902, 7
        %v904 = vsub.s32 0, %v903
        %v905 = vrot.slane %v900, %v904
        %v906 = vmul.bf16 %v892, %v905
        %v907 = vmul.bf16 %v896, %v905
        %v908 = vld [vmem:[%s6] sm:$0xf]
        %v909 = vld [vmem:[%s6 + $0x4] sm:$0xf]
        %v910 = vld [vmem:[%s6 + $0x8] sm:$0xf]
        %v911 = vld [vmem:[%s6 + $0xc] sm:$0xf]
        %v912 = vld [vmem:[%s6 + $0x10] sm:$0xf]
        %v913 = vld [vmem:[%s6 + $0x14] sm:$0xf]
        %v914 = vld [vmem:[%s6 + $0x18] sm:$0xf]
        %v915 = vld [vmem:[%s6 + $0x1c] sm:$0xf]
        %916 = vrot.lane.b32.xlu0 %v877, 72
        %v917 = vpop.permute.xlu0 %916
        %918 = vrot.lane.b32.xlu0 %v878, 72
        %v919 = vpop.permute.xlu0 %918
        %920 = vrot.lane.b32.xlu0 %v877, 8
        %v921 = vpop.permute.xlu0 %920
        %922 = vrot.lane.b32.xlu0 %v878, 8
        %v923 = vpop.permute.xlu0 %922
        %vm924 = vcmask 64512
        %v927 = vsel %vm924, %v917, %v921
        %v931 = vsel %vm924, %v919, %v923
        %s933 = scalar_lea.vmem %s2, 1
        %v934 = vld [vmem:[%s933] sm:$0x1]
        %v936 = vpack.i.b16 %v934, %v934
        %v938 = vlaneseq
        %v939 = vshrl.u32 %v938, 7
        %v940 = vsub.s32 0, %v939
        %v941 = vrot.slane %v936, %v940
        %v942 = vmul.bf16 %v927, %v941
        %v943 = vmul.bf16 %v931, %v941
        %s944 = scalar_lea.vmem %s6, 32
        %v945 = vld [vmem:[%s944] sm:$0xf]
        %v946 = vld [vmem:[%s944 + $0x4] sm:$0xf]
        %v947 = vld [vmem:[%s944 + $0x8] sm:$0xf]
        %v948 = vld [vmem:[%s944 + $0xc] sm:$0xf]
        %v949 = vld [vmem:[%s944 + $0x10] sm:$0xf]
        %v950 = vld [vmem:[%s944 + $0x14] sm:$0xf]
        %v951 = vld [vmem:[%s944 + $0x18] sm:$0xf]
        %v952 = vld [vmem:[%s944 + $0x1c] sm:$0xf]
        %v961 = vunpack.c.l.b16 %v945
        %v962 = vunpack.c.l.b16 %v946
        %v963 = vunpack.c.l.b16 %v947
        %v964 = vunpack.c.l.b16 %v948
        %v965 = vunpack.c.l.b16 %v949
        %v966 = vunpack.c.l.b16 %v950
        %v967 = vunpack.c.l.b16 %v951
        %v968 = vunpack.c.l.b16 %v952
        %v969 = vpack.c.b16 %v962, %v961
        %v970 = vpack.c.b16 %v964, %v963
        %v971 = vpack.c.b16 %v966, %v965
        %v972 = vpack.c.b16 %v968, %v967
        %v974 = vsel %vm615, %v969, 0
        %v977 = vsel %vm615, %v970, 0
        %v980 = vsel %vm615, %v971, 0
        %v983 = vsel %vm615, %v972, 0
        %985 = vmatprep.subr.bf16.mxu0 0
        %986 = vmatpush1.bf16.msra.mxu0 %v942
        %987 = vmatprep.subr.bf16.mxu0 0
        %988 = vmatpush1.bf16.msra.mxu0 %v943
        %989 = vmatprep.subr.bf16.mxu0 0
        %990 = vmatpush1.bf16.msra.mxu0 0
        %991 = vmatprep.subr.bf16.mxu0 0
        %992 = vmatpush1.bf16.msra.mxu0 0
        %993 = vmatprep.subr.bf16.mxu0 0
        %994 = vmatpush1.bf16.msra.mxu0 0
        %995 = vmatprep.subr.bf16.mxu0 0
        %996 = vmatpush1.bf16.msra.mxu0 0
        %997 = vmatprep.subr.bf16.mxu0 0
        %998 = vmatpush1.bf16.msra.mxu0 0
        %999 = vmatprep.subr.bf16.mxu0 0
        %1000 = vmatpush1.bf16.msra.mxu0 0
        %1001 = vmatprep.subr.bf16.mxu0 0
        %1002 = vmatpush1.bf16.msra.mxu0 0
        %1003 = vmatprep.subr.bf16.mxu0 0
        %1004 = vmatpush1.bf16.msra.mxu0 0
        %1005 = vmatprep.subr.bf16.mxu0 0
        %1006 = vmatpush1.bf16.msra.mxu0 0
        %1007 = vmatprep.subr.bf16.mxu0 0
        %1008 = vmatpush1.bf16.msra.mxu0 0
        %1009 = vmatprep.subr.bf16.mxu0 0
        %1010 = vmatpush1.bf16.msra.mxu0 0
        %1011 = vmatprep.subr.bf16.mxu0 0
        %1012 = vmatpush1.bf16.msra.mxu0 0
        %1013 = vmatprep.subr.bf16.mxu0 0
        %1014 = vmatpush1.bf16.msra.mxu0 0
        %1015 = vmatprep.subr.bf16.mxu0 0
        %1016 = vmatpush1.bf16.msra.mxu0 0
        %1017 = vmatprep.mubr.bf16.mxu0 0
        %1018 = vmatmul.mubr.bf16.gmra.mrb[0].mxu0 %v974
        %v1019 = vpop.f32.mrb[0].mxu0
        %v1020 = vadd.f32 0.0, %v1019
        %v1021 = vpop.f32.mrb[0].mxu0
        %v1022 = vpop.f32.mrb[0].mxu0
        %v1023 = vadd.f32 0.0, %v1022
        %v1024 = vpop.f32.mrb[0].mxu0
        %1025 = vmatprep.mubr.bf16.mxu0 0
        %1026 = vmatmul.mubr.bf16.gmra.mrb[0].mxu0 %v977
        %v1027 = vpop.f32.mrb[0].mxu0
        %v1028 = vadd.f32 0.0, %v1027
        %v1029 = vpop.f32.mrb[0].mxu0
        %v1030 = vpop.f32.mrb[0].mxu0
        %v1031 = vadd.f32 0.0, %v1030
        %v1032 = vpop.f32.mrb[0].mxu0
        %1033 = vmatprep.mubr.bf16.mxu0 0
        %1034 = vmatmul.mubr.bf16.gmra.mrb[0].mxu0 %v980
        %v1035 = vpop.f32.mrb[0].mxu0
        %v1036 = vadd.f32 0.0, %v1035
        %v1037 = vpop.f32.mrb[0].mxu0
        %v1038 = vpop.f32.mrb[0].mxu0
        %v1039 = vadd.f32 0.0, %v1038
        %v1040 = vpop.f32.mrb[0].mxu0
        %1041 = vmatprep.mubr.bf16.mxu0 0
        %1042 = vmatmul.mubr.bf16.gmra.mrb[0].mxu0 %v983
        %v1043 = vpop.f32.mrb[0].mxu0
        %v1044 = vadd.f32 0.0, %v1043
        %v1045 = vpop.f32.mrb[0].mxu0
        %v1046 = vpop.f32.mrb[0].mxu0
        %v1047 = vadd.f32 0.0, %v1046
        %v1048 = vpop.f32.mrb[0].mxu0
        %1049 = vdwg.mxu0
        %v1058 = vunpack.c.l.b16 %v908
        %v1059 = vunpack.c.l.b16 %v909
        %v1060 = vunpack.c.l.b16 %v910
        %v1061 = vunpack.c.l.b16 %v911
        %v1062 = vunpack.c.l.b16 %v912
        %v1063 = vunpack.c.l.b16 %v913
        %v1064 = vunpack.c.l.b16 %v914
        %v1065 = vunpack.c.l.b16 %v915
        %v1066 = vpack.c.b16 %v1059, %v1058
        %v1067 = vpack.c.b16 %v1061, %v1060
        %v1068 = vpack.c.b16 %v1063, %v1062
        %v1069 = vpack.c.b16 %v1065, %v1064
        %v1071 = vsel %vm615, %v1066, 0
        %v1074 = vsel %vm615, %v1067, 0
        %v1077 = vsel %vm615, %v1068, 0
        %v1080 = vsel %vm615, %v1069, 0
        %1082 = vmatprep.subr.bf16.mxu0 0
        %1083 = vmatpush1.bf16.msra.mxu0 %v906
        %1084 = vmatprep.subr.bf16.mxu0 0
        %1085 = vmatpush1.bf16.msra.mxu0 %v907
        %1086 = vmatprep.subr.bf16.mxu0 0
        %1087 = vmatpush1.bf16.msra.mxu0 0
        %1088 = vmatprep.subr.bf16.mxu0 0
        %1089 = vmatpush1.bf16.msra.mxu0 0
        %1090 = vmatprep.subr.bf16.mxu0 0
        %1091 = vmatpush1.bf16.msra.mxu0 0
        %1092 = vmatprep.subr.bf16.mxu0 0
        %1093 = vmatpush1.bf16.msra.mxu0 0
        %1094 = vmatprep.subr.bf16.mxu0 0
        %1095 = vmatpush1.bf16.msra.mxu0 0
        %1096 = vmatprep.subr.bf16.mxu0 0
        %1097 = vmatpush1.bf16.msra.mxu0 0
        %1098 = vmatprep.subr.bf16.mxu0 0
        %1099 = vmatpush1.bf16.msra.mxu0 0
        %1100 = vmatprep.subr.bf16.mxu0 0
        %1101 = vmatpush1.bf16.msra.mxu0 0
        %1102 = vmatprep.subr.bf16.mxu0 0
        %1103 = vmatpush1.bf16.msra.mxu0 0
        %1104 = vmatprep.subr.bf16.mxu0 0
        %1105 = vmatpush1.bf16.msra.mxu0 0
        %1106 = vmatprep.subr.bf16.mxu0 0
        %1107 = vmatpush1.bf16.msra.mxu0 0
        %1108 = vmatprep.subr.bf16.mxu0 0
        %1109 = vmatpush1.bf16.msra.mxu0 0
        %1110 = vmatprep.subr.bf16.mxu0 0
        %1111 = vmatpush1.bf16.msra.mxu0 0
        %1112 = vmatprep.subr.bf16.mxu0 0
        %1113 = vmatpush1.bf16.msra.mxu0 0
        %1114 = vmatprep.mubr.bf16.mxu0 0
        %1115 = vmatmul.mubr.bf16.gmra.mrb[0].mxu0 %v1071
        %v1116 = vpop.f32.mrb[0].mxu0
        %v1117 = vadd.f32 %v1020, %v1116
        %v1118 = vpop.f32.mrb[0].mxu0
        %v1119 = vpop.f32.mrb[0].mxu0
        %v1120 = vadd.f32 %v1023, %v1119
        %v1121 = vpop.f32.mrb[0].mxu0
        %1122 = vmatprep.mubr.bf16.mxu0 0
        %1123 = vmatmul.mubr.bf16.gmra.mrb[0].mxu0 %v1074
        %v1124 = vpop.f32.mrb[0].mxu0
        %v1125 = vadd.f32 %v1028, %v1124
        %v1126 = vpop.f32.mrb[0].mxu0
        %v1127 = vpop.f32.mrb[0].mxu0
        %v1128 = vadd.f32 %v1031, %v1127
        %v1129 = vpop.f32.mrb[0].mxu0
        %1130 = vmatprep.mubr.bf16.mxu0 0
        %1131 = vmatmul.mubr.bf16.gmra.mrb[0].mxu0 %v1077
        %v1132 = vpop.f32.mrb[0].mxu0
        %v1133 = vadd.f32 %v1036, %v1132
        %v1134 = vpop.f32.mrb[0].mxu0
        %v1135 = vpop.f32.mrb[0].mxu0
        %v1136 = vadd.f32 %v1039, %v1135
        %v1137 = vpop.f32.mrb[0].mxu0
        %1138 = vmatprep.mubr.bf16.mxu0 0
        %1139 = vmatmul.mubr.bf16.gmra.mrb[0].mxu0 %v1080
        %v1140 = vpop.f32.mrb[0].mxu0
        %v1141 = vadd.f32 %v1044, %v1140
        %v1142 = vpop.f32.mrb[0].mxu0
        %v1143 = vpop.f32.mrb[0].mxu0
        %v1144 = vadd.f32 %v1047, %v1143
        %v1145 = vpop.f32.mrb[0].mxu0
        %1146 = vdwg.mxu0
        %1147 = vrot.lane.b32.xlu0 %v877, 71
        %v1148 = vpop.permute.xlu0 %1147
        %1149 = vrot.lane.b32.xlu0 %v878, 71
        %v1150 = vpop.permute.xlu0 %1149
        %1151 = vrot.lane.b32.xlu0 %v877, 7
        %v1152 = vpop.permute.xlu0 %1151
        %1153 = vrot.lane.b32.xlu0 %v878, 7
        %v1154 = vpop.permute.xlu0 %1153
        %vm1155 = vcmask 56320
        %v1158 = vsel %vm1155, %v1148, %v1152
        %v1162 = vsel %vm1155, %v1150, %v1154
        %s1164 = scalar_lea.vmem %s2, 2
        %v1165 = vld [vmem:[%s1164] sm:$0x1]
        %v1167 = vpack.i.b16 %v1165, %v1165
        %v1169 = vlaneseq
        %v1170 = vshrl.u32 %v1169, 7
        %v1171 = vsub.s32 0, %v1170
        %v1172 = vrot.slane %v1167, %v1171
        %v1173 = vmul.bf16 %v1158, %v1172
        %v1174 = vmul.bf16 %v1162, %v1172
        %s1175 = scalar_lea.vmem %s6, 64
        %v1176 = vld [vmem:[%s1175] sm:$0xf]
        %v1177 = vld [vmem:[%s1175 + $0x4] sm:$0xf]
        %v1178 = vld [vmem:[%s1175 + $0x8] sm:$0xf]
        %v1179 = vld [vmem:[%s1175 + $0xc] sm:$0xf]
        %v1180 = vld [vmem:[%s1175 + $0x10] sm:$0xf]
        %v1181 = vld [vmem:[%s1175 + $0x14] sm:$0xf]
        %v1182 = vld [vmem:[%s1175 + $0x18] sm:$0xf]
        %v1183 = vld [vmem:[%s1175 + $0x1c] sm:$0xf]
        %v1192 = vunpack.c.l.b16 %v1176
        %v1193 = vunpack.c.l.b16 %v1177
        %v1194 = vunpack.c.l.b16 %v1178
        %v1195 = vunpack.c.l.b16 %v1179
        %v1196 = vunpack.c.l.b16 %v1180
        %v1197 = vunpack.c.l.b16 %v1181
        %v1198 = vunpack.c.l.b16 %v1182
        %v1199 = vunpack.c.l.b16 %v1183
        %v1200 = vpack.c.b16 %v1193, %v1192
        %v1201 = vpack.c.b16 %v1195, %v1194
        %v1202 = vpack.c.b16 %v1197, %v1196
        %v1203 = vpack.c.b16 %v1199, %v1198
        %v1205 = vsel %vm615, %v1200, 0
        %v1208 = vsel %vm615, %v1201, 0
        %v1211 = vsel %vm615, %v1202, 0
        %v1214 = vsel %vm615, %v1203, 0
        %1216 = vmatprep.subr.bf16.mxu0 0
        %1217 = vmatpush1.bf16.msra.mxu0 %v1173
        %1218 = vmatprep.subr.bf16.mxu0 0
        %1219 = vmatpush1.bf16.msra.mxu0 %v1174
        %1220 = vmatprep.subr.bf16.mxu0 0
        %1221 = vmatpush1.bf16.msra.mxu0 0
        %1222 = vmatprep.subr.bf16.mxu0 0
        %1223 = vmatpush1.bf16.msra.mxu0 0
        %1224 = vmatprep.subr.bf16.mxu0 0
        %1225 = vmatpush1.bf16.msra.mxu0 0
        %1226 = vmatprep.subr.bf16.mxu0 0
        %1227 = vmatpush1.bf16.msra.mxu0 0
        %1228 = vmatprep.subr.bf16.mxu0 0
        %1229 = vmatpush1.bf16.msra.mxu0 0
        %1230 = vmatprep.subr.bf16.mxu0 0
        %1231 = vmatpush1.bf16.msra.mxu0 0
        %1232 = vmatprep.subr.bf16.mxu0 0
        %1233 = vmatpush1.bf16.msra.mxu0 0
        %1234 = vmatprep.subr.bf16.mxu0 0
        %1235 = vmatpush1.bf16.msra.mxu0 0
        %1236 = vmatprep.subr.bf16.mxu0 0
        %1237 = vmatpush1.bf16.msra.mxu0 0
        %1238 = vmatprep.subr.bf16.mxu0 0
        %1239 = vmatpush1.bf16.msra.mxu0 0
        %1240 = vmatprep.subr.bf16.mxu0 0
        %1241 = vmatpush1.bf16.msra.mxu0 0
        %1242 = vmatprep.subr.bf16.mxu0 0
        %1243 = vmatpush1.bf16.msra.mxu0 0
        %1244 = vmatprep.subr.bf16.mxu0 0
        %1245 = vmatpush1.bf16.msra.mxu0 0
        %1246 = vmatprep.subr.bf16.mxu0 0
        %1247 = vmatpush1.bf16.msra.mxu0 0
        %1248 = vmatprep.mubr.bf16.mxu0 0
        %1249 = vmatmul.mubr.bf16.gmra.mrb[0].mxu0 %v1205
        %v1250 = vpop.f32.mrb[0].mxu0
        %v1251 = vadd.f32 0.0, %v1250
        %v1252 = vpop.f32.mrb[0].mxu0
        %v1253 = vpop.f32.mrb[0].mxu0
        %v1254 = vadd.f32 0.0, %v1253
        %v1255 = vpop.f32.mrb[0].mxu0
        %1256 = vmatprep.mubr.bf16.mxu0 0
        %1257 = vmatmul.mubr.bf16.gmra.mrb[0].mxu0 %v1208
        %v1258 = vpop.f32.mrb[0].mxu0
        %v1259 = vadd.f32 0.0, %v1258
        %v1260 = vpop.f32.mrb[0].mxu0
        %v1261 = vpop.f32.mrb[0].mxu0
        %v1262 = vadd.f32 0.0, %v1261
        %v1263 = vpop.f32.mrb[0].mxu0
        %1264 = vmatprep.mubr.bf16.mxu0 0
        %1265 = vmatmul.mubr.bf16.gmra.mrb[0].mxu0 %v1211
        %v1266 = vpop.f32.mrb[0].mxu0
        %v1267 = vadd.f32 0.0, %v1266
        %v1268 = vpop.f32.mrb[0].mxu0
        %v1269 = vpop.f32.mrb[0].mxu0
        %v1270 = vadd.f32 0.0, %v1269
        %v1271 = vpop.f32.mrb[0].mxu0
        %1272 = vmatprep.mubr.bf16.mxu0 0
        %1273 = vmatmul.mubr.bf16.gmra.mrb[0].mxu0 %v1214
        %v1274 = vpop.f32.mrb[0].mxu0
        %v1275 = vadd.f32 0.0, %v1274
        %v1276 = vpop.f32.mrb[0].mxu0
        %v1277 = vpop.f32.mrb[0].mxu0
        %v1278 = vadd.f32 0.0, %v1277
        %v1279 = vpop.f32.mrb[0].mxu0
        %1280 = vdwg.mxu0
        %v1281 = vadd.f32 %v1117, %v1251
        %v1282 = vadd.f32 %v1120, %v1254
        %v1283 = vadd.f32 %v1125, %v1259
        %v1284 = vadd.f32 %v1128, %v1262
        %v1285 = vadd.f32 %v1133, %v1267
        %v1286 = vadd.f32 %v1136, %v1270
        %v1287 = vadd.f32 %v1141, %v1275
        %v1288 = vadd.f32 %v1144, %v1278
        %1289 = vrot.lane.b32.xlu0 %v877, 65
        %v1290 = vpop.permute.xlu0 %1289
        %1291 = vrot.lane.b32.xlu0 %v878, 65
        %v1292 = vpop.permute.xlu0 %1291
        %1293 = vrot.lane.b32.xlu0 %v877, 1
        %v1294 = vpop.permute.xlu0 %1293
        %1295 = vrot.lane.b32.xlu0 %v878, 1
        %v1296 = vpop.permute.xlu0 %1295
        %vm1297 = vcmask 7168
        %v1300 = vsel %vm1297, %v1290, %v1294
        %v1304 = vsel %vm1297, %v1292, %v1296
        %s1306 = scalar_lea.vmem %s2, 3
        %v1307 = vld [vmem:[%s1306] sm:$0x1]
        %v1309 = vpack.i.b16 %v1307, %v1307
        %v1311 = vlaneseq
        %v1312 = vshrl.u32 %v1311, 7
        %v1313 = vsub.s32 0, %v1312
        %v1314 = vrot.slane %v1309, %v1313
        %v1315 = vmul.bf16 %v1300, %v1314
        %v1316 = vmul.bf16 %v1304, %v1314
        %s1317 = scalar_lea.vmem %s6, 96
        %v1318 = vld [vmem:[%s1317] sm:$0xf]
        %v1319 = vld [vmem:[%s1317 + $0x4] sm:$0xf]
        %v1320 = vld [vmem:[%s1317 + $0x8] sm:$0xf]
        %v1321 = vld [vmem:[%s1317 + $0xc] sm:$0xf]
        %v1322 = vld [vmem:[%s1317 + $0x10] sm:$0xf]
        %v1323 = vld [vmem:[%s1317 + $0x14] sm:$0xf]
        %v1324 = vld [vmem:[%s1317 + $0x18] sm:$0xf]
        %v1325 = vld [vmem:[%s1317 + $0x1c] sm:$0xf]
        %v1334 = vunpack.c.l.b16 %v1318
        %v1335 = vunpack.c.l.b16 %v1319
        %v1336 = vunpack.c.l.b16 %v1320
        %v1337 = vunpack.c.l.b16 %v1321
        %v1338 = vunpack.c.l.b16 %v1322
        %v1339 = vunpack.c.l.b16 %v1323
        %v1340 = vunpack.c.l.b16 %v1324
        %v1341 = vunpack.c.l.b16 %v1325
        %v1342 = vpack.c.b16 %v1335, %v1334
        %v1343 = vpack.c.b16 %v1337, %v1336
        %v1344 = vpack.c.b16 %v1339, %v1338
        %v1345 = vpack.c.b16 %v1341, %v1340
        %v1347 = vsel %vm615, %v1342, 0
        %v1350 = vsel %vm615, %v1343, 0
        %v1353 = vsel %vm615, %v1344, 0
        %v1356 = vsel %vm615, %v1345, 0
        %1358 = vmatprep.subr.bf16.mxu0 0
        %1359 = vmatpush1.bf16.msra.mxu0 %v1315
        %1360 = vmatprep.subr.bf16.mxu0 0
        %1361 = vmatpush1.bf16.msra.mxu0 %v1316
        %1362 = vmatprep.subr.bf16.mxu0 0
        %1363 = vmatpush1.bf16.msra.mxu0 0
        %1364 = vmatprep.subr.bf16.mxu0 0
        %1365 = vmatpush1.bf16.msra.mxu0 0
        %1366 = vmatprep.subr.bf16.mxu0 0
        %1367 = vmatpush1.bf16.msra.mxu0 0
        %1368 = vmatprep.subr.bf16.mxu0 0
        %1369 = vmatpush1.bf16.msra.mxu0 0
        %1370 = vmatprep.subr.bf16.mxu0 0
        %1371 = vmatpush1.bf16.msra.mxu0 0
        %1372 = vmatprep.subr.bf16.mxu0 0
        %1373 = vmatpush1.bf16.msra.mxu0 0
        %1374 = vmatprep.subr.bf16.mxu0 0
        %1375 = vmatpush1.bf16.msra.mxu0 0
        %1376 = vmatprep.subr.bf16.mxu0 0
        %1377 = vmatpush1.bf16.msra.mxu0 0
        %1378 = vmatprep.subr.bf16.mxu0 0
        %1379 = vmatpush1.bf16.msra.mxu0 0
        %1380 = vmatprep.subr.bf16.mxu0 0
        %1381 = vmatpush1.bf16.msra.mxu0 0
        %1382 = vmatprep.subr.bf16.mxu0 0
        %1383 = vmatpush1.bf16.msra.mxu0 0
        %1384 = vmatprep.subr.bf16.mxu0 0
        %1385 = vmatpush1.bf16.msra.mxu0 0
        %1386 = vmatprep.subr.bf16.mxu0 0
        %1387 = vmatpush1.bf16.msra.mxu0 0
        %1388 = vmatprep.subr.bf16.mxu0 0
        %1389 = vmatpush1.bf16.msra.mxu0 0
        %1390 = vmatprep.mubr.bf16.mxu0 0
        %1391 = vmatmul.mubr.bf16.gmra.mrb[0].mxu0 %v1347
        %v1392 = vpop.f32.mrb[0].mxu0
        %v1393 = vadd.f32 0.0, %v1392
        %v1394 = vpop.f32.mrb[0].mxu0
        %v1395 = vpop.f32.mrb[0].mxu0
        %v1396 = vadd.f32 0.0, %v1395
        %v1397 = vpop.f32.mrb[0].mxu0
        %1398 = vmatprep.mubr.bf16.mxu0 0
        %1399 = vmatmul.mubr.bf16.gmra.mrb[0].mxu0 %v1350
        %v1400 = vpop.f32.mrb[0].mxu0
        %v1401 = vadd.f32 0.0, %v1400
        %v1402 = vpop.f32.mrb[0].mxu0
        %v1403 = vpop.f32.mrb[0].mxu0
        %v1404 = vadd.f32 0.0, %v1403
        %v1405 = vpop.f32.mrb[0].mxu0
        %1406 = vmatprep.mubr.bf16.mxu0 0
        %1407 = vmatmul.mubr.bf16.gmra.mrb[0].mxu0 %v1353
        %v1408 = vpop.f32.mrb[0].mxu0
        %v1409 = vadd.f32 0.0, %v1408
        %v1410 = vpop.f32.mrb[0].mxu0
        %v1411 = vpop.f32.mrb[0].mxu0
        %v1412 = vadd.f32 0.0, %v1411
        %v1413 = vpop.f32.mrb[0].mxu0
        %1414 = vmatprep.mubr.bf16.mxu0 0
        %1415 = vmatmul.mubr.bf16.gmra.mrb[0].mxu0 %v1356
        %v1416 = vpop.f32.mrb[0].mxu0
        %v1417 = vadd.f32 0.0, %v1416
        %v1418 = vpop.f32.mrb[0].mxu0
        %v1419 = vpop.f32.mrb[0].mxu0
        %v1420 = vadd.f32 0.0, %v1419
        %v1421 = vpop.f32.mrb[0].mxu0
        %1422 = vdwg.mxu0
        %v1423 = vadd.f32 %v1281, %v1393
        %v1424 = vadd.f32 %v1282, %v1396
        %v1425 = vadd.f32 %v1283, %v1401
        %v1426 = vadd.f32 %v1284, %v1404
        %v1427 = vadd.f32 %v1285, %v1409
        %v1428 = vadd.f32 %v1286, %v1412
        %v1429 = vadd.f32 %v1287, %v1417
        %v1430 = vadd.f32 %v1288, %v1420
        %s1431 = scalar_lea.vmem %s6, 128
        %v1432 = vld [vmem:[%s1431] sm:$0xf]
        %v1433 = vld [vmem:[%s1431 + $0x4] sm:$0xf]
        %v1434 = vld [vmem:[%s1431 + $0x8] sm:$0xf]
        %v1435 = vld [vmem:[%s1431 + $0xc] sm:$0xf]
        %v1436 = vld [vmem:[%s1431 + $0x10] sm:$0xf]
        %v1437 = vld [vmem:[%s1431 + $0x14] sm:$0xf]
        %v1438 = vld [vmem:[%s1431 + $0x18] sm:$0xf]
        %v1439 = vld [vmem:[%s1431 + $0x1c] sm:$0xf]
        %v1448 = vunpack.c.l.b16 %v1432
        %v1449 = vunpack.c.l.b16 %v1433
        %v1450 = vunpack.c.l.b16 %v1434
        %v1451 = vunpack.c.l.b16 %v1435
        %v1452 = vunpack.c.l.b16 %v1436
        %v1453 = vunpack.c.l.b16 %v1437
        %v1454 = vunpack.c.l.b16 %v1438
        %v1455 = vunpack.c.l.b16 %v1439
        %v1456 = vpack.c.b16 %v1449, %v1448
        %v1457 = vpack.c.b16 %v1451, %v1450
        %v1458 = vpack.c.b16 %v1453, %v1452
        %v1459 = vpack.c.b16 %v1455, %v1454
        %v1461 = vsel %vm615, %v1456, 0
        %v1464 = vsel %vm615, %v1457, 0
        %v1467 = vsel %vm615, %v1458, 0
        %v1470 = vsel %vm615, %v1459, 0
        %1472 = vmatprep.subr.bf16.mxu0 0
        %1473 = vmatpush1.bf16.msra.mxu0 %v877
        %1474 = vmatprep.subr.bf16.mxu0 0
        %1475 = vmatpush1.bf16.msra.mxu0 %v878
        %1476 = vmatprep.subr.bf16.mxu0 0
        %1477 = vmatpush1.bf16.msra.mxu0 0
        %1478 = vmatprep.subr.bf16.mxu0 0
        %1479 = vmatpush1.bf16.msra.mxu0 0
        %1480 = vmatprep.subr.bf16.mxu0 0
        %1481 = vmatpush1.bf16.msra.mxu0 0
        %1482 = vmatprep.subr.bf16.mxu0 0
        %1483 = vmatpush1.bf16.msra.mxu0 0
        %1484 = vmatprep.subr.bf16.mxu0 0
        %1485 = vmatpush1.bf16.msra.mxu0 0
        %1486 = vmatprep.subr.bf16.mxu0 0
        %1487 = vmatpush1.bf16.msra.mxu0 0
        %1488 = vmatprep.subr.bf16.mxu0 0
        %1489 = vmatpush1.bf16.msra.mxu0 0
        %1490 = vmatprep.subr.bf16.mxu0 0
        %1491 = vmatpush1.bf16.msra.mxu0 0
        %1492 = vmatprep.subr.bf16.mxu0 0
        %1493 = vmatpush1.bf16.msra.mxu0 0
        %1494 = vmatprep.subr.bf16.mxu0 0
        %1495 = vmatpush1.bf16.msra.mxu0 0
        %1496 = vmatprep.subr.bf16.mxu0 0
        %1497 = vmatpush1.bf16.msra.mxu0 0
        %1498 = vmatprep.subr.bf16.mxu0 0
        %1499 = vmatpush1.bf16.msra.mxu0 0
        %1500 = vmatprep.subr.bf16.mxu0 0
        %1501 = vmatpush1.bf16.msra.mxu0 0
        %1502 = vmatprep.subr.bf16.mxu0 0
        %1503 = vmatpush1.bf16.msra.mxu0 0
        %1504 = vmatprep.mubr.bf16.mxu0 0
        %1505 = vmatmul.mubr.bf16.gmra.mrb[0].mxu0 %v1461
        %v1506 = vpop.f32.mrb[0].mxu0
        %v1507 = vadd.f32 0.0, %v1506
        %v1508 = vpop.f32.mrb[0].mxu0
        %v1509 = vpop.f32.mrb[0].mxu0
        %v1510 = vadd.f32 0.0, %v1509
        %v1511 = vpop.f32.mrb[0].mxu0
        %1512 = vmatprep.mubr.bf16.mxu0 0
        %1513 = vmatmul.mubr.bf16.gmra.mrb[0].mxu0 %v1464
        %v1514 = vpop.f32.mrb[0].mxu0
        %v1515 = vadd.f32 0.0, %v1514
        %v1516 = vpop.f32.mrb[0].mxu0
        %v1517 = vpop.f32.mrb[0].mxu0
        %v1518 = vadd.f32 0.0, %v1517
        %v1519 = vpop.f32.mrb[0].mxu0
        %1520 = vmatprep.mubr.bf16.mxu0 0
        %1521 = vmatmul.mubr.bf16.gmra.mrb[0].mxu0 %v1467
        %v1522 = vpop.f32.mrb[0].mxu0
        %v1523 = vadd.f32 0.0, %v1522
        %v1524 = vpop.f32.mrb[0].mxu0
        %v1525 = vpop.f32.mrb[0].mxu0
        %v1526 = vadd.f32 0.0, %v1525
        %v1527 = vpop.f32.mrb[0].mxu0
        %1528 = vmatprep.mubr.bf16.mxu0 0
        %1529 = vmatmul.mubr.bf16.gmra.mrb[0].mxu0 %v1470
        %v1530 = vpop.f32.mrb[0].mxu0
        %v1531 = vadd.f32 0.0, %v1530
        %v1532 = vpop.f32.mrb[0].mxu0
        %v1533 = vpop.f32.mrb[0].mxu0
        %v1534 = vadd.f32 0.0, %v1533
        %v1535 = vpop.f32.mrb[0].mxu0
        %1536 = vdwg.mxu0
        %v1537 = vadd.f32 %v1423, %v1507
        %v1538 = vadd.f32 %v1424, %v1510
        %v1539 = vadd.f32 %v1425, %v1515
        %v1540 = vadd.f32 %v1426, %v1518
        %v1541 = vadd.f32 %v1427, %v1523
        %v1542 = vadd.f32 %v1428, %v1526
        %v1543 = vadd.f32 %v1429, %v1531
        %v1544 = vadd.f32 %v1430, %v1534
        %1545 = vrot.lane.b32.xlu0 %v877, 127
        %v1546 = vpop.permute.xlu0 %1545
        %1547 = vrot.lane.b32.xlu0 %v878, 127
        %v1548 = vpop.permute.xlu0 %1547
        %1549 = vrot.lane.b32.xlu0 %v877, 63
        %v1550 = vpop.permute.xlu0 %1549
        %1551 = vrot.lane.b32.xlu0 %v878, 63
        %v1552 = vpop.permute.xlu0 %1551
        %vm1553 = vcmask 515072
        %v1556 = vsel %vm1553, %v1546, %v1550
        %v1560 = vsel %vm1553, %v1548, %v1552
        %s1562 = scalar_lea.vmem %s2, 5
        %v1563 = vld [vmem:[%s1562] sm:$0x1]
        %v1565 = vpack.i.b16 %v1563, %v1563
        %v1567 = vlaneseq
        %v1568 = vshrl.u32 %v1567, 7
        %v1569 = vsub.s32 0, %v1568
        %v1570 = vrot.slane %v1565, %v1569
        %v1571 = vmul.bf16 %v1556, %v1570
        %v1572 = vmul.bf16 %v1560, %v1570
        %s1573 = scalar_lea.vmem %s6, 160
        %v1574 = vld [vmem:[%s1573] sm:$0xf]
        %v1575 = vld [vmem:[%s1573 + $0x4] sm:$0xf]
        %v1576 = vld [vmem:[%s1573 + $0x8] sm:$0xf]
        %v1577 = vld [vmem:[%s1573 + $0xc] sm:$0xf]
        %v1578 = vld [vmem:[%s1573 + $0x10] sm:$0xf]
        %v1579 = vld [vmem:[%s1573 + $0x14] sm:$0xf]
        %v1580 = vld [vmem:[%s1573 + $0x18] sm:$0xf]
        %v1581 = vld [vmem:[%s1573 + $0x1c] sm:$0xf]
        %v1590 = vunpack.c.l.b16 %v1574
        %v1591 = vunpack.c.l.b16 %v1575
        %v1592 = vunpack.c.l.b16 %v1576
        %v1593 = vunpack.c.l.b16 %v1577
        %v1594 = vunpack.c.l.b16 %v1578
        %v1595 = vunpack.c.l.b16 %v1579
        %v1596 = vunpack.c.l.b16 %v1580
        %v1597 = vunpack.c.l.b16 %v1581
        %v1598 = vpack.c.b16 %v1591, %v1590
        %v1599 = vpack.c.b16 %v1593, %v1592
        %v1600 = vpack.c.b16 %v1595, %v1594
        %v1601 = vpack.c.b16 %v1597, %v1596
        %v1603 = vsel %vm615, %v1598, 0
        %v1606 = vsel %vm615, %v1599, 0
        %v1609 = vsel %vm615, %v1600, 0
        %v1612 = vsel %vm615, %v1601, 0
        %1614 = vmatprep.subr.bf16.mxu0 0
        %1615 = vmatpush1.bf16.msra.mxu0 %v1571
        %1616 = vmatprep.subr.bf16.mxu0 0
        %1617 = vmatpush1.bf16.msra.mxu0 %v1572
        %1618 = vmatprep.subr.bf16.mxu0 0
        %1619 = vmatpush1.bf16.msra.mxu0 0
        %1620 = vmatprep.subr.bf16.mxu0 0
        %1621 = vmatpush1.bf16.msra.mxu0 0
        %1622 = vmatprep.subr.bf16.mxu0 0
        %1623 = vmatpush1.bf16.msra.mxu0 0
        %1624 = vmatprep.subr.bf16.mxu0 0
        %1625 = vmatpush1.bf16.msra.mxu0 0
        %1626 = vmatprep.subr.bf16.mxu0 0
        %1627 = vmatpush1.bf16.msra.mxu0 0
        %1628 = vmatprep.subr.bf16.mxu0 0
        %1629 = vmatpush1.bf16.msra.mxu0 0
        %1630 = vmatprep.subr.bf16.mxu0 0
        %1631 = vmatpush1.bf16.msra.mxu0 0
        %1632 = vmatprep.subr.bf16.mxu0 0
        %1633 = vmatpush1.bf16.msra.mxu0 0
        %1634 = vmatprep.subr.bf16.mxu0 0
        %1635 = vmatpush1.bf16.msra.mxu0 0
        %1636 = vmatprep.subr.bf16.mxu0 0
        %1637 = vmatpush1.bf16.msra.mxu0 0
        %1638 = vmatprep.subr.bf16.mxu0 0
        %1639 = vmatpush1.bf16.msra.mxu0 0
        %1640 = vmatprep.subr.bf16.mxu0 0
        %1641 = vmatpush1.bf16.msra.mxu0 0
        %1642 = vmatprep.subr.bf16.mxu0 0
        %1643 = vmatpush1.bf16.msra.mxu0 0
        %1644 = vmatprep.subr.bf16.mxu0 0
        %1645 = vmatpush1.bf16.msra.mxu0 0
        %1646 = vmatprep.mubr.bf16.mxu0 0
        %1647 = vmatmul.mubr.bf16.gmra.mrb[0].mxu0 %v1603
        %v1648 = vpop.f32.mrb[0].mxu0
        %v1649 = vadd.f32 0.0, %v1648
        %v1650 = vpop.f32.mrb[0].mxu0
        %v1651 = vpop.f32.mrb[0].mxu0
        %v1652 = vadd.f32 0.0, %v1651
        %v1653 = vpop.f32.mrb[0].mxu0
        %1654 = vmatprep.mubr.bf16.mxu0 0
        %1655 = vmatmul.mubr.bf16.gmra.mrb[0].mxu0 %v1606
        %v1656 = vpop.f32.mrb[0].mxu0
        %v1657 = vadd.f32 0.0, %v1656
        %v1658 = vpop.f32.mrb[0].mxu0
        %v1659 = vpop.f32.mrb[0].mxu0
        %v1660 = vadd.f32 0.0, %v1659
        %v1661 = vpop.f32.mrb[0].mxu0
        %1662 = vmatprep.mubr.bf16.mxu0 0
        %1663 = vmatmul.mubr.bf16.gmra.mrb[0].mxu0 %v1609
        %v1664 = vpop.f32.mrb[0].mxu0
        %v1665 = vadd.f32 0.0, %v1664
        %v1666 = vpop.f32.mrb[0].mxu0
        %v1667 = vpop.f32.mrb[0].mxu0
        %v1668 = vadd.f32 0.0, %v1667
        %v1669 = vpop.f32.mrb[0].mxu0
        %1670 = vmatprep.mubr.bf16.mxu0 0
        %1671 = vmatmul.mubr.bf16.gmra.mrb[0].mxu0 %v1612
        %v1672 = vpop.f32.mrb[0].mxu0
        %v1673 = vadd.f32 0.0, %v1672
        %v1674 = vpop.f32.mrb[0].mxu0
        %v1675 = vpop.f32.mrb[0].mxu0
        %v1676 = vadd.f32 0.0, %v1675
        %v1677 = vpop.f32.mrb[0].mxu0
        %1678 = vdwg.mxu0
        %v1679 = vadd.f32 %v1537, %v1649
        %v1680 = vadd.f32 %v1538, %v1652
        %v1681 = vadd.f32 %v1539, %v1657
        %v1682 = vadd.f32 %v1540, %v1660
        %v1683 = vadd.f32 %v1541, %v1665
        %v1684 = vadd.f32 %v1542, %v1668
        %v1685 = vadd.f32 %v1543, %v1673
        %v1686 = vadd.f32 %v1544, %v1676
        %1687 = vrot.lane.b32.xlu0 %v877, 121
        %v1688 = vpop.permute.xlu0 %1687
        %1689 = vrot.lane.b32.xlu0 %v878, 121
        %v1690 = vpop.permute.xlu0 %1689
        %1691 = vrot.lane.b32.xlu0 %v877, 57
        %v1692 = vpop.permute.xlu0 %1691
        %1693 = vrot.lane.b32.xlu0 %v878, 57
        %v1694 = vpop.permute.xlu0 %1693
        %vm1695 = vcmask 465920
        %v1698 = vsel %vm1695, %v1688, %v1692
        %v1702 = vsel %vm1695, %v1690, %v1694
        %s1704 = scalar_lea.vmem %s2, 6
        %v1705 = vld [vmem:[%s1704] sm:$0x1]
        %v1707 = vpack.i.b16 %v1705, %v1705
        %v1709 = vlaneseq
        %v1710 = vshrl.u32 %v1709, 7
        %v1711 = vsub.s32 0, %v1710
        %v1712 = vrot.slane %v1707, %v1711
        %v1713 = vmul.bf16 %v1698, %v1712
        %v1714 = vmul.bf16 %v1702, %v1712
        %s1715 = scalar_lea.vmem %s6, 192
        %v1716 = vld [vmem:[%s1715] sm:$0xf]
        %v1717 = vld [vmem:[%s1715 + $0x4] sm:$0xf]
        %v1718 = vld [vmem:[%s1715 + $0x8] sm:$0xf]
        %v1719 = vld [vmem:[%s1715 + $0xc] sm:$0xf]
        %v1720 = vld [vmem:[%s1715 + $0x10] sm:$0xf]
        %v1721 = vld [vmem:[%s1715 + $0x14] sm:$0xf]
        %v1722 = vld [vmem:[%s1715 + $0x18] sm:$0xf]
        %v1723 = vld [vmem:[%s1715 + $0x1c] sm:$0xf]
        %v1732 = vunpack.c.l.b16 %v1716
        %v1733 = vunpack.c.l.b16 %v1717
        %v1734 = vunpack.c.l.b16 %v1718
        %v1735 = vunpack.c.l.b16 %v1719
        %v1736 = vunpack.c.l.b16 %v1720
        %v1737 = vunpack.c.l.b16 %v1721
        %v1738 = vunpack.c.l.b16 %v1722
        %v1739 = vunpack.c.l.b16 %v1723
        %v1740 = vpack.c.b16 %v1733, %v1732
        %v1741 = vpack.c.b16 %v1735, %v1734
        %v1742 = vpack.c.b16 %v1737, %v1736
        %v1743 = vpack.c.b16 %v1739, %v1738
        %v1745 = vsel %vm615, %v1740, 0
        %v1748 = vsel %vm615, %v1741, 0
        %v1751 = vsel %vm615, %v1742, 0
        %v1754 = vsel %vm615, %v1743, 0
        %1756 = vmatprep.subr.bf16.mxu0 0
        %1757 = vmatpush1.bf16.msra.mxu0 %v1713
        %1758 = vmatprep.subr.bf16.mxu0 0
        %1759 = vmatpush1.bf16.msra.mxu0 %v1714
        %1760 = vmatprep.subr.bf16.mxu0 0
        %1761 = vmatpush1.bf16.msra.mxu0 0
        %1762 = vmatprep.subr.bf16.mxu0 0
        %1763 = vmatpush1.bf16.msra.mxu0 0
        %1764 = vmatprep.subr.bf16.mxu0 0
        %1765 = vmatpush1.bf16.msra.mxu0 0
        %1766 = vmatprep.subr.bf16.mxu0 0
        %1767 = vmatpush1.bf16.msra.mxu0 0
        %1768 = vmatprep.subr.bf16.mxu0 0
        %1769 = vmatpush1.bf16.msra.mxu0 0
        %1770 = vmatprep.subr.bf16.mxu0 0
        %1771 = vmatpush1.bf16.msra.mxu0 0
        %1772 = vmatprep.subr.bf16.mxu0 0
        %1773 = vmatpush1.bf16.msra.mxu0 0
        %1774 = vmatprep.subr.bf16.mxu0 0
        %1775 = vmatpush1.bf16.msra.mxu0 0
        %1776 = vmatprep.subr.bf16.mxu0 0
        %1777 = vmatpush1.bf16.msra.mxu0 0
        %1778 = vmatprep.subr.bf16.mxu0 0
        %1779 = vmatpush1.bf16.msra.mxu0 0
        %1780 = vmatprep.subr.bf16.mxu0 0
        %1781 = vmatpush1.bf16.msra.mxu0 0
        %1782 = vmatprep.subr.bf16.mxu0 0
        %1783 = vmatpush1.bf16.msra.mxu0 0
        %1784 = vmatprep.subr.bf16.mxu0 0
        %1785 = vmatpush1.bf16.msra.mxu0 0
        %1786 = vmatprep.subr.bf16.mxu0 0
        %1787 = vmatpush1.bf16.msra.mxu0 0
        %1788 = vmatprep.mubr.bf16.mxu0 0
        %1789 = vmatmul.mubr.bf16.gmra.mrb[0].mxu0 %v1745
        %v1790 = vpop.f32.mrb[0].mxu0
        %v1791 = vadd.f32 0.0, %v1790
        %v1792 = vpop.f32.mrb[0].mxu0
        %v1793 = vpop.f32.mrb[0].mxu0
        %v1794 = vadd.f32 0.0, %v1793
        %v1795 = vpop.f32.mrb[0].mxu0
        %1796 = vmatprep.mubr.bf16.mxu0 0
        %1797 = vmatmul.mubr.bf16.gmra.mrb[0].mxu0 %v1748
        %v1798 = vpop.f32.mrb[0].mxu0
        %v1799 = vadd.f32 0.0, %v1798
        %v1800 = vpop.f32.mrb[0].mxu0
        %v1801 = vpop.f32.mrb[0].mxu0
        %v1802 = vadd.f32 0.0, %v1801
        %v1803 = vpop.f32.mrb[0].mxu0
        %1804 = vmatprep.mubr.bf16.mxu0 0
        %1805 = vmatmul.mubr.bf16.gmra.mrb[0].mxu0 %v1751
        %v1806 = vpop.f32.mrb[0].mxu0
        %v1807 = vadd.f32 0.0, %v1806
        %v1808 = vpop.f32.mrb[0].mxu0
        %v1809 = vpop.f32.mrb[0].mxu0
        %v1810 = vadd.f32 0.0, %v1809
        %v1811 = vpop.f32.mrb[0].mxu0
        %1812 = vmatprep.mubr.bf16.mxu0 0
        %1813 = vmatmul.mubr.bf16.gmra.mrb[0].mxu0 %v1754
        %v1814 = vpop.f32.mrb[0].mxu0
        %v1815 = vadd.f32 0.0, %v1814
        %v1816 = vpop.f32.mrb[0].mxu0
        %v1817 = vpop.f32.mrb[0].mxu0
        %v1818 = vadd.f32 0.0, %v1817
        %v1819 = vpop.f32.mrb[0].mxu0
        %1820 = vdwg.mxu0
        %v1821 = vadd.f32 %v1679, %v1791
        %v1822 = vadd.f32 %v1680, %v1794
        %v1823 = vadd.f32 %v1681, %v1799
        %v1824 = vadd.f32 %v1682, %v1802
        %v1825 = vadd.f32 %v1683, %v1807
        %v1826 = vadd.f32 %v1684, %v1810
        %v1827 = vadd.f32 %v1685, %v1815
        %v1828 = vadd.f32 %v1686, %v1818
        %1829 = vrot.lane.b32.xlu0 %v877, 120
        %v1830 = vpop.permute.xlu0 %1829
        %1831 = vrot.lane.b32.xlu0 %v878, 120
        %v1832 = vpop.permute.xlu0 %1831
        %1833 = vrot.lane.b32.xlu0 %v877, 56
        %v1834 = vpop.permute.xlu0 %1833
        %1835 = vrot.lane.b32.xlu0 %v878, 56
        %v1836 = vpop.permute.xlu0 %1835
        %vm1837 = vcmask 457728
        %v1840 = vsel %vm1837, %v1830, %v1834
        %v1844 = vsel %vm1837, %v1832, %v1836
        %s1846 = scalar_lea.vmem %s2, 7
        %v1847 = vld [vmem:[%s1846] sm:$0x1]
        %v1849 = vpack.i.b16 %v1847, %v1847
        %v1851 = vlaneseq
        %v1852 = vshrl.u32 %v1851, 7
        %v1853 = vsub.s32 0, %v1852
        %v1854 = vrot.slane %v1849, %v1853
        %v1855 = vmul.bf16 %v1840, %v1854
        %v1856 = vmul.bf16 %v1844, %v1854
        %s1857 = scalar_lea.vmem %s6, 224
        %v1858 = vld [vmem:[%s1857] sm:$0xf]
        %v1859 = vld [vmem:[%s1857 + $0x4] sm:$0xf]
        %v1860 = vld [vmem:[%s1857 + $0x8] sm:$0xf]
        %v1861 = vld [vmem:[%s1857 + $0xc] sm:$0xf]
        %v1862 = vld [vmem:[%s1857 + $0x10] sm:$0xf]
        %v1863 = vld [vmem:[%s1857 + $0x14] sm:$0xf]
        %v1864 = vld [vmem:[%s1857 + $0x18] sm:$0xf]
        %v1865 = vld [vmem:[%s1857 + $0x1c] sm:$0xf]
        %v1874 = vunpack.c.l.b16 %v1858
        %v1875 = vunpack.c.l.b16 %v1859
        %v1876 = vunpack.c.l.b16 %v1860
        %v1877 = vunpack.c.l.b16 %v1861
        %v1878 = vunpack.c.l.b16 %v1862
        %v1879 = vunpack.c.l.b16 %v1863
        %v1880 = vunpack.c.l.b16 %v1864
        %v1881 = vunpack.c.l.b16 %v1865
        %v1882 = vpack.c.b16 %v1875, %v1874
        %v1883 = vpack.c.b16 %v1877, %v1876
        %v1884 = vpack.c.b16 %v1879, %v1878
        %v1885 = vpack.c.b16 %v1881, %v1880
        %v1887 = vsel %vm615, %v1882, 0
        %v1890 = vsel %vm615, %v1883, 0
        %v1893 = vsel %vm615, %v1884, 0
        %v1896 = vsel %vm615, %v1885, 0
        %1898 = vmatprep.subr.bf16.mxu0 0
        %1899 = vmatpush1.bf16.msra.mxu0 %v1855
        %1900 = vmatprep.subr.bf16.mxu0 0
        %1901 = vmatpush1.bf16.msra.mxu0 %v1856
        %1902 = vmatprep.subr.bf16.mxu0 0
        %1903 = vmatpush1.bf16.msra.mxu0 0
        %1904 = vmatprep.subr.bf16.mxu0 0
        %1905 = vmatpush1.bf16.msra.mxu0 0
        %1906 = vmatprep.subr.bf16.mxu0 0
        %1907 = vmatpush1.bf16.msra.mxu0 0
        %1908 = vmatprep.subr.bf16.mxu0 0
        %1909 = vmatpush1.bf16.msra.mxu0 0
        %1910 = vmatprep.subr.bf16.mxu0 0
        %1911 = vmatpush1.bf16.msra.mxu0 0
        %1912 = vmatprep.subr.bf16.mxu0 0
        %1913 = vmatpush1.bf16.msra.mxu0 0
        %1914 = vmatprep.subr.bf16.mxu0 0
        %1915 = vmatpush1.bf16.msra.mxu0 0
        %1916 = vmatprep.subr.bf16.mxu0 0
        %1917 = vmatpush1.bf16.msra.mxu0 0
        %1918 = vmatprep.subr.bf16.mxu0 0
        %1919 = vmatpush1.bf16.msra.mxu0 0
        %1920 = vmatprep.subr.bf16.mxu0 0
        %1921 = vmatpush1.bf16.msra.mxu0 0
        %1922 = vmatprep.subr.bf16.mxu0 0
        %1923 = vmatpush1.bf16.msra.mxu0 0
        %1924 = vmatprep.subr.bf16.mxu0 0
        %1925 = vmatpush1.bf16.msra.mxu0 0
        %1926 = vmatprep.subr.bf16.mxu0 0
        %1927 = vmatpush1.bf16.msra.mxu0 0
        %1928 = vmatprep.subr.bf16.mxu0 0
        %1929 = vmatpush1.bf16.msra.mxu0 0
        %1930 = vmatprep.mubr.bf16.mxu0 0
        %1931 = vmatmul.mubr.bf16.gmra.mrb[0].mxu0 %v1887
        %v1932 = vpop.f32.mrb[0].mxu0
        %v1933 = vadd.f32 0.0, %v1932
        %v1934 = vpop.f32.mrb[0].mxu0
        %v1935 = vpop.f32.mrb[0].mxu0
        %v1936 = vadd.f32 0.0, %v1935
        %v1937 = vpop.f32.mrb[0].mxu0
        %1938 = vmatprep.mubr.bf16.mxu0 0
        %1939 = vmatmul.mubr.bf16.gmra.mrb[0].mxu0 %v1890
        %v1940 = vpop.f32.mrb[0].mxu0
        %v1941 = vadd.f32 0.0, %v1940
        %v1942 = vpop.f32.mrb[0].mxu0
        %v1943 = vpop.f32.mrb[0].mxu0
        %v1944 = vadd.f32 0.0, %v1943
        %v1945 = vpop.f32.mrb[0].mxu0
        %1946 = vmatprep.mubr.bf16.mxu0 0
        %1947 = vmatmul.mubr.bf16.gmra.mrb[0].mxu0 %v1893
        %v1948 = vpop.f32.mrb[0].mxu0
        %v1949 = vadd.f32 0.0, %v1948
        %v1950 = vpop.f32.mrb[0].mxu0
        %v1951 = vpop.f32.mrb[0].mxu0
        %v1952 = vadd.f32 0.0, %v1951
        %v1953 = vpop.f32.mrb[0].mxu0
        %1954 = vmatprep.mubr.bf16.mxu0 0
        %1955 = vmatmul.mubr.bf16.gmra.mrb[0].mxu0 %v1896
        %v1956 = vpop.f32.mrb[0].mxu0
        %v1957 = vadd.f32 0.0, %v1956
        %v1958 = vpop.f32.mrb[0].mxu0
        %v1959 = vpop.f32.mrb[0].mxu0
        %v1960 = vadd.f32 0.0, %v1959
        %v1961 = vpop.f32.mrb[0].mxu0
        %1962 = vdwg.mxu0
        %v1963 = vadd.f32 %v1821, %v1933
        %v1964 = vadd.f32 %v1822, %v1936
        %v1965 = vadd.f32 %v1823, %v1941
        %v1966 = vadd.f32 %v1824, %v1944
        %v1967 = vadd.f32 %v1825, %v1949
        %v1968 = vadd.f32 %v1826, %v1952
        %v1969 = vadd.f32 %v1827, %v1957
        %v1970 = vadd.f32 %v1828, %v1960
        %1971 = vrot.lane.b32.xlu0 %v877, 119
        %v1972 = vpop.permute.xlu0 %1971
        %1973 = vrot.lane.b32.xlu0 %v878, 119
        %v1974 = vpop.permute.xlu0 %1973
        %1975 = vrot.lane.b32.xlu0 %v877, 55
        %v1976 = vpop.permute.xlu0 %1975
        %1977 = vrot.lane.b32.xlu0 %v878, 55
        %v1978 = vpop.permute.xlu0 %1977
        %vm1979 = vcmask 449536
        %v1982 = vsel %vm1979, %v1972, %v1976
        %v1986 = vsel %vm1979, %v1974, %v1978
        %s1988 = scalar_lea.vmem %s2, 8
        %v1989 = vld [vmem:[%s1988] sm:$0x1]
        %v1991 = vpack.i.b16 %v1989, %v1989
        %v1993 = vlaneseq
        %v1994 = vshrl.u32 %v1993, 7
        %v1995 = vsub.s32 0, %v1994
        %v1996 = vrot.slane %v1991, %v1995
        %v1997 = vmul.bf16 %v1982, %v1996
        %v1998 = vmul.bf16 %v1986, %v1996
        %s1999 = scalar_lea.vmem %s6, 256
        %v2000 = vld [vmem:[%s1999] sm:$0xf]
        %v2001 = vld [vmem:[%s1999 + $0x4] sm:$0xf]
        %v2002 = vld [vmem:[%s1999 + $0x8] sm:$0xf]
        %v2003 = vld [vmem:[%s1999 + $0xc] sm:$0xf]
        %v2004 = vld [vmem:[%s1999 + $0x10] sm:$0xf]
        %v2005 = vld [vmem:[%s1999 + $0x14] sm:$0xf]
        %v2006 = vld [vmem:[%s1999 + $0x18] sm:$0xf]
        %v2007 = vld [vmem:[%s1999 + $0x1c] sm:$0xf]
        %v2016 = vunpack.c.l.b16 %v2000
        %v2017 = vunpack.c.l.b16 %v2001
        %v2018 = vunpack.c.l.b16 %v2002
        %v2019 = vunpack.c.l.b16 %v2003
        %v2020 = vunpack.c.l.b16 %v2004
        %v2021 = vunpack.c.l.b16 %v2005
        %v2022 = vunpack.c.l.b16 %v2006
        %v2023 = vunpack.c.l.b16 %v2007
        %v2024 = vpack.c.b16 %v2017, %v2016
        %v2025 = vpack.c.b16 %v2019, %v2018
        %v2026 = vpack.c.b16 %v2021, %v2020
        %v2027 = vpack.c.b16 %v2023, %v2022
        %v2029 = vsel %vm615, %v2024, 0
        %v2032 = vsel %vm615, %v2025, 0
        %v2035 = vsel %vm615, %v2026, 0
        %v2038 = vsel %vm615, %v2027, 0
        %2040 = vmatprep.subr.bf16.mxu0 0
        %2041 = vmatpush1.bf16.msra.mxu0 %v1997
        %2042 = vmatprep.subr.bf16.mxu0 0
        %2043 = vmatpush1.bf16.msra.mxu0 %v1998
        %2044 = vmatprep.subr.bf16.mxu0 0
        %2045 = vmatpush1.bf16.msra.mxu0 0
        %2046 = vmatprep.subr.bf16.mxu0 0
        %2047 = vmatpush1.bf16.msra.mxu0 0
        %2048 = vmatprep.subr.bf16.mxu0 0
        %2049 = vmatpush1.bf16.msra.mxu0 0
        %2050 = vmatprep.subr.bf16.mxu0 0
        %2051 = vmatpush1.bf16.msra.mxu0 0
        %2052 = vmatprep.subr.bf16.mxu0 0
        %2053 = vmatpush1.bf16.msra.mxu0 0
        %2054 = vmatprep.subr.bf16.mxu0 0
        %2055 = vmatpush1.bf16.msra.mxu0 0
        %2056 = vmatprep.subr.bf16.mxu0 0
        %2057 = vmatpush1.bf16.msra.mxu0 0
        %2058 = vmatprep.subr.bf16.mxu0 0
        %2059 = vmatpush1.bf16.msra.mxu0 0
        %2060 = vmatprep.subr.bf16.mxu0 0
        %2061 = vmatpush1.bf16.msra.mxu0 0
        %2062 = vmatprep.subr.bf16.mxu0 0
        %2063 = vmatpush1.bf16.msra.mxu0 0
        %2064 = vmatprep.subr.bf16.mxu0 0
        %2065 = vmatpush1.bf16.msra.mxu0 0
        %2066 = vmatprep.subr.bf16.mxu0 0
        %2067 = vmatpush1.bf16.msra.mxu0 0
        %2068 = vmatprep.subr.bf16.mxu0 0
        %2069 = vmatpush1.bf16.msra.mxu0 0
        %2070 = vmatprep.subr.bf16.mxu0 0
        %2071 = vmatpush1.bf16.msra.mxu0 0
        %2072 = vmatprep.mubr.bf16.mxu0 0
        %2073 = vmatmul.mubr.bf16.gmra.mrb[0].mxu0 %v2029
        %v2074 = vpop.f32.mrb[0].mxu0
        %v2075 = vadd.f32 0.0, %v2074
        %v2076 = vpop.f32.mrb[0].mxu0
        %v2077 = vpop.f32.mrb[0].mxu0
        %v2078 = vadd.f32 0.0, %v2077
        %v2079 = vpop.f32.mrb[0].mxu0
        %2080 = vmatprep.mubr.bf16.mxu0 0
        %2081 = vmatmul.mubr.bf16.gmra.mrb[0].mxu0 %v2032
        %v2082 = vpop.f32.mrb[0].mxu0
        %v2083 = vadd.f32 0.0, %v2082
        %v2084 = vpop.f32.mrb[0].mxu0
        %v2085 = vpop.f32.mrb[0].mxu0
        %v2086 = vadd.f32 0.0, %v2085
        %v2087 = vpop.f32.mrb[0].mxu0
        %2088 = vmatprep.mubr.bf16.mxu0 0
        %2089 = vmatmul.mubr.bf16.gmra.mrb[0].mxu0 %v2035
        %v2090 = vpop.f32.mrb[0].mxu0
        %v2091 = vadd.f32 0.0, %v2090
        %v2092 = vpop.f32.mrb[0].mxu0
        %v2093 = vpop.f32.mrb[0].mxu0
        %v2094 = vadd.f32 0.0, %v2093
        %v2095 = vpop.f32.mrb[0].mxu0
        %2096 = vmatprep.mubr.bf16.mxu0 0
        %2097 = vmatmul.mubr.bf16.gmra.mrb[0].mxu0 %v2038
        %v2098 = vpop.f32.mrb[0].mxu0
        %v2099 = vadd.f32 0.0, %v2098
        %v2100 = vpop.f32.mrb[0].mxu0
        %v2101 = vpop.f32.mrb[0].mxu0
        %v2102 = vadd.f32 0.0, %v2101
        %v2103 = vpop.f32.mrb[0].mxu0
        %2104 = vdwg.mxu0
        %v2105 = vadd.f32 %v1963, %v2075
        %v2106 = vadd.f32 %v1964, %v2078
        %v2107 = vadd.f32 %v1965, %v2083
        %v2108 = vadd.f32 %v1966, %v2086
        %v2109 = vadd.f32 %v1967, %v2091
        %v2110 = vadd.f32 %v1968, %v2094
        %v2111 = vadd.f32 %v1969, %v2099
        %v2112 = vadd.f32 %v1970, %v2102
        %v2113 = vld [vmem:[%s7] sm:$0xff]
        %v2114 = vld [vmem:[%s7 + $0x8] sm:$0xff]
        %v2115 = vld [vmem:[%s7 + $0x10] sm:$0xff]
        %v2116 = vld [vmem:[%s7 + $0x18] sm:$0xff]
        %v2117 = vld [vmem:[%s7 + $0x20] sm:$0xff]
        %v2118 = vld [vmem:[%s7 + $0x28] sm:$0xff]
        %v2119 = vld [vmem:[%s7 + $0x30] sm:$0xff]
        %v2120 = vld [vmem:[%s7 + $0x38] sm:$0xff]
        %2122 = vset.pattern.permute.xlu0 0
        %2123 = vperm.xlu0 %2122, %v2113
        %v2124 = vpop.permute.xlu0 %2123
        %2127 = vset.pattern.permute.xlu0 0
        %2128 = vperm.xlu0 %2127, %v2114
        %v2129 = vpop.permute.xlu0 %2128
        %2132 = vset.pattern.permute.xlu0 0
        %2133 = vperm.xlu0 %2132, %v2115
        %v2134 = vpop.permute.xlu0 %2133
        %2137 = vset.pattern.permute.xlu0 0
        %2138 = vperm.xlu0 %2137, %v2116
        %v2139 = vpop.permute.xlu0 %2138
        %2142 = vset.pattern.permute.xlu0 0
        %2143 = vperm.xlu0 %2142, %v2117
        %v2144 = vpop.permute.xlu0 %2143
        %2147 = vset.pattern.permute.xlu0 0
        %2148 = vperm.xlu0 %2147, %v2118
        %v2149 = vpop.permute.xlu0 %2148
        %2152 = vset.pattern.permute.xlu0 0
        %2153 = vperm.xlu0 %2152, %v2119
        %v2154 = vpop.permute.xlu0 %2153
        %2157 = vset.pattern.permute.xlu0 0
        %2158 = vperm.xlu0 %2157, %v2120
        %v2159 = vpop.permute.xlu0 %2158
        %v2161 = vadd.f32 %v2105, %v2124
        %v2162 = vadd.f32 %v2106, %v2129
        %v2163 = vadd.f32 %v2107, %v2134
        %v2164 = vadd.f32 %v2108, %v2139
        %v2165 = vadd.f32 %v2109, %v2144
        %v2166 = vadd.f32 %v2110, %v2149
        %v2167 = vadd.f32 %v2111, %v2154
        %v2168 = vadd.f32 %v2112, %v2159
        %v2169 = vld [vmem:[%s560] sm:$0x1]
        %v2170 = vsub.f32 0.0, %v2169
        %v2171 = vmul.f32 %v2170, 1.442695
        %v2172 = vpow.pop %v2171
        %v2173 = vadd.f32 %v2172, 1.0
        %v2174 = vrcp.pop %v2173
        %v2175 = vmul.f32 1.0, %v2174
        %v2176 = vmul.f32 %v2169, %v2175
        %v2177 = vld [vmem:[%s8] sm:$0xff]
        %v2178 = vld [vmem:[%s8 + $0x8] sm:$0xff]
        %v2179 = vld [vmem:[%s8 + $0x10] sm:$0xff]
        %v2180 = vld [vmem:[%s8 + $0x18] sm:$0xff]
        %v2181 = vld [vmem:[%s8 + $0x20] sm:$0xff]
        %v2182 = vld [vmem:[%s8 + $0x28] sm:$0xff]
        %v2183 = vld [vmem:[%s8 + $0x30] sm:$0xff]
        %v2184 = vld [vmem:[%s8 + $0x38] sm:$0xff]
        %v2186 = vlaneseq
        %v2187 = vshrl.u32 %v2186, 7
        %v2188 = vsub.s32 0, %v2187
        %v2189 = vrot.slane %v2176, %v2188
        %v2191 = vmul.f32 %v2177, %v2189
        %v2192 = vmul.f32 %v2178, %v2189
        %v2193 = vmul.f32 %v2179, %v2189
        %v2194 = vmul.f32 %v2180, %v2189
        %v2195 = vmul.f32 %v2181, %v2189
        %v2196 = vmul.f32 %v2182, %v2189
        %v2197 = vmul.f32 %v2183, %v2189
        %v2198 = vmul.f32 %v2184, %v2189
        %v2199 = vsel %vm566, %v2191, 0.0
        %2200 = vadd.xlane.f32.xlu0 %v2199
        %v2201 = vpop.xlane.xlu0 %2200
        %v2202 = vsel %vm566, %v2192, 0.0
        %2203 = vadd.xlane.f32.xlu0 %v2202
        %v2204 = vpop.xlane.xlu0 %2203
        %v2205 = vsel %vm566, %v2193, 0.0
        %2206 = vadd.xlane.f32.xlu0 %v2205
        %v2207 = vpop.xlane.xlu0 %2206
        %v2208 = vsel %vm566, %v2194, 0.0
        %2209 = vadd.xlane.f32.xlu0 %v2208
        %v2210 = vpop.xlane.xlu0 %2209
        %v2211 = vsel %vm566, %v2195, 0.0
        %2212 = vadd.xlane.f32.xlu0 %v2211
        %v2213 = vpop.xlane.xlu0 %2212
        %v2214 = vsel %vm566, %v2196, 0.0
        %2215 = vadd.xlane.f32.xlu0 %v2214
        %v2216 = vpop.xlane.xlu0 %2215
        %v2217 = vsel %vm566, %v2197, 0.0
        %2218 = vadd.xlane.f32.xlu0 %v2217
        %v2219 = vpop.xlane.xlu0 %2218
        %v2220 = vsel %vm566, %v2198, 0.0
        %2221 = vadd.xlane.f32.xlu0 %v2220
        %v2222 = vpop.xlane.xlu0 %2221
        %v2223 = vld [vmem:[%s9] sm:$0xff]
        %v2224 = vld [vmem:[%s9 + $0x8] sm:$0xff]
        %v2225 = vld [vmem:[%s9 + $0x10] sm:$0xff]
        %v2226 = vld [vmem:[%s9 + $0x18] sm:$0xff]
        %v2227 = vld [vmem:[%s9 + $0x20] sm:$0xff]
        %v2228 = vld [vmem:[%s9 + $0x28] sm:$0xff]
        %v2229 = vld [vmem:[%s9 + $0x30] sm:$0xff]
        %v2230 = vld [vmem:[%s9 + $0x38] sm:$0xff]
        %v2231 = vadd.f32 %v2201, %v2223
        %v2232 = vadd.f32 %v2204, %v2224
        %v2233 = vadd.f32 %v2207, %v2225
        %v2234 = vadd.f32 %v2210, %v2226
        %v2235 = vadd.f32 %v2213, %v2227
        %v2236 = vadd.f32 %v2216, %v2228
        %v2237 = vadd.f32 %v2219, %v2229
        %v2238 = vadd.f32 %v2222, %v2230
        %2240 = vset.pattern.permute.xlu0 0
        %2241 = vperm.xlu0 %2240, %v2231
        %v2242 = vpop.permute.xlu0 %2241
        %2245 = vset.pattern.permute.xlu0 0
        %2246 = vperm.xlu0 %2245, %v2232
        %v2247 = vpop.permute.xlu0 %2246
        %2250 = vset.pattern.permute.xlu0 0
        %2251 = vperm.xlu0 %2250, %v2233
        %v2252 = vpop.permute.xlu0 %2251
        %2255 = vset.pattern.permute.xlu0 0
        %2256 = vperm.xlu0 %2255, %v2234
        %v2257 = vpop.permute.xlu0 %2256
        %2260 = vset.pattern.permute.xlu0 0
        %2261 = vperm.xlu0 %2260, %v2235
        %v2262 = vpop.permute.xlu0 %2261
        %2265 = vset.pattern.permute.xlu0 0
        %2266 = vperm.xlu0 %2265, %v2236
        %v2267 = vpop.permute.xlu0 %2266
        %2270 = vset.pattern.permute.xlu0 0
        %2271 = vperm.xlu0 %2270, %v2237
        %v2272 = vpop.permute.xlu0 %2271
        %2275 = vset.pattern.permute.xlu0 0
        %2276 = vperm.xlu0 %2275, %v2238
        %v2277 = vpop.permute.xlu0 %2276
        %v2279 = vadd.f32 %v2161, %v2242
        %v2280 = vadd.f32 %v2162, %v2247
        %v2281 = vadd.f32 %v2163, %v2252
        %v2282 = vadd.f32 %v2164, %v2257
        %v2283 = vadd.f32 %v2165, %v2262
        %v2284 = vadd.f32 %v2166, %v2267
        %v2285 = vadd.f32 %v2167, %v2272
        %v2286 = vadd.f32 %v2168, %v2277
        %v2287 = vsel %vm566, %v2279, 0.0
        %2288 = vadd.xlane.f32.xlu0 %v2287
        %v2289 = vpop.xlane.xlu0 %2288
        %v2290 = vsel %vm566, %v2280, 0.0
        %2291 = vadd.xlane.f32.xlu0 %v2290
        %v2292 = vpop.xlane.xlu0 %2291
        %v2293 = vsel %vm566, %v2281, 0.0
        %2294 = vadd.xlane.f32.xlu0 %v2293
        %v2295 = vpop.xlane.xlu0 %2294
        %v2296 = vsel %vm566, %v2282, 0.0
        %2297 = vadd.xlane.f32.xlu0 %v2296
        %v2298 = vpop.xlane.xlu0 %2297
        %v2299 = vsel %vm566, %v2283, 0.0
        %2300 = vadd.xlane.f32.xlu0 %v2299
        %v2301 = vpop.xlane.xlu0 %2300
        %v2302 = vsel %vm566, %v2284, 0.0
        %2303 = vadd.xlane.f32.xlu0 %v2302
        %v2304 = vpop.xlane.xlu0 %2303
        %v2305 = vsel %vm566, %v2285, 0.0
        %2306 = vadd.xlane.f32.xlu0 %v2305
        %v2307 = vpop.xlane.xlu0 %2306
        %v2308 = vsel %vm566, %v2286, 0.0
        %2309 = vadd.xlane.f32.xlu0 %v2308
        %v2310 = vpop.xlane.xlu0 %2309
        %v2311 = vmul.f32 %v2279, %v2279
        %v2312 = vmul.f32 %v2280, %v2280
        %v2313 = vmul.f32 %v2281, %v2281
        %v2314 = vmul.f32 %v2282, %v2282
        %v2315 = vmul.f32 %v2283, %v2283
        %v2316 = vmul.f32 %v2284, %v2284
        %v2317 = vmul.f32 %v2285, %v2285
        %v2318 = vmul.f32 %v2286, %v2286
        %v2319 = vsel %vm566, %v2311, 0.0
        %2320 = vadd.xlane.f32.xlu0 %v2319
        %v2321 = vpop.xlane.xlu0 %2320
        %v2322 = vsel %vm566, %v2312, 0.0
        %2323 = vadd.xlane.f32.xlu0 %v2322
        %v2324 = vpop.xlane.xlu0 %2323
        %v2325 = vsel %vm566, %v2313, 0.0
        %2326 = vadd.xlane.f32.xlu0 %v2325
        %v2327 = vpop.xlane.xlu0 %2326
        %v2328 = vsel %vm566, %v2314, 0.0
        %2329 = vadd.xlane.f32.xlu0 %v2328
        %v2330 = vpop.xlane.xlu0 %2329
        %v2331 = vsel %vm566, %v2315, 0.0
        %2332 = vadd.xlane.f32.xlu0 %v2331
        %v2333 = vpop.xlane.xlu0 %2332
        %v2334 = vsel %vm566, %v2316, 0.0
        %2335 = vadd.xlane.f32.xlu0 %v2334
        %v2336 = vpop.xlane.xlu0 %2335
        %v2337 = vsel %vm566, %v2317, 0.0
        %2338 = vadd.xlane.f32.xlu0 %v2337
        %v2339 = vpop.xlane.xlu0 %2338
        %v2340 = vsel %vm566, %v2318, 0.0
        %2341 = vadd.xlane.f32.xlu0 %v2340
        %v2342 = vpop.xlane.xlu0 %2341
        %v2343 = vsel %vm597, %v2289, 0.0
        %v2344 = vsel %vm597, %v2292, 0.0
        %v2345 = vsel %vm597, %v2295, 0.0
        %v2346 = vsel %vm597, %v2298, 0.0
        %v2347 = vsel %vm597, %v2301, 0.0
        %v2348 = vsel %vm597, %v2304, 0.0
        %v2349 = vsel %vm597, %v2307, 0.0
        %v2350 = vsel %vm597, %v2310, 0.0
        %v2351 = vsel %vm602, %v2321, 0.0
        %v2352 = vsel %vm602, %v2324, 0.0
        %v2353 = vsel %vm602, %v2327, 0.0
        %v2354 = vsel %vm602, %v2330, 0.0
        %v2355 = vsel %vm602, %v2333, 0.0
        %v2356 = vsel %vm602, %v2336, 0.0
        %v2357 = vsel %vm602, %v2339, 0.0
        %v2358 = vsel %vm602, %v2342, 0.0
        %v2359 = vadd.f32 %v2343, %v2351
        %v2360 = vadd.f32 %v2344, %v2352
        %v2361 = vadd.f32 %v2345, %v2353
        %v2362 = vadd.f32 %v2346, %v2354
        %v2363 = vadd.f32 %v2347, %v2355
        %v2364 = vadd.f32 %v2348, %v2356
        %v2365 = vadd.f32 %v2349, %v2357
        %v2366 = vadd.f32 %v2350, %v2358
        %v2367 = vld [vmem:[%s10] sm:$0xff]
        %v2368 = vld [vmem:[%s10 + $0x8] sm:$0xff]
        %v2369 = vld [vmem:[%s10 + $0x10] sm:$0xff]
        %v2370 = vld [vmem:[%s10 + $0x18] sm:$0xff]
        %v2371 = vld [vmem:[%s10 + $0x20] sm:$0xff]
        %v2372 = vld [vmem:[%s10 + $0x28] sm:$0xff]
        %v2373 = vld [vmem:[%s10 + $0x30] sm:$0xff]
        %v2374 = vld [vmem:[%s10 + $0x38] sm:$0xff]
        %v2376 = vsel %vm566, %v2367, 0
        %v2379 = vsel %vm566, %v2368, 0
        %v2382 = vsel %vm566, %v2369, 0
        %v2385 = vsel %vm566, %v2370, 0
        %v2388 = vsel %vm566, %v2371, 0
        %v2391 = vsel %vm566, %v2372, 0
        %v2394 = vsel %vm566, %v2373, 0
        %v2397 = vsel %vm566, %v2374, 0
        %2399 = vmatprep.subr.mxu0 0.0
        %2400 = vmatpush1.msra.mxu0 %v2359
        %2401 = vmatprep.subr.mxu0 0.0
        %2402 = vmatpush1.msra.mxu0 %v2360
        %2403 = vmatprep.subr.mxu0 0.0
        %2404 = vmatpush1.msra.mxu0 %v2361
        %2405 = vmatprep.subr.mxu0 0.0
        %2406 = vmatpush1.msra.mxu0 %v2362
        %2407 = vmatprep.subr.mxu0 0.0
        %2408 = vmatpush1.msra.mxu0 %v2363
        %2409 = vmatprep.subr.mxu0 0.0
        %2410 = vmatpush1.msra.mxu0 %v2364
        %2411 = vmatprep.subr.mxu0 0.0
        %2412 = vmatpush1.msra.mxu0 %v2365
        %2413 = vmatprep.subr.mxu0 0.0
        %2414 = vmatpush1.msra.mxu0 %v2366
        %2415 = vmatprep.subr.mxu0 0.0
        %2416 = vmatpush1.msra.mxu0 0.0
        %2417 = vmatprep.subr.mxu0 0.0
        %2418 = vmatpush1.msra.mxu0 0.0
        %2419 = vmatprep.subr.mxu0 0.0
        %2420 = vmatpush1.msra.mxu0 0.0
        %2421 = vmatprep.subr.mxu0 0.0
        %2422 = vmatpush1.msra.mxu0 0.0
        %2423 = vmatprep.subr.mxu0 0.0
        %2424 = vmatpush1.msra.mxu0 0.0
        %2425 = vmatprep.subr.mxu0 0.0
        %2426 = vmatpush1.msra.mxu0 0.0
        %2427 = vmatprep.subr.mxu0 0.0
        %2428 = vmatpush1.msra.mxu0 0.0
        %2429 = vmatprep.subr.mxu0 0.0
        %2430 = vmatpush1.msra.mxu0 0.0
        %2431 = vmatprep.subr.mxu0 0.0
        %2432 = vmatpush1.msra.mxu0 0.0
        %2433 = vmatprep.subr.mxu0 0.0
        %2434 = vmatpush1.msra.mxu0 0.0
        %2435 = vmatprep.subr.mxu0 0.0
        %2436 = vmatpush1.msra.mxu0 0.0
        %2437 = vmatprep.subr.mxu0 0.0
        %2438 = vmatpush1.msra.mxu0 0.0
        %2439 = vmatprep.subr.mxu0 0.0
        %2440 = vmatpush1.msra.mxu0 0.0
        %2441 = vmatprep.subr.mxu0 0.0
        %2442 = vmatpush1.msra.mxu0 0.0
        %2443 = vmatprep.subr.mxu0 0.0
        %2444 = vmatpush1.msra.mxu0 0.0
        %2445 = vmatprep.subr.mxu0 0.0
        %2446 = vmatpush1.msra.mxu0 0.0
        %2447 = vmatprep.subr.mxu0 0.0
        %2448 = vmatpush1.msra.mxu0 0.0
        %2449 = vmatprep.subr.mxu0 0.0
        %2450 = vmatpush1.msra.mxu0 0.0
        %2451 = vmatprep.subr.mxu0 0.0
        %2452 = vmatpush1.msra.mxu0 0.0
        %2453 = vmatprep.subr.mxu0 0.0
        %2454 = vmatpush1.msra.mxu0 0.0
        %2455 = vmatprep.subr.mxu0 0.0
        %2456 = vmatpush1.msra.mxu0 0.0
        %2457 = vmatprep.subr.mxu0 0.0
        %2458 = vmatpush1.msra.mxu0 0.0
        %2459 = vmatprep.subr.mxu0 0.0
        %2460 = vmatpush1.msra.mxu0 0.0
        %2461 = vmatprep.subr.mxu0 0.0
        %2462 = vmatpush1.msra.mxu0 0.0
        %2463 = vmatprep.mubr.f32.mxu0 0.0
        %2464 = vmatmul.mubr.f32.gmra.mrb[0].mxu0 %v2376
        %v2465 = vpop.f32.mrb[0].mxu0
        %v2466 = vadd.f32 0.0, %v2465
        %v2467 = vpop.f32.mrb[0].mxu0
        %2468 = vmatprep.mubr.f32.mxu0 0.0
        %2469 = vmatmul.mubr.f32.gmra.mrb[0].mxu0 %v2379
        %v2470 = vpop.f32.mrb[0].mxu0
        %v2471 = vadd.f32 0.0, %v2470
        %v2472 = vpop.f32.mrb[0].mxu0
        %2473 = vmatprep.mubr.f32.mxu0 0.0
        %2474 = vmatmul.mubr.f32.gmra.mrb[0].mxu0 %v2382
        %v2475 = vpop.f32.mrb[0].mxu0
        %v2476 = vadd.f32 0.0, %v2475
        %v2477 = vpop.f32.mrb[0].mxu0
        %2478 = vmatprep.mubr.f32.mxu0 0.0
        %2479 = vmatmul.mubr.f32.gmra.mrb[0].mxu0 %v2385
        %v2480 = vpop.f32.mrb[0].mxu0
        %v2481 = vadd.f32 0.0, %v2480
        %v2482 = vpop.f32.mrb[0].mxu0
        %2483 = vmatprep.mubr.f32.mxu0 0.0
        %2484 = vmatmul.mubr.f32.gmra.mrb[0].mxu0 %v2388
        %v2485 = vpop.f32.mrb[0].mxu0
        %v2486 = vadd.f32 0.0, %v2485
        %v2487 = vpop.f32.mrb[0].mxu0
        %2488 = vmatprep.mubr.f32.mxu0 0.0
        %2489 = vmatmul.mubr.f32.gmra.mrb[0].mxu0 %v2391
        %v2490 = vpop.f32.mrb[0].mxu0
        %v2491 = vadd.f32 0.0, %v2490
        %v2492 = vpop.f32.mrb[0].mxu0
        %2493 = vmatprep.mubr.f32.mxu0 0.0
        %2494 = vmatmul.mubr.f32.gmra.mrb[0].mxu0 %v2394
        %v2495 = vpop.f32.mrb[0].mxu0
        %v2496 = vadd.f32 0.0, %v2495
        %v2497 = vpop.f32.mrb[0].mxu0
        %2498 = vmatprep.mubr.f32.mxu0 0.0
        %2499 = vmatmul.mubr.f32.gmra.mrb[0].mxu0 %v2397
        %v2500 = vpop.f32.mrb[0].mxu0
        %v2501 = vadd.f32 0.0, %v2500
        %v2502 = vpop.f32.mrb[0].mxu0
        %2503 = vdwg.mxu0
        %v2504 = vmul.f32 %v2466, %v2466
        %v2505 = vmul.f32 %v2471, %v2471
        %v2506 = vmul.f32 %v2476, %v2476
        %v2507 = vmul.f32 %v2481, %v2481
        %v2508 = vmul.f32 %v2486, %v2486
        %v2509 = vmul.f32 %v2491, %v2491
        %v2510 = vmul.f32 %v2496, %v2496
        %v2511 = vmul.f32 %v2501, %v2501
        %2520 = vrot.lane.b32.xlu0 %v2504, 1
        %v2521 = vpop.permute.xlu0 %2520
        %2522 = vrot.lane.b32.xlu0 %v2505, 1
        %v2523 = vpop.permute.xlu0 %2522
        %2524 = vrot.lane.b32.xlu0 %v2506, 1
        %v2525 = vpop.permute.xlu0 %2524
        %2526 = vrot.lane.b32.xlu0 %v2507, 1
        %v2527 = vpop.permute.xlu0 %2526
        %2528 = vrot.lane.b32.xlu0 %v2508, 1
        %v2529 = vpop.permute.xlu0 %2528
        %2530 = vrot.lane.b32.xlu0 %v2509, 1
        %v2531 = vpop.permute.xlu0 %2530
        %2532 = vrot.lane.b32.xlu0 %v2510, 1
        %v2533 = vpop.permute.xlu0 %2532
        %2534 = vrot.lane.b32.xlu0 %v2511, 1
        %v2535 = vpop.permute.xlu0 %2534
        %v2544 = vsub.f32 %v2466, %v2521
        %v2545 = vsub.f32 %v2471, %v2523
        %v2546 = vsub.f32 %v2476, %v2525
        %v2547 = vsub.f32 %v2481, %v2527
        %v2548 = vsub.f32 %v2486, %v2529
        %v2549 = vsub.f32 %v2491, %v2531
        %v2550 = vsub.f32 %v2496, %v2533
        %v2551 = vsub.f32 %v2501, %v2535
        %v2552 = vadd.f32 %v2544, 1e-06
        %v2553 = vadd.f32 %v2545, 1e-06
        %v2554 = vadd.f32 %v2546, 1e-06
        %v2555 = vadd.f32 %v2547, 1e-06
        %v2556 = vadd.f32 %v2548, 1e-06
        %v2557 = vadd.f32 %v2549, 1e-06
        %v2558 = vadd.f32 %v2550, 1e-06
        %v2559 = vadd.f32 %v2551, 1e-06
        %v2560 = vrsqrt.pop %v2552
        %v2561 = vrsqrt.pop %v2553
        %v2562 = vrsqrt.pop %v2554
        %v2563 = vrsqrt.pop %v2555
        %v2564 = vrsqrt.pop %v2556
        %v2565 = vrsqrt.pop %v2557
        %v2566 = vrsqrt.pop %v2558
        %v2567 = vrsqrt.pop %v2559
        %2569 = vset.pattern.permute.xlu0 0
        %2570 = vperm.xlu0 %2569, %v2466
        %v2571 = vpop.permute.xlu0 %2570
        %2574 = vset.pattern.permute.xlu0 0
        %2575 = vperm.xlu0 %2574, %v2471
        %v2576 = vpop.permute.xlu0 %2575
        %2579 = vset.pattern.permute.xlu0 0
        %2580 = vperm.xlu0 %2579, %v2476
        %v2581 = vpop.permute.xlu0 %2580
        %2584 = vset.pattern.permute.xlu0 0
        %2585 = vperm.xlu0 %2584, %v2481
        %v2586 = vpop.permute.xlu0 %2585
        %2589 = vset.pattern.permute.xlu0 0
        %2590 = vperm.xlu0 %2589, %v2486
        %v2591 = vpop.permute.xlu0 %2590
        %2594 = vset.pattern.permute.xlu0 0
        %2595 = vperm.xlu0 %2594, %v2491
        %v2596 = vpop.permute.xlu0 %2595
        %2599 = vset.pattern.permute.xlu0 0
        %2600 = vperm.xlu0 %2599, %v2496
        %v2601 = vpop.permute.xlu0 %2600
        %2604 = vset.pattern.permute.xlu0 0
        %2605 = vperm.xlu0 %2604, %v2501
        %v2606 = vpop.permute.xlu0 %2605
        %v2608 = vsub.f32 %v2279, %v2571
        %v2609 = vsub.f32 %v2280, %v2576
        %v2610 = vsub.f32 %v2281, %v2581
        %v2611 = vsub.f32 %v2282, %v2586
        %v2612 = vsub.f32 %v2283, %v2591
        %v2613 = vsub.f32 %v2284, %v2596
        %v2614 = vsub.f32 %v2285, %v2601
        %v2615 = vsub.f32 %v2286, %v2606
        %2617 = vset.pattern.permute.xlu0 1
        %2618 = vperm.xlu0 %2617, %v2560
        %v2619 = vpop.permute.xlu0 %2618
        %2622 = vset.pattern.permute.xlu0 1
        %2623 = vperm.xlu0 %2622, %v2561
        %v2624 = vpop.permute.xlu0 %2623
        %2627 = vset.pattern.permute.xlu0 1
        %2628 = vperm.xlu0 %2627, %v2562
        %v2629 = vpop.permute.xlu0 %2628
        %2632 = vset.pattern.permute.xlu0 1
        %2633 = vperm.xlu0 %2632, %v2563
        %v2634 = vpop.permute.xlu0 %2633
        %2637 = vset.pattern.permute.xlu0 1
        %2638 = vperm.xlu0 %2637, %v2564
        %v2639 = vpop.permute.xlu0 %2638
        %2642 = vset.pattern.permute.xlu0 1
        %2643 = vperm.xlu0 %2642, %v2565
        %v2644 = vpop.permute.xlu0 %2643
        %2647 = vset.pattern.permute.xlu0 1
        %2648 = vperm.xlu0 %2647, %v2566
        %v2649 = vpop.permute.xlu0 %2648
        %2652 = vset.pattern.permute.xlu0 1
        %2653 = vperm.xlu0 %2652, %v2567
        %v2654 = vpop.permute.xlu0 %2653
        %v2656 = vmul.f32 %v2608, %v2619
        %v2657 = vmul.f32 %v2609, %v2624
        %v2658 = vmul.f32 %v2610, %v2629
        %v2659 = vmul.f32 %v2611, %v2634
        %v2660 = vmul.f32 %v2612, %v2639
        %v2661 = vmul.f32 %v2613, %v2644
        %v2662 = vmul.f32 %v2614, %v2649
        %v2663 = vmul.f32 %v2615, %v2654
        %v2664 = vld [vmem:[%s11] sm:$0xff]
        %v2665 = vld [vmem:[%s11 + $0x8] sm:$0xff]
        %v2666 = vld [vmem:[%s11 + $0x10] sm:$0xff]
        %v2667 = vld [vmem:[%s11 + $0x18] sm:$0xff]
        %v2668 = vld [vmem:[%s11 + $0x20] sm:$0xff]
        %v2669 = vld [vmem:[%s11 + $0x28] sm:$0xff]
        %v2670 = vld [vmem:[%s11 + $0x30] sm:$0xff]
        %v2671 = vld [vmem:[%s11 + $0x38] sm:$0xff]
        %2673 = vset.pattern.permute.xlu0 0
        %2674 = vperm.xlu0 %2673, %v2664
        %v2675 = vpop.permute.xlu0 %2674
        %2678 = vset.pattern.permute.xlu0 0
        %2679 = vperm.xlu0 %2678, %v2665
        %v2680 = vpop.permute.xlu0 %2679
        %2683 = vset.pattern.permute.xlu0 0
        %2684 = vperm.xlu0 %2683, %v2666
        %v2685 = vpop.permute.xlu0 %2684
        %2688 = vset.pattern.permute.xlu0 0
        %2689 = vperm.xlu0 %2688, %v2667
        %v2690 = vpop.permute.xlu0 %2689
        %2693 = vset.pattern.permute.xlu0 0
        %2694 = vperm.xlu0 %2693, %v2668
        %v2695 = vpop.permute.xlu0 %2694
        %2698 = vset.pattern.permute.xlu0 0
        %2699 = vperm.xlu0 %2698, %v2669
        %v2700 = vpop.permute.xlu0 %2699
        %2703 = vset.pattern.permute.xlu0 0
        %2704 = vperm.xlu0 %2703, %v2670
        %v2705 = vpop.permute.xlu0 %2704
        %2708 = vset.pattern.permute.xlu0 0
        %2709 = vperm.xlu0 %2708, %v2671
        %v2710 = vpop.permute.xlu0 %2709
        %v2712 = vmul.f32 %v2656, %v2675
        %v2713 = vmul.f32 %v2657, %v2680
        %v2714 = vmul.f32 %v2658, %v2685
        %v2715 = vmul.f32 %v2659, %v2690
        %v2716 = vmul.f32 %v2660, %v2695
        %v2717 = vmul.f32 %v2661, %v2700
        %v2718 = vmul.f32 %v2662, %v2705
        %v2719 = vmul.f32 %v2663, %v2710
        %v2720 = vld [vmem:[%s12] sm:$0xff]
        %v2721 = vld [vmem:[%s12 + $0x8] sm:$0xff]
        %v2722 = vld [vmem:[%s12 + $0x10] sm:$0xff]
        %v2723 = vld [vmem:[%s12 + $0x18] sm:$0xff]
        %v2724 = vld [vmem:[%s12 + $0x20] sm:$0xff]
        %v2725 = vld [vmem:[%s12 + $0x28] sm:$0xff]
        %v2726 = vld [vmem:[%s12 + $0x30] sm:$0xff]
        %v2727 = vld [vmem:[%s12 + $0x38] sm:$0xff]
        %2729 = vset.pattern.permute.xlu0 0
        %2730 = vperm.xlu0 %2729, %v2720
        %v2731 = vpop.permute.xlu0 %2730
        %2734 = vset.pattern.permute.xlu0 0
        %2735 = vperm.xlu0 %2734, %v2721
        %v2736 = vpop.permute.xlu0 %2735
        %2739 = vset.pattern.permute.xlu0 0
        %2740 = vperm.xlu0 %2739, %v2722
        %v2741 = vpop.permute.xlu0 %2740
        %2744 = vset.pattern.permute.xlu0 0
        %2745 = vperm.xlu0 %2744, %v2723
        %v2746 = vpop.permute.xlu0 %2745
        %2749 = vset.pattern.permute.xlu0 0
        %2750 = vperm.xlu0 %2749, %v2724
        %v2751 = vpop.permute.xlu0 %2750
        %2754 = vset.pattern.permute.xlu0 0
        %2755 = vperm.xlu0 %2754, %v2725
        %v2756 = vpop.permute.xlu0 %2755
        %2759 = vset.pattern.permute.xlu0 0
        %2760 = vperm.xlu0 %2759, %v2726
        %v2761 = vpop.permute.xlu0 %2760
        %2764 = vset.pattern.permute.xlu0 0
        %2765 = vperm.xlu0 %2764, %v2727
        %v2766 = vpop.permute.xlu0 %2765
        %v2768 = vadd.f32 %v2712, %v2731
        %v2769 = vadd.f32 %v2713, %v2736
        %v2770 = vadd.f32 %v2714, %v2741
        %v2771 = vadd.f32 %v2715, %v2746
        %v2772 = vadd.f32 %v2716, %v2751
        %v2773 = vadd.f32 %v2717, %v2756
        %v2774 = vadd.f32 %v2718, %v2761
        %v2775 = vadd.f32 %v2719, %v2766
        %v2776 = vsub.f32 0.0, %v2768
        %v2777 = vsub.f32 0.0, %v2769
        %v2778 = vsub.f32 0.0, %v2770
        %v2779 = vsub.f32 0.0, %v2771
        %v2780 = vsub.f32 0.0, %v2772
        %v2781 = vsub.f32 0.0, %v2773
        %v2782 = vsub.f32 0.0, %v2774
        %v2783 = vsub.f32 0.0, %v2775
        %v2784 = vmul.f32 %v2776, 1.442695
        %v2785 = vpow.pop %v2784
        %v2786 = vmul.f32 %v2777, 1.442695
        %v2787 = vpow.pop %v2786
        %v2788 = vmul.f32 %v2778, 1.442695
        %v2789 = vpow.pop %v2788
        %v2790 = vmul.f32 %v2779, 1.442695
        %v2791 = vpow.pop %v2790
        %v2792 = vmul.f32 %v2780, 1.442695
        %v2793 = vpow.pop %v2792
        %v2794 = vmul.f32 %v2781, 1.442695
        %v2795 = vpow.pop %v2794
        %v2796 = vmul.f32 %v2782, 1.442695
        %v2797 = vpow.pop %v2796
        %v2798 = vmul.f32 %v2783, 1.442695
        %v2799 = vpow.pop %v2798
        %v2800 = vadd.f32 %v2785, 1.0
        %v2801 = vadd.f32 %v2787, 1.0
        %v2802 = vadd.f32 %v2789, 1.0
        %v2803 = vadd.f32 %v2791, 1.0
        %v2804 = vadd.f32 %v2793, 1.0
        %v2805 = vadd.f32 %v2795, 1.0
        %v2806 = vadd.f32 %v2797, 1.0
        %v2807 = vadd.f32 %v2799, 1.0
        %v2808 = vrcp.pop %v2800
        %v2809 = vmul.f32 1.0, %v2808
        %v2810 = vrcp.pop %v2801
        %v2811 = vmul.f32 1.0, %v2810
        %v2812 = vrcp.pop %v2802
        %v2813 = vmul.f32 1.0, %v2812
        %v2814 = vrcp.pop %v2803
        %v2815 = vmul.f32 1.0, %v2814
        %v2816 = vrcp.pop %v2804
        %v2817 = vmul.f32 1.0, %v2816
        %v2818 = vrcp.pop %v2805
        %v2819 = vmul.f32 1.0, %v2818
        %v2820 = vrcp.pop %v2806
        %v2821 = vmul.f32 1.0, %v2820
        %v2822 = vrcp.pop %v2807
        %v2823 = vmul.f32 1.0, %v2822
        %v2824 = vmul.f32 %v2768, %v2809
        %v2825 = vmul.f32 %v2769, %v2811
        %v2826 = vmul.f32 %v2770, %v2813
        %v2827 = vmul.f32 %v2771, %v2815
        %v2828 = vmul.f32 %v2772, %v2817
        %v2829 = vmul.f32 %v2773, %v2819
        %v2830 = vmul.f32 %v2774, %v2821
        %v2831 = vmul.f32 %v2775, %v2823
        %v2832 = vpack.c.bf16 %v2825, %v2824
        %v2833 = vpack.c.bf16 %v2827, %v2826
        %v2834 = vpack.c.bf16 %v2829, %v2828
        %v2835 = vpack.c.bf16 %v2831, %v2830
        %2840 = vrot.lane.b32.xlu0 %v2832, 73
        %v2841 = vpop.permute.xlu0 %2840
        %2842 = vrot.lane.b32.xlu0 %v2833, 73
        %v2843 = vpop.permute.xlu0 %2842
        %2844 = vrot.lane.b32.xlu0 %v2834, 73
        %v2845 = vpop.permute.xlu0 %2844
        %2846 = vrot.lane.b32.xlu0 %v2835, 73
        %v2847 = vpop.permute.xlu0 %2846
        %2848 = vrot.lane.b32.xlu0 %v2832, 9
        %v2849 = vpop.permute.xlu0 %2848
        %2850 = vrot.lane.b32.xlu0 %v2833, 9
        %v2851 = vpop.permute.xlu0 %2850
        %2852 = vrot.lane.b32.xlu0 %v2834, 9
        %v2853 = vpop.permute.xlu0 %2852
        %2854 = vrot.lane.b32.xlu0 %v2835, 9
        %v2855 = vpop.permute.xlu0 %2854
        %v2858 = vsel %vm889, %v2841, %v2849
        %v2862 = vsel %vm889, %v2843, %v2851
        %v2866 = vsel %vm889, %v2845, %v2853
        %v2870 = vsel %vm889, %v2847, %v2855
        %v2872 = vmul.bf16 %v2858, %v905
        %v2873 = vmul.bf16 %v2862, %v905
        %v2874 = vmul.bf16 %v2866, %v905
        %v2875 = vmul.bf16 %v2870, %v905
        %v2876 = vld [vmem:[%s13] sm:$0xf]
        %v2877 = vld [vmem:[%s13 + $0x4] sm:$0xf]
        %v2878 = vld [vmem:[%s13 + $0x8] sm:$0xf]
        %v2879 = vld [vmem:[%s13 + $0xc] sm:$0xf]
        %v2880 = vld [vmem:[%s13 + $0x10] sm:$0xf]
        %v2881 = vld [vmem:[%s13 + $0x14] sm:$0xf]
        %v2882 = vld [vmem:[%s13 + $0x18] sm:$0xf]
        %v2883 = vld [vmem:[%s13 + $0x1c] sm:$0xf]
        %2884 = vrot.lane.b32.xlu0 %v2832, 72
        %v2885 = vpop.permute.xlu0 %2884
        %2886 = vrot.lane.b32.xlu0 %v2833, 72
        %v2887 = vpop.permute.xlu0 %2886
        %2888 = vrot.lane.b32.xlu0 %v2834, 72
        %v2889 = vpop.permute.xlu0 %2888
        %2890 = vrot.lane.b32.xlu0 %v2835, 72
        %v2891 = vpop.permute.xlu0 %2890
        %2892 = vrot.lane.b32.xlu0 %v2832, 8
        %v2893 = vpop.permute.xlu0 %2892
        %2894 = vrot.lane.b32.xlu0 %v2833, 8
        %v2895 = vpop.permute.xlu0 %2894
        %2896 = vrot.lane.b32.xlu0 %v2834, 8
        %v2897 = vpop.permute.xlu0 %2896
        %2898 = vrot.lane.b32.xlu0 %v2835, 8
        %v2899 = vpop.permute.xlu0 %2898
        %v2902 = vsel %vm924, %v2885, %v2893
        %v2906 = vsel %vm924, %v2887, %v2895
        %v2910 = vsel %vm924, %v2889, %v2897
        %v2914 = vsel %vm924, %v2891, %v2899
        %v2916 = vmul.bf16 %v2902, %v941
        %v2917 = vmul.bf16 %v2906, %v941
        %v2918 = vmul.bf16 %v2910, %v941
        %v2919 = vmul.bf16 %v2914, %v941
        %s2920 = scalar_lea.vmem %s13, 32
        %v2921 = vld [vmem:[%s2920] sm:$0xf]
        %v2922 = vld [vmem:[%s2920 + $0x4] sm:$0xf]
        %v2923 = vld [vmem:[%s2920 + $0x8] sm:$0xf]
        %v2924 = vld [vmem:[%s2920 + $0xc] sm:$0xf]
        %v2925 = vld [vmem:[%s2920 + $0x10] sm:$0xf]
        %v2926 = vld [vmem:[%s2920 + $0x14] sm:$0xf]
        %v2927 = vld [vmem:[%s2920 + $0x18] sm:$0xf]
        %v2928 = vld [vmem:[%s2920 + $0x1c] sm:$0xf]
        %v2937 = vunpack.c.l.b16 %v2921
        %v2938 = vunpack.c.l.b16 %v2922
        %v2939 = vunpack.c.l.b16 %v2923
        %v2940 = vunpack.c.l.b16 %v2924
        %v2941 = vunpack.c.l.b16 %v2925
        %v2942 = vunpack.c.l.b16 %v2926
        %v2943 = vunpack.c.l.b16 %v2927
        %v2944 = vunpack.c.l.b16 %v2928
        %v2945 = vpack.c.b16 %v2938, %v2937
        %v2946 = vpack.c.b16 %v2940, %v2939
        %v2947 = vpack.c.b16 %v2942, %v2941
        %v2948 = vpack.c.b16 %v2944, %v2943
        %v2950 = vsel %vm566, %v2945, 0
        %v2953 = vsel %vm566, %v2946, 0
        %v2956 = vsel %vm566, %v2947, 0
        %v2959 = vsel %vm566, %v2948, 0
        %2961 = vmatprep.subr.bf16.mxu0 0
        %2962 = vmatpush1.bf16.msra.mxu0 %v2916
        %2963 = vmatprep.subr.bf16.mxu0 0
        %2964 = vmatpush1.bf16.msra.mxu0 %v2917
        %2965 = vmatprep.subr.bf16.mxu0 0
        %2966 = vmatpush1.bf16.msra.mxu0 %v2918
        %2967 = vmatprep.subr.bf16.mxu0 0
        %2968 = vmatpush1.bf16.msra.mxu0 %v2919
        %2969 = vmatprep.subr.bf16.mxu0 0
        %2970 = vmatpush1.bf16.msra.mxu0 0
        %2971 = vmatprep.subr.bf16.mxu0 0
        %2972 = vmatpush1.bf16.msra.mxu0 0
        %2973 = vmatprep.subr.bf16.mxu0 0
        %2974 = vmatpush1.bf16.msra.mxu0 0
        %2975 = vmatprep.subr.bf16.mxu0 0
        %2976 = vmatpush1.bf16.msra.mxu0 0
        %2977 = vmatprep.subr.bf16.mxu0 0
        %2978 = vmatpush1.bf16.msra.mxu0 0
        %2979 = vmatprep.subr.bf16.mxu0 0
        %2980 = vmatpush1.bf16.msra.mxu0 0
        %2981 = vmatprep.subr.bf16.mxu0 0
        %2982 = vmatpush1.bf16.msra.mxu0 0
        %2983 = vmatprep.subr.bf16.mxu0 0
        %2984 = vmatpush1.bf16.msra.mxu0 0
        %2985 = vmatprep.subr.bf16.mxu0 0
        %2986 = vmatpush1.bf16.msra.mxu0 0
        %2987 = vmatprep.subr.bf16.mxu0 0
        %2988 = vmatpush1.bf16.msra.mxu0 0
        %2989 = vmatprep.subr.bf16.mxu0 0
        %2990 = vmatpush1.bf16.msra.mxu0 0
        %2991 = vmatprep.subr.bf16.mxu0 0
        %2992 = vmatpush1.bf16.msra.mxu0 0
        %2993 = vmatprep.mubr.bf16.mxu0 0
        %2994 = vmatmul.mubr.bf16.gmra.mrb[0].mxu0 %v2950
        %v2995 = vpop.f32.mrb[0].mxu0
        %v2996 = vadd.f32 0.0, %v2995
        %v2997 = vpop.f32.mrb[0].mxu0
        %v2998 = vpop.f32.mrb[0].mxu0
        %v2999 = vadd.f32 0.0, %v2998
        %v3000 = vpop.f32.mrb[0].mxu0
        %3001 = vmatprep.mubr.bf16.mxu0 0
        %3002 = vmatmul.mubr.bf16.gmra.mrb[0].mxu0 %v2953
        %v3003 = vpop.f32.mrb[0].mxu0
        %v3004 = vadd.f32 0.0, %v3003
        %v3005 = vpop.f32.mrb[0].mxu0
        %v3006 = vpop.f32.mrb[0].mxu0
        %v3007 = vadd.f32 0.0, %v3006
        %v3008 = vpop.f32.mrb[0].mxu0
        %3009 = vmatprep.mubr.bf16.mxu0 0
        %3010 = vmatmul.mubr.bf16.gmra.mrb[0].mxu0 %v2956
        %v3011 = vpop.f32.mrb[0].mxu0
        %v3012 = vadd.f32 0.0, %v3011
        %v3013 = vpop.f32.mrb[0].mxu0
        %v3014 = vpop.f32.mrb[0].mxu0
        %v3015 = vadd.f32 0.0, %v3014
        %v3016 = vpop.f32.mrb[0].mxu0
        %3017 = vmatprep.mubr.bf16.mxu0 0
        %3018 = vmatmul.mubr.bf16.gmra.mrb[0].mxu0 %v2959
        %v3019 = vpop.f32.mrb[0].mxu0
        %v3020 = vadd.f32 0.0, %v3019
        %v3021 = vpop.f32.mrb[0].mxu0
        %v3022 = vpop.f32.mrb[0].mxu0
        %v3023 = vadd.f32 0.0, %v3022
        %v3024 = vpop.f32.mrb[0].mxu0
        %3025 = vdwg.mxu0
        %v3034 = vunpack.c.l.b16 %v2876
        %v3035 = vunpack.c.l.b16 %v2877
        %v3036 = vunpack.c.l.b16 %v2878
        %v3037 = vunpack.c.l.b16 %v2879
        %v3038 = vunpack.c.l.b16 %v2880
        %v3039 = vunpack.c.l.b16 %v2881
        %v3040 = vunpack.c.l.b16 %v2882
        %v3041 = vunpack.c.l.b16 %v2883
        %v3042 = vpack.c.b16 %v3035, %v3034
        %v3043 = vpack.c.b16 %v3037, %v3036
        %v3044 = vpack.c.b16 %v3039, %v3038
        %v3045 = vpack.c.b16 %v3041, %v3040
        %v3047 = vsel %vm566, %v3042, 0
        %v3050 = vsel %vm566, %v3043, 0
        %v3053 = vsel %vm566, %v3044, 0
        %v3056 = vsel %vm566, %v3045, 0
        %3058 = vmatprep.subr.bf16.mxu0 0
        %3059 = vmatpush1.bf16.msra.mxu0 %v2872
        %3060 = vmatprep.subr.bf16.mxu0 0
        %3061 = vmatpush1.bf16.msra.mxu0 %v2873
        %3062 = vmatprep.subr.bf16.mxu0 0
        %3063 = vmatpush1.bf16.msra.mxu0 %v2874
        %3064 = vmatprep.subr.bf16.mxu0 0
        %3065 = vmatpush1.bf16.msra.mxu0 %v2875
        %3066 = vmatprep.subr.bf16.mxu0 0
        %3067 = vmatpush1.bf16.msra.mxu0 0
        %3068 = vmatprep.subr.bf16.mxu0 0
        %3069 = vmatpush1.bf16.msra.mxu0 0
        %3070 = vmatprep.subr.bf16.mxu0 0
        %3071 = vmatpush1.bf16.msra.mxu0 0
        %3072 = vmatprep.subr.bf16.mxu0 0
        %3073 = vmatpush1.bf16.msra.mxu0 0
        %3074 = vmatprep.subr.bf16.mxu0 0
        %3075 = vmatpush1.bf16.msra.mxu0 0
        %3076 = vmatprep.subr.bf16.mxu0 0
        %3077 = vmatpush1.bf16.msra.mxu0 0
        %3078 = vmatprep.subr.bf16.mxu0 0
        %3079 = vmatpush1.bf16.msra.mxu0 0
        %3080 = vmatprep.subr.bf16.mxu0 0
        %3081 = vmatpush1.bf16.msra.mxu0 0
        %3082 = vmatprep.subr.bf16.mxu0 0
        %3083 = vmatpush1.bf16.msra.mxu0 0
        %3084 = vmatprep.subr.bf16.mxu0 0
        %3085 = vmatpush1.bf16.msra.mxu0 0
        %3086 = vmatprep.subr.bf16.mxu0 0
        %3087 = vmatpush1.bf16.msra.mxu0 0
        %3088 = vmatprep.subr.bf16.mxu0 0
        %3089 = vmatpush1.bf16.msra.mxu0 0
        %3090 = vmatprep.mubr.bf16.mxu0 0
        %3091 = vmatmul.mubr.bf16.gmra.mrb[0].mxu0 %v3047
        %v3092 = vpop.f32.mrb[0].mxu0
        %v3093 = vadd.f32 %v2996, %v3092
        %v3094 = vpop.f32.mrb[0].mxu0
        %v3095 = vpop.f32.mrb[0].mxu0
        %v3096 = vadd.f32 %v2999, %v3095
        %v3097 = vpop.f32.mrb[0].mxu0
        %3098 = vmatprep.mubr.bf16.mxu0 0
        %3099 = vmatmul.mubr.bf16.gmra.mrb[0].mxu0 %v3050
        %v3100 = vpop.f32.mrb[0].mxu0
        %v3101 = vadd.f32 %v3004, %v3100
        %v3102 = vpop.f32.mrb[0].mxu0
        %v3103 = vpop.f32.mrb[0].mxu0
        %v3104 = vadd.f32 %v3007, %v3103
        %v3105 = vpop.f32.mrb[0].mxu0
        %3106 = vmatprep.mubr.bf16.mxu0 0
        %3107 = vmatmul.mubr.bf16.gmra.mrb[0].mxu0 %v3053
        %v3108 = vpop.f32.mrb[0].mxu0
        %v3109 = vadd.f32 %v3012, %v3108
        %v3110 = vpop.f32.mrb[0].mxu0
        %v3111 = vpop.f32.mrb[0].mxu0
        %v3112 = vadd.f32 %v3015, %v3111
        %v3113 = vpop.f32.mrb[0].mxu0
        %3114 = vmatprep.mubr.bf16.mxu0 0
        %3115 = vmatmul.mubr.bf16.gmra.mrb[0].mxu0 %v3056
        %v3116 = vpop.f32.mrb[0].mxu0
        %v3117 = vadd.f32 %v3020, %v3116
        %v3118 = vpop.f32.mrb[0].mxu0
        %v3119 = vpop.f32.mrb[0].mxu0
        %v3120 = vadd.f32 %v3023, %v3119
        %v3121 = vpop.f32.mrb[0].mxu0
        %3122 = vdwg.mxu0
        %3123 = vrot.lane.b32.xlu0 %v2832, 71
        %v3124 = vpop.permute.xlu0 %3123
        %3125 = vrot.lane.b32.xlu0 %v2833, 71
        %v3126 = vpop.permute.xlu0 %3125
        %3127 = vrot.lane.b32.xlu0 %v2834, 71
        %v3128 = vpop.permute.xlu0 %3127
        %3129 = vrot.lane.b32.xlu0 %v2835, 71
        %v3130 = vpop.permute.xlu0 %3129
        %3131 = vrot.lane.b32.xlu0 %v2832, 7
        %v3132 = vpop.permute.xlu0 %3131
        %3133 = vrot.lane.b32.xlu0 %v2833, 7
        %v3134 = vpop.permute.xlu0 %3133
        %3135 = vrot.lane.b32.xlu0 %v2834, 7
        %v3136 = vpop.permute.xlu0 %3135
        %3137 = vrot.lane.b32.xlu0 %v2835, 7
        %v3138 = vpop.permute.xlu0 %3137
        %v3141 = vsel %vm1155, %v3124, %v3132
        %v3145 = vsel %vm1155, %v3126, %v3134
        %v3149 = vsel %vm1155, %v3128, %v3136
        %v3153 = vsel %vm1155, %v3130, %v3138
        %v3155 = vmul.bf16 %v3141, %v1172
        %v3156 = vmul.bf16 %v3145, %v1172
        %v3157 = vmul.bf16 %v3149, %v1172
        %v3158 = vmul.bf16 %v3153, %v1172
        %s3159 = scalar_lea.vmem %s13, 64
        %v3160 = vld [vmem:[%s3159] sm:$0xf]
        %v3161 = vld [vmem:[%s3159 + $0x4] sm:$0xf]
        %v3162 = vld [vmem:[%s3159 + $0x8] sm:$0xf]
        %v3163 = vld [vmem:[%s3159 + $0xc] sm:$0xf]
        %v3164 = vld [vmem:[%s3159 + $0x10] sm:$0xf]
        %v3165 = vld [vmem:[%s3159 + $0x14] sm:$0xf]
        %v3166 = vld [vmem:[%s3159 + $0x18] sm:$0xf]
        %v3167 = vld [vmem:[%s3159 + $0x1c] sm:$0xf]
        %v3176 = vunpack.c.l.b16 %v3160
        %v3177 = vunpack.c.l.b16 %v3161
        %v3178 = vunpack.c.l.b16 %v3162
        %v3179 = vunpack.c.l.b16 %v3163
        %v3180 = vunpack.c.l.b16 %v3164
        %v3181 = vunpack.c.l.b16 %v3165
        %v3182 = vunpack.c.l.b16 %v3166
        %v3183 = vunpack.c.l.b16 %v3167
        %v3184 = vpack.c.b16 %v3177, %v3176
        %v3185 = vpack.c.b16 %v3179, %v3178
        %v3186 = vpack.c.b16 %v3181, %v3180
        %v3187 = vpack.c.b16 %v3183, %v3182
        %v3189 = vsel %vm566, %v3184, 0
        %v3192 = vsel %vm566, %v3185, 0
        %v3195 = vsel %vm566, %v3186, 0
        %v3198 = vsel %vm566, %v3187, 0
        %3200 = vmatprep.subr.bf16.mxu0 0
        %3201 = vmatpush1.bf16.msra.mxu0 %v3155
        %3202 = vmatprep.subr.bf16.mxu0 0
        %3203 = vmatpush1.bf16.msra.mxu0 %v3156
        %3204 = vmatprep.subr.bf16.mxu0 0
        %3205 = vmatpush1.bf16.msra.mxu0 %v3157
        %3206 = vmatprep.subr.bf16.mxu0 0
        %3207 = vmatpush1.bf16.msra.mxu0 %v3158
        %3208 = vmatprep.subr.bf16.mxu0 0
        %3209 = vmatpush1.bf16.msra.mxu0 0
        %3210 = vmatprep.subr.bf16.mxu0 0
        %3211 = vmatpush1.bf16.msra.mxu0 0
        %3212 = vmatprep.subr.bf16.mxu0 0
        %3213 = vmatpush1.bf16.msra.mxu0 0
        %3214 = vmatprep.subr.bf16.mxu0 0
        %3215 = vmatpush1.bf16.msra.mxu0 0
        %3216 = vmatprep.subr.bf16.mxu0 0
        %3217 = vmatpush1.bf16.msra.mxu0 0
        %3218 = vmatprep.subr.bf16.mxu0 0
        %3219 = vmatpush1.bf16.msra.mxu0 0
        %3220 = vmatprep.subr.bf16.mxu0 0
        %3221 = vmatpush1.bf16.msra.mxu0 0
        %3222 = vmatprep.subr.bf16.mxu0 0
        %3223 = vmatpush1.bf16.msra.mxu0 0
        %3224 = vmatprep.subr.bf16.mxu0 0
        %3225 = vmatpush1.bf16.msra.mxu0 0
        %3226 = vmatprep.subr.bf16.mxu0 0
        %3227 = vmatpush1.bf16.msra.mxu0 0
        %3228 = vmatprep.subr.bf16.mxu0 0
        %3229 = vmatpush1.bf16.msra.mxu0 0
        %3230 = vmatprep.subr.bf16.mxu0 0
        %3231 = vmatpush1.bf16.msra.mxu0 0
        %3232 = vmatprep.mubr.bf16.mxu0 0
        %3233 = vmatmul.mubr.bf16.gmra.mrb[0].mxu0 %v3189
        %v3234 = vpop.f32.mrb[0].mxu0
        %v3235 = vadd.f32 0.0, %v3234
        %v3236 = vpop.f32.mrb[0].mxu0
        %v3237 = vpop.f32.mrb[0].mxu0
        %v3238 = vadd.f32 0.0, %v3237
        %v3239 = vpop.f32.mrb[0].mxu0
        %3240 = vmatprep.mubr.bf16.mxu0 0
        %3241 = vmatmul.mubr.bf16.gmra.mrb[0].mxu0 %v3192
        %v3242 = vpop.f32.mrb[0].mxu0
        %v3243 = vadd.f32 0.0, %v3242
        %v3244 = vpop.f32.mrb[0].mxu0
        %v3245 = vpop.f32.mrb[0].mxu0
        %v3246 = vadd.f32 0.0, %v3245
        %v3247 = vpop.f32.mrb[0].mxu0
        %3248 = vmatprep.mubr.bf16.mxu0 0
        %3249 = vmatmul.mubr.bf16.gmra.mrb[0].mxu0 %v3195
        %v3250 = vpop.f32.mrb[0].mxu0
        %v3251 = vadd.f32 0.0, %v3250
        %v3252 = vpop.f32.mrb[0].mxu0
        %v3253 = vpop.f32.mrb[0].mxu0
        %v3254 = vadd.f32 0.0, %v3253
        %v3255 = vpop.f32.mrb[0].mxu0
        %3256 = vmatprep.mubr.bf16.mxu0 0
        %3257 = vmatmul.mubr.bf16.gmra.mrb[0].mxu0 %v3198
        %v3258 = vpop.f32.mrb[0].mxu0
        %v3259 = vadd.f32 0.0, %v3258
        %v3260 = vpop.f32.mrb[0].mxu0
        %v3261 = vpop.f32.mrb[0].mxu0
        %v3262 = vadd.f32 0.0, %v3261
        %v3263 = vpop.f32.mrb[0].mxu0
        %3264 = vdwg.mxu0
        %v3265 = vadd.f32 %v3093, %v3235
        %v3266 = vadd.f32 %v3096, %v3238
        %v3267 = vadd.f32 %v3101, %v3243
        %v3268 = vadd.f32 %v3104, %v3246
        %v3269 = vadd.f32 %v3109, %v3251
        %v3270 = vadd.f32 %v3112, %v3254
        %v3271 = vadd.f32 %v3117, %v3259
        %v3272 = vadd.f32 %v3120, %v3262
        %3273 = vrot.lane.b32.xlu0 %v2832, 65
        %v3274 = vpop.permute.xlu0 %3273
        %3275 = vrot.lane.b32.xlu0 %v2833, 65
        %v3276 = vpop.permute.xlu0 %3275
        %3277 = vrot.lane.b32.xlu0 %v2834, 65
        %v3278 = vpop.permute.xlu0 %3277
        %3279 = vrot.lane.b32.xlu0 %v2835, 65
        %v3280 = vpop.permute.xlu0 %3279
        %3281 = vrot.lane.b32.xlu0 %v2832, 1
        %v3282 = vpop.permute.xlu0 %3281
        %3283 = vrot.lane.b32.xlu0 %v2833, 1
        %v3284 = vpop.permute.xlu0 %3283
        %3285 = vrot.lane.b32.xlu0 %v2834, 1
        %v3286 = vpop.permute.xlu0 %3285
        %3287 = vrot.lane.b32.xlu0 %v2835, 1
        %v3288 = vpop.permute.xlu0 %3287
        %v3291 = vsel %vm1297, %v3274, %v3282
        %v3295 = vsel %vm1297, %v3276, %v3284
        %v3299 = vsel %vm1297, %v3278, %v3286
        %v3303 = vsel %vm1297, %v3280, %v3288
        %v3305 = vmul.bf16 %v3291, %v1314
        %v3306 = vmul.bf16 %v3295, %v1314
        %v3307 = vmul.bf16 %v3299, %v1314
        %v3308 = vmul.bf16 %v3303, %v1314
        %s3309 = scalar_lea.vmem %s13, 96
        %v3310 = vld [vmem:[%s3309] sm:$0xf]
        %v3311 = vld [vmem:[%s3309 + $0x4] sm:$0xf]
        %v3312 = vld [vmem:[%s3309 + $0x8] sm:$0xf]
        %v3313 = vld [vmem:[%s3309 + $0xc] sm:$0xf]
        %v3314 = vld [vmem:[%s3309 + $0x10] sm:$0xf]
        %v3315 = vld [vmem:[%s3309 + $0x14] sm:$0xf]
        %v3316 = vld [vmem:[%s3309 + $0x18] sm:$0xf]
        %v3317 = vld [vmem:[%s3309 + $0x1c] sm:$0xf]
        %v3326 = vunpack.c.l.b16 %v3310
        %v3327 = vunpack.c.l.b16 %v3311
        %v3328 = vunpack.c.l.b16 %v3312
        %v3329 = vunpack.c.l.b16 %v3313
        %v3330 = vunpack.c.l.b16 %v3314
        %v3331 = vunpack.c.l.b16 %v3315
        %v3332 = vunpack.c.l.b16 %v3316
        %v3333 = vunpack.c.l.b16 %v3317
        %v3334 = vpack.c.b16 %v3327, %v3326
        %v3335 = vpack.c.b16 %v3329, %v3328
        %v3336 = vpack.c.b16 %v3331, %v3330
        %v3337 = vpack.c.b16 %v3333, %v3332
        %v3339 = vsel %vm566, %v3334, 0
        %v3342 = vsel %vm566, %v3335, 0
        %v3345 = vsel %vm566, %v3336, 0
        %v3348 = vsel %vm566, %v3337, 0
        %3350 = vmatprep.subr.bf16.mxu0 0
        %3351 = vmatpush1.bf16.msra.mxu0 %v3305
        %3352 = vmatprep.subr.bf16.mxu0 0
        %3353 = vmatpush1.bf16.msra.mxu0 %v3306
        %3354 = vmatprep.subr.bf16.mxu0 0
        %3355 = vmatpush1.bf16.msra.mxu0 %v3307
        %3356 = vmatprep.subr.bf16.mxu0 0
        %3357 = vmatpush1.bf16.msra.mxu0 %v3308
        %3358 = vmatprep.subr.bf16.mxu0 0
        %3359 = vmatpush1.bf16.msra.mxu0 0
        %3360 = vmatprep.subr.bf16.mxu0 0
        %3361 = vmatpush1.bf16.msra.mxu0 0
        %3362 = vmatprep.subr.bf16.mxu0 0
        %3363 = vmatpush1.bf16.msra.mxu0 0
        %3364 = vmatprep.subr.bf16.mxu0 0
        %3365 = vmatpush1.bf16.msra.mxu0 0
        %3366 = vmatprep.subr.bf16.mxu0 0
        %3367 = vmatpush1.bf16.msra.mxu0 0
        %3368 = vmatprep.subr.bf16.mxu0 0
        %3369 = vmatpush1.bf16.msra.mxu0 0
        %3370 = vmatprep.subr.bf16.mxu0 0
        %3371 = vmatpush1.bf16.msra.mxu0 0
        %3372 = vmatprep.subr.bf16.mxu0 0
        %3373 = vmatpush1.bf16.msra.mxu0 0
        %3374 = vmatprep.subr.bf16.mxu0 0
        %3375 = vmatpush1.bf16.msra.mxu0 0
        %3376 = vmatprep.subr.bf16.mxu0 0
        %3377 = vmatpush1.bf16.msra.mxu0 0
        %3378 = vmatprep.subr.bf16.mxu0 0
        %3379 = vmatpush1.bf16.msra.mxu0 0
        %3380 = vmatprep.subr.bf16.mxu0 0
        %3381 = vmatpush1.bf16.msra.mxu0 0
        %3382 = vmatprep.mubr.bf16.mxu0 0
        %3383 = vmatmul.mubr.bf16.gmra.mrb[0].mxu0 %v3339
        %v3384 = vpop.f32.mrb[0].mxu0
        %v3385 = vadd.f32 0.0, %v3384
        %v3386 = vpop.f32.mrb[0].mxu0
        %v3387 = vpop.f32.mrb[0].mxu0
        %v3388 = vadd.f32 0.0, %v3387
        %v3389 = vpop.f32.mrb[0].mxu0
        %3390 = vmatprep.mubr.bf16.mxu0 0
        %3391 = vmatmul.mubr.bf16.gmra.mrb[0].mxu0 %v3342
        %v3392 = vpop.f32.mrb[0].mxu0
        %v3393 = vadd.f32 0.0, %v3392
        %v3394 = vpop.f32.mrb[0].mxu0
        %v3395 = vpop.f32.mrb[0].mxu0
        %v3396 = vadd.f32 0.0, %v3395
        %v3397 = vpop.f32.mrb[0].mxu0
        %3398 = vmatprep.mubr.bf16.mxu0 0
        %3399 = vmatmul.mubr.bf16.gmra.mrb[0].mxu0 %v3345
        %v3400 = vpop.f32.mrb[0].mxu0
        %v3401 = vadd.f32 0.0, %v3400
        %v3402 = vpop.f32.mrb[0].mxu0
        %v3403 = vpop.f32.mrb[0].mxu0
        %v3404 = vadd.f32 0.0, %v3403
        %v3405 = vpop.f32.mrb[0].mxu0
        %3406 = vmatprep.mubr.bf16.mxu0 0
        %3407 = vmatmul.mubr.bf16.gmra.mrb[0].mxu0 %v3348
        %v3408 = vpop.f32.mrb[0].mxu0
        %v3409 = vadd.f32 0.0, %v3408
        %v3410 = vpop.f32.mrb[0].mxu0
        %v3411 = vpop.f32.mrb[0].mxu0
        %v3412 = vadd.f32 0.0, %v3411
        %v3413 = vpop.f32.mrb[0].mxu0
        %3414 = vdwg.mxu0
        %v3415 = vadd.f32 %v3265, %v3385
        %v3416 = vadd.f32 %v3266, %v3388
        %v3417 = vadd.f32 %v3267, %v3393
        %v3418 = vadd.f32 %v3268, %v3396
        %v3419 = vadd.f32 %v3269, %v3401
        %v3420 = vadd.f32 %v3270, %v3404
        %v3421 = vadd.f32 %v3271, %v3409
        %v3422 = vadd.f32 %v3272, %v3412
        %s3423 = scalar_lea.vmem %s13, 128
        %v3424 = vld [vmem:[%s3423] sm:$0xf]
        %v3425 = vld [vmem:[%s3423 + $0x4] sm:$0xf]
        %v3426 = vld [vmem:[%s3423 + $0x8] sm:$0xf]
        %v3427 = vld [vmem:[%s3423 + $0xc] sm:$0xf]
        %v3428 = vld [vmem:[%s3423 + $0x10] sm:$0xf]
        %v3429 = vld [vmem:[%s3423 + $0x14] sm:$0xf]
        %v3430 = vld [vmem:[%s3423 + $0x18] sm:$0xf]
        %v3431 = vld [vmem:[%s3423 + $0x1c] sm:$0xf]
        %v3440 = vunpack.c.l.b16 %v3424
        %v3441 = vunpack.c.l.b16 %v3425
        %v3442 = vunpack.c.l.b16 %v3426
        %v3443 = vunpack.c.l.b16 %v3427
        %v3444 = vunpack.c.l.b16 %v3428
        %v3445 = vunpack.c.l.b16 %v3429
        %v3446 = vunpack.c.l.b16 %v3430
        %v3447 = vunpack.c.l.b16 %v3431
        %v3448 = vpack.c.b16 %v3441, %v3440
        %v3449 = vpack.c.b16 %v3443, %v3442
        %v3450 = vpack.c.b16 %v3445, %v3444
        %v3451 = vpack.c.b16 %v3447, %v3446
        %v3453 = vsel %vm566, %v3448, 0
        %v3456 = vsel %vm566, %v3449, 0
        %v3459 = vsel %vm566, %v3450, 0
        %v3462 = vsel %vm566, %v3451, 0
        %3464 = vmatprep.subr.bf16.mxu0 0
        %3465 = vmatpush1.bf16.msra.mxu0 %v2832
        %3466 = vmatprep.subr.bf16.mxu0 0
        %3467 = vmatpush1.bf16.msra.mxu0 %v2833
        %3468 = vmatprep.subr.bf16.mxu0 0
        %3469 = vmatpush1.bf16.msra.mxu0 %v2834
        %3470 = vmatprep.subr.bf16.mxu0 0
        %3471 = vmatpush1.bf16.msra.mxu0 %v2835
        %3472 = vmatprep.subr.bf16.mxu0 0
        %3473 = vmatpush1.bf16.msra.mxu0 0
        %3474 = vmatprep.subr.bf16.mxu0 0
        %3475 = vmatpush1.bf16.msra.mxu0 0
        %3476 = vmatprep.subr.bf16.mxu0 0
        %3477 = vmatpush1.bf16.msra.mxu0 0
        %3478 = vmatprep.subr.bf16.mxu0 0
        %3479 = vmatpush1.bf16.msra.mxu0 0
        %3480 = vmatprep.subr.bf16.mxu0 0
        %3481 = vmatpush1.bf16.msra.mxu0 0
        %3482 = vmatprep.subr.bf16.mxu0 0
        %3483 = vmatpush1.bf16.msra.mxu0 0
        %3484 = vmatprep.subr.bf16.mxu0 0
        %3485 = vmatpush1.bf16.msra.mxu0 0
        %3486 = vmatprep.subr.bf16.mxu0 0
        %3487 = vmatpush1.bf16.msra.mxu0 0
        %3488 = vmatprep.subr.bf16.mxu0 0
        %3489 = vmatpush1.bf16.msra.mxu0 0
        %3490 = vmatprep.subr.bf16.mxu0 0
        %3491 = vmatpush1.bf16.msra.mxu0 0
        %3492 = vmatprep.subr.bf16.mxu0 0
        %3493 = vmatpush1.bf16.msra.mxu0 0
        %3494 = vmatprep.subr.bf16.mxu0 0
        %3495 = vmatpush1.bf16.msra.mxu0 0
        %3496 = vmatprep.mubr.bf16.mxu0 0
        %3497 = vmatmul.mubr.bf16.gmra.mrb[0].mxu0 %v3453
        %v3498 = vpop.f32.mrb[0].mxu0
        %v3499 = vadd.f32 0.0, %v3498
        %v3500 = vpop.f32.mrb[0].mxu0
        %v3501 = vpop.f32.mrb[0].mxu0
        %v3502 = vadd.f32 0.0, %v3501
        %v3503 = vpop.f32.mrb[0].mxu0
        %3504 = vmatprep.mubr.bf16.mxu0 0
        %3505 = vmatmul.mubr.bf16.gmra.mrb[0].mxu0 %v3456
        %v3506 = vpop.f32.mrb[0].mxu0
        %v3507 = vadd.f32 0.0, %v3506
        %v3508 = vpop.f32.mrb[0].mxu0
        %v3509 = vpop.f32.mrb[0].mxu0
        %v3510 = vadd.f32 0.0, %v3509
        %v3511 = vpop.f32.mrb[0].mxu0
        %3512 = vmatprep.mubr.bf16.mxu0 0
        %3513 = vmatmul.mubr.bf16.gmra.mrb[0].mxu0 %v3459
        %v3514 = vpop.f32.mrb[0].mxu0
        %v3515 = vadd.f32 0.0, %v3514
        %v3516 = vpop.f32.mrb[0].mxu0
        %v3517 = vpop.f32.mrb[0].mxu0
        %v3518 = vadd.f32 0.0, %v3517
        %v3519 = vpop.f32.mrb[0].mxu0
        %3520 = vmatprep.mubr.bf16.mxu0 0
        %3521 = vmatmul.mubr.bf16.gmra.mrb[0].mxu0 %v3462
        %v3522 = vpop.f32.mrb[0].mxu0
        %v3523 = vadd.f32 0.0, %v3522
        %v3524 = vpop.f32.mrb[0].mxu0
        %v3525 = vpop.f32.mrb[0].mxu0
        %v3526 = vadd.f32 0.0, %v3525
        %v3527 = vpop.f32.mrb[0].mxu0
        %3528 = vdwg.mxu0
        %v3529 = vadd.f32 %v3415, %v3499
        %v3530 = vadd.f32 %v3416, %v3502
        %v3531 = vadd.f32 %v3417, %v3507
        %v3532 = vadd.f32 %v3418, %v3510
        %v3533 = vadd.f32 %v3419, %v3515
        %v3534 = vadd.f32 %v3420, %v3518
        %v3535 = vadd.f32 %v3421, %v3523
        %v3536 = vadd.f32 %v3422, %v3526
        %3537 = vrot.lane.b32.xlu0 %v2832, 127
        %v3538 = vpop.permute.xlu0 %3537
        %3539 = vrot.lane.b32.xlu0 %v2833, 127
        %v3540 = vpop.permute.xlu0 %3539
        %3541 = vrot.lane.b32.xlu0 %v2834, 127
        %v3542 = vpop.permute.xlu0 %3541
        %3543 = vrot.lane.b32.xlu0 %v2835, 127
        %v3544 = vpop.permute.xlu0 %3543
        %3545 = vrot.lane.b32.xlu0 %v2832, 63
        %v3546 = vpop.permute.xlu0 %3545
        %3547 = vrot.lane.b32.xlu0 %v2833, 63
        %v3548 = vpop.permute.xlu0 %3547
        %3549 = vrot.lane.b32.xlu0 %v2834, 63
        %v3550 = vpop.permute.xlu0 %3549
        %3551 = vrot.lane.b32.xlu0 %v2835, 63
        %v3552 = vpop.permute.xlu0 %3551
        %v3555 = vsel %vm1553, %v3538, %v3546
        %v3559 = vsel %vm1553, %v3540, %v3548
        %v3563 = vsel %vm1553, %v3542, %v3550
        %v3567 = vsel %vm1553, %v3544, %v3552
        %v3569 = vmul.bf16 %v3555, %v1570
        %v3570 = vmul.bf16 %v3559, %v1570
        %v3571 = vmul.bf16 %v3563, %v1570
        %v3572 = vmul.bf16 %v3567, %v1570
        %s3573 = scalar_lea.vmem %s13, 160
        %v3574 = vld [vmem:[%s3573] sm:$0xf]
        %v3575 = vld [vmem:[%s3573 + $0x4] sm:$0xf]
        %v3576 = vld [vmem:[%s3573 + $0x8] sm:$0xf]
        %v3577 = vld [vmem:[%s3573 + $0xc] sm:$0xf]
        %v3578 = vld [vmem:[%s3573 + $0x10] sm:$0xf]
        %v3579 = vld [vmem:[%s3573 + $0x14] sm:$0xf]
        %v3580 = vld [vmem:[%s3573 + $0x18] sm:$0xf]
        %v3581 = vld [vmem:[%s3573 + $0x1c] sm:$0xf]
        %v3590 = vunpack.c.l.b16 %v3574
        %v3591 = vunpack.c.l.b16 %v3575
        %v3592 = vunpack.c.l.b16 %v3576
        %v3593 = vunpack.c.l.b16 %v3577
        %v3594 = vunpack.c.l.b16 %v3578
        %v3595 = vunpack.c.l.b16 %v3579
        %v3596 = vunpack.c.l.b16 %v3580
        %v3597 = vunpack.c.l.b16 %v3581
        %v3598 = vpack.c.b16 %v3591, %v3590
        %v3599 = vpack.c.b16 %v3593, %v3592
        %v3600 = vpack.c.b16 %v3595, %v3594
        %v3601 = vpack.c.b16 %v3597, %v3596
        %v3603 = vsel %vm566, %v3598, 0
        %v3606 = vsel %vm566, %v3599, 0
        %v3609 = vsel %vm566, %v3600, 0
        %v3612 = vsel %vm566, %v3601, 0
        %3614 = vmatprep.subr.bf16.mxu0 0
        %3615 = vmatpush1.bf16.msra.mxu0 %v3569
        %3616 = vmatprep.subr.bf16.mxu0 0
        %3617 = vmatpush1.bf16.msra.mxu0 %v3570
        %3618 = vmatprep.subr.bf16.mxu0 0
        %3619 = vmatpush1.bf16.msra.mxu0 %v3571
        %3620 = vmatprep.subr.bf16.mxu0 0
        %3621 = vmatpush1.bf16.msra.mxu0 %v3572
        %3622 = vmatprep.subr.bf16.mxu0 0
        %3623 = vmatpush1.bf16.msra.mxu0 0
        %3624 = vmatprep.subr.bf16.mxu0 0
        %3625 = vmatpush1.bf16.msra.mxu0 0
        %3626 = vmatprep.subr.bf16.mxu0 0
        %3627 = vmatpush1.bf16.msra.mxu0 0
        %3628 = vmatprep.subr.bf16.mxu0 0
        %3629 = vmatpush1.bf16.msra.mxu0 0
        %3630 = vmatprep.subr.bf16.mxu0 0
        %3631 = vmatpush1.bf16.msra.mxu0 0
        %3632 = vmatprep.subr.bf16.mxu0 0
        %3633 = vmatpush1.bf16.msra.mxu0 0
        %3634 = vmatprep.subr.bf16.mxu0 0
        %3635 = vmatpush1.bf16.msra.mxu0 0
        %3636 = vmatprep.subr.bf16.mxu0 0
        %3637 = vmatpush1.bf16.msra.mxu0 0
        %3638 = vmatprep.subr.bf16.mxu0 0
        %3639 = vmatpush1.bf16.msra.mxu0 0
        %3640 = vmatprep.subr.bf16.mxu0 0
        %3641 = vmatpush1.bf16.msra.mxu0 0
        %3642 = vmatprep.subr.bf16.mxu0 0
        %3643 = vmatpush1.bf16.msra.mxu0 0
        %3644 = vmatprep.subr.bf16.mxu0 0
        %3645 = vmatpush1.bf16.msra.mxu0 0
        %3646 = vmatprep.mubr.bf16.mxu0 0
        %3647 = vmatmul.mubr.bf16.gmra.mrb[0].mxu0 %v3603
        %v3648 = vpop.f32.mrb[0].mxu0
        %v3649 = vadd.f32 0.0, %v3648
        %v3650 = vpop.f32.mrb[0].mxu0
        %v3651 = vpop.f32.mrb[0].mxu0
        %v3652 = vadd.f32 0.0, %v3651
        %v3653 = vpop.f32.mrb[0].mxu0
        %3654 = vmatprep.mubr.bf16.mxu0 0
        %3655 = vmatmul.mubr.bf16.gmra.mrb[0].mxu0 %v3606
        %v3656 = vpop.f32.mrb[0].mxu0
        %v3657 = vadd.f32 0.0, %v3656
        %v3658 = vpop.f32.mrb[0].mxu0
        %v3659 = vpop.f32.mrb[0].mxu0
        %v3660 = vadd.f32 0.0, %v3659
        %v3661 = vpop.f32.mrb[0].mxu0
        %3662 = vmatprep.mubr.bf16.mxu0 0
        %3663 = vmatmul.mubr.bf16.gmra.mrb[0].mxu0 %v3609
        %v3664 = vpop.f32.mrb[0].mxu0
        %v3665 = vadd.f32 0.0, %v3664
        %v3666 = vpop.f32.mrb[0].mxu0
        %v3667 = vpop.f32.mrb[0].mxu0
        %v3668 = vadd.f32 0.0, %v3667
        %v3669 = vpop.f32.mrb[0].mxu0
        %3670 = vmatprep.mubr.bf16.mxu0 0
        %3671 = vmatmul.mubr.bf16.gmra.mrb[0].mxu0 %v3612
        %v3672 = vpop.f32.mrb[0].mxu0
        %v3673 = vadd.f32 0.0, %v3672
        %v3674 = vpop.f32.mrb[0].mxu0
        %v3675 = vpop.f32.mrb[0].mxu0
        %v3676 = vadd.f32 0.0, %v3675
        %v3677 = vpop.f32.mrb[0].mxu0
        %3678 = vdwg.mxu0
        %v3679 = vadd.f32 %v3529, %v3649
        %v3680 = vadd.f32 %v3530, %v3652
        %v3681 = vadd.f32 %v3531, %v3657
        %v3682 = vadd.f32 %v3532, %v3660
        %v3683 = vadd.f32 %v3533, %v3665
        %v3684 = vadd.f32 %v3534, %v3668
        %v3685 = vadd.f32 %v3535, %v3673
        %v3686 = vadd.f32 %v3536, %v3676
        %3687 = vrot.lane.b32.xlu0 %v2832, 121
        %v3688 = vpop.permute.xlu0 %3687
        %3689 = vrot.lane.b32.xlu0 %v2833, 121
        %v3690 = vpop.permute.xlu0 %3689
        %3691 = vrot.lane.b32.xlu0 %v2834, 121
        %v3692 = vpop.permute.xlu0 %3691
        %3693 = vrot.lane.b32.xlu0 %v2835, 121
        %v3694 = vpop.permute.xlu0 %3693
        %3695 = vrot.lane.b32.xlu0 %v2832, 57
        %v3696 = vpop.permute.xlu0 %3695
        %3697 = vrot.lane.b32.xlu0 %v2833, 57
        %v3698 = vpop.permute.xlu0 %3697
        %3699 = vrot.lane.b32.xlu0 %v2834, 57
        %v3700 = vpop.permute.xlu0 %3699
        %3701 = vrot.lane.b32.xlu0 %v2835, 57
        %v3702 = vpop.permute.xlu0 %3701
        %v3705 = vsel %vm1695, %v3688, %v3696
        %v3709 = vsel %vm1695, %v3690, %v3698
        %v3713 = vsel %vm1695, %v3692, %v3700
        %v3717 = vsel %vm1695, %v3694, %v3702
        %v3719 = vmul.bf16 %v3705, %v1712
        %v3720 = vmul.bf16 %v3709, %v1712
        %v3721 = vmul.bf16 %v3713, %v1712
        %v3722 = vmul.bf16 %v3717, %v1712
        %s3723 = scalar_lea.vmem %s13, 192
        %v3724 = vld [vmem:[%s3723] sm:$0xf]
        %v3725 = vld [vmem:[%s3723 + $0x4] sm:$0xf]
        %v3726 = vld [vmem:[%s3723 + $0x8] sm:$0xf]
        %v3727 = vld [vmem:[%s3723 + $0xc] sm:$0xf]
        %v3728 = vld [vmem:[%s3723 + $0x10] sm:$0xf]
        %v3729 = vld [vmem:[%s3723 + $0x14] sm:$0xf]
        %v3730 = vld [vmem:[%s3723 + $0x18] sm:$0xf]
        %v3731 = vld [vmem:[%s3723 + $0x1c] sm:$0xf]
        %v3740 = vunpack.c.l.b16 %v3724
        %v3741 = vunpack.c.l.b16 %v3725
        %v3742 = vunpack.c.l.b16 %v3726
        %v3743 = vunpack.c.l.b16 %v3727
        %v3744 = vunpack.c.l.b16 %v3728
        %v3745 = vunpack.c.l.b16 %v3729
        %v3746 = vunpack.c.l.b16 %v3730
        %v3747 = vunpack.c.l.b16 %v3731
        %v3748 = vpack.c.b16 %v3741, %v3740
        %v3749 = vpack.c.b16 %v3743, %v3742
        %v3750 = vpack.c.b16 %v3745, %v3744
        %v3751 = vpack.c.b16 %v3747, %v3746
        %v3753 = vsel %vm566, %v3748, 0
        %v3756 = vsel %vm566, %v3749, 0
        %v3759 = vsel %vm566, %v3750, 0
        %v3762 = vsel %vm566, %v3751, 0
        %3764 = vmatprep.subr.bf16.mxu0 0
        %3765 = vmatpush1.bf16.msra.mxu0 %v3719
        %3766 = vmatprep.subr.bf16.mxu0 0
        %3767 = vmatpush1.bf16.msra.mxu0 %v3720
        %3768 = vmatprep.subr.bf16.mxu0 0
        %3769 = vmatpush1.bf16.msra.mxu0 %v3721
        %3770 = vmatprep.subr.bf16.mxu0 0
        %3771 = vmatpush1.bf16.msra.mxu0 %v3722
        %3772 = vmatprep.subr.bf16.mxu0 0
        %3773 = vmatpush1.bf16.msra.mxu0 0
        %3774 = vmatprep.subr.bf16.mxu0 0
        %3775 = vmatpush1.bf16.msra.mxu0 0
        %3776 = vmatprep.subr.bf16.mxu0 0
        %3777 = vmatpush1.bf16.msra.mxu0 0
        %3778 = vmatprep.subr.bf16.mxu0 0
        %3779 = vmatpush1.bf16.msra.mxu0 0
        %3780 = vmatprep.subr.bf16.mxu0 0
        %3781 = vmatpush1.bf16.msra.mxu0 0
        %3782 = vmatprep.subr.bf16.mxu0 0
        %3783 = vmatpush1.bf16.msra.mxu0 0
        %3784 = vmatprep.subr.bf16.mxu0 0
        %3785 = vmatpush1.bf16.msra.mxu0 0
        %3786 = vmatprep.subr.bf16.mxu0 0
        %3787 = vmatpush1.bf16.msra.mxu0 0
        %3788 = vmatprep.subr.bf16.mxu0 0
        %3789 = vmatpush1.bf16.msra.mxu0 0
        %3790 = vmatprep.subr.bf16.mxu0 0
        %3791 = vmatpush1.bf16.msra.mxu0 0
        %3792 = vmatprep.subr.bf16.mxu0 0
        %3793 = vmatpush1.bf16.msra.mxu0 0
        %3794 = vmatprep.subr.bf16.mxu0 0
        %3795 = vmatpush1.bf16.msra.mxu0 0
        %3796 = vmatprep.mubr.bf16.mxu0 0
        %3797 = vmatmul.mubr.bf16.gmra.mrb[0].mxu0 %v3753
        %v3798 = vpop.f32.mrb[0].mxu0
        %v3799 = vadd.f32 0.0, %v3798
        %v3800 = vpop.f32.mrb[0].mxu0
        %v3801 = vpop.f32.mrb[0].mxu0
        %v3802 = vadd.f32 0.0, %v3801
        %v3803 = vpop.f32.mrb[0].mxu0
        %3804 = vmatprep.mubr.bf16.mxu0 0
        %3805 = vmatmul.mubr.bf16.gmra.mrb[0].mxu0 %v3756
        %v3806 = vpop.f32.mrb[0].mxu0
        %v3807 = vadd.f32 0.0, %v3806
        %v3808 = vpop.f32.mrb[0].mxu0
        %v3809 = vpop.f32.mrb[0].mxu0
        %v3810 = vadd.f32 0.0, %v3809
        %v3811 = vpop.f32.mrb[0].mxu0
        %3812 = vmatprep.mubr.bf16.mxu0 0
        %3813 = vmatmul.mubr.bf16.gmra.mrb[0].mxu0 %v3759
        %v3814 = vpop.f32.mrb[0].mxu0
        %v3815 = vadd.f32 0.0, %v3814
        %v3816 = vpop.f32.mrb[0].mxu0
        %v3817 = vpop.f32.mrb[0].mxu0
        %v3818 = vadd.f32 0.0, %v3817
        %v3819 = vpop.f32.mrb[0].mxu0
        %3820 = vmatprep.mubr.bf16.mxu0 0
        %3821 = vmatmul.mubr.bf16.gmra.mrb[0].mxu0 %v3762
        %v3822 = vpop.f32.mrb[0].mxu0
        %v3823 = vadd.f32 0.0, %v3822
        %v3824 = vpop.f32.mrb[0].mxu0
        %v3825 = vpop.f32.mrb[0].mxu0
        %v3826 = vadd.f32 0.0, %v3825
        %v3827 = vpop.f32.mrb[0].mxu0
        %3828 = vdwg.mxu0
        %v3829 = vadd.f32 %v3679, %v3799
        %v3830 = vadd.f32 %v3680, %v3802
        %v3831 = vadd.f32 %v3681, %v3807
        %v3832 = vadd.f32 %v3682, %v3810
        %v3833 = vadd.f32 %v3683, %v3815
        %v3834 = vadd.f32 %v3684, %v3818
        %v3835 = vadd.f32 %v3685, %v3823
        %v3836 = vadd.f32 %v3686, %v3826
        %3837 = vrot.lane.b32.xlu0 %v2832, 120
        %v3838 = vpop.permute.xlu0 %3837
        %3839 = vrot.lane.b32.xlu0 %v2833, 120
        %v3840 = vpop.permute.xlu0 %3839
        %3841 = vrot.lane.b32.xlu0 %v2834, 120
        %v3842 = vpop.permute.xlu0 %3841
        %3843 = vrot.lane.b32.xlu0 %v2835, 120
        %v3844 = vpop.permute.xlu0 %3843
        %3845 = vrot.lane.b32.xlu0 %v2832, 56
        %v3846 = vpop.permute.xlu0 %3845
        %3847 = vrot.lane.b32.xlu0 %v2833, 56
        %v3848 = vpop.permute.xlu0 %3847
        %3849 = vrot.lane.b32.xlu0 %v2834, 56
        %v3850 = vpop.permute.xlu0 %3849
        %3851 = vrot.lane.b32.xlu0 %v2835, 56
        %v3852 = vpop.permute.xlu0 %3851
        %v3855 = vsel %vm1837, %v3838, %v3846
        %v3859 = vsel %vm1837, %v3840, %v3848
        %v3863 = vsel %vm1837, %v3842, %v3850
        %v3867 = vsel %vm1837, %v3844, %v3852
        %v3869 = vmul.bf16 %v3855, %v1854
        %v3870 = vmul.bf16 %v3859, %v1854
        %v3871 = vmul.bf16 %v3863, %v1854
        %v3872 = vmul.bf16 %v3867, %v1854
        %s3873 = scalar_lea.vmem %s13, 224
        %v3874 = vld [vmem:[%s3873] sm:$0xf]
        %v3875 = vld [vmem:[%s3873 + $0x4] sm:$0xf]
        %v3876 = vld [vmem:[%s3873 + $0x8] sm:$0xf]
        %v3877 = vld [vmem:[%s3873 + $0xc] sm:$0xf]
        %v3878 = vld [vmem:[%s3873 + $0x10] sm:$0xf]
        %v3879 = vld [vmem:[%s3873 + $0x14] sm:$0xf]
        %v3880 = vld [vmem:[%s3873 + $0x18] sm:$0xf]
        %v3881 = vld [vmem:[%s3873 + $0x1c] sm:$0xf]
        %v3890 = vunpack.c.l.b16 %v3874
        %v3891 = vunpack.c.l.b16 %v3875
        %v3892 = vunpack.c.l.b16 %v3876
        %v3893 = vunpack.c.l.b16 %v3877
        %v3894 = vunpack.c.l.b16 %v3878
        %v3895 = vunpack.c.l.b16 %v3879
        %v3896 = vunpack.c.l.b16 %v3880
        %v3897 = vunpack.c.l.b16 %v3881
        %v3898 = vpack.c.b16 %v3891, %v3890
        %v3899 = vpack.c.b16 %v3893, %v3892
        %v3900 = vpack.c.b16 %v3895, %v3894
        %v3901 = vpack.c.b16 %v3897, %v3896
        %v3903 = vsel %vm566, %v3898, 0
        %v3906 = vsel %vm566, %v3899, 0
        %v3909 = vsel %vm566, %v3900, 0
        %v3912 = vsel %vm566, %v3901, 0
        %3914 = vmatprep.subr.bf16.mxu0 0
        %3915 = vmatpush1.bf16.msra.mxu0 %v3869
        %3916 = vmatprep.subr.bf16.mxu0 0
        %3917 = vmatpush1.bf16.msra.mxu0 %v3870
        %3918 = vmatprep.subr.bf16.mxu0 0
        %3919 = vmatpush1.bf16.msra.mxu0 %v3871
        %3920 = vmatprep.subr.bf16.mxu0 0
        %3921 = vmatpush1.bf16.msra.mxu0 %v3872
        %3922 = vmatprep.subr.bf16.mxu0 0
        %3923 = vmatpush1.bf16.msra.mxu0 0
        %3924 = vmatprep.subr.bf16.mxu0 0
        %3925 = vmatpush1.bf16.msra.mxu0 0
        %3926 = vmatprep.subr.bf16.mxu0 0
        %3927 = vmatpush1.bf16.msra.mxu0 0
        %3928 = vmatprep.subr.bf16.mxu0 0
        %3929 = vmatpush1.bf16.msra.mxu0 0
        %3930 = vmatprep.subr.bf16.mxu0 0
        %3931 = vmatpush1.bf16.msra.mxu0 0
        %3932 = vmatprep.subr.bf16.mxu0 0
        %3933 = vmatpush1.bf16.msra.mxu0 0
        %3934 = vmatprep.subr.bf16.mxu0 0
        %3935 = vmatpush1.bf16.msra.mxu0 0
        %3936 = vmatprep.subr.bf16.mxu0 0
        %3937 = vmatpush1.bf16.msra.mxu0 0
        %3938 = vmatprep.subr.bf16.mxu0 0
        %3939 = vmatpush1.bf16.msra.mxu0 0
        %3940 = vmatprep.subr.bf16.mxu0 0
        %3941 = vmatpush1.bf16.msra.mxu0 0
        %3942 = vmatprep.subr.bf16.mxu0 0
        %3943 = vmatpush1.bf16.msra.mxu0 0
        %3944 = vmatprep.subr.bf16.mxu0 0
        %3945 = vmatpush1.bf16.msra.mxu0 0
        %3946 = vmatprep.mubr.bf16.mxu0 0
        %3947 = vmatmul.mubr.bf16.gmra.mrb[0].mxu0 %v3903
        %v3948 = vpop.f32.mrb[0].mxu0
        %v3949 = vadd.f32 0.0, %v3948
        %v3950 = vpop.f32.mrb[0].mxu0
        %v3951 = vpop.f32.mrb[0].mxu0
        %v3952 = vadd.f32 0.0, %v3951
        %v3953 = vpop.f32.mrb[0].mxu0
        %3954 = vmatprep.mubr.bf16.mxu0 0
        %3955 = vmatmul.mubr.bf16.gmra.mrb[0].mxu0 %v3906
        %v3956 = vpop.f32.mrb[0].mxu0
        %v3957 = vadd.f32 0.0, %v3956
        %v3958 = vpop.f32.mrb[0].mxu0
        %v3959 = vpop.f32.mrb[0].mxu0
        %v3960 = vadd.f32 0.0, %v3959
        %v3961 = vpop.f32.mrb[0].mxu0
        %3962 = vmatprep.mubr.bf16.mxu0 0
        %3963 = vmatmul.mubr.bf16.gmra.mrb[0].mxu0 %v3909
        %v3964 = vpop.f32.mrb[0].mxu0
        %v3965 = vadd.f32 0.0, %v3964
        %v3966 = vpop.f32.mrb[0].mxu0
        %v3967 = vpop.f32.mrb[0].mxu0
        %v3968 = vadd.f32 0.0, %v3967
        %v3969 = vpop.f32.mrb[0].mxu0
        %3970 = vmatprep.mubr.bf16.mxu0 0
        %3971 = vmatmul.mubr.bf16.gmra.mrb[0].mxu0 %v3912
        %v3972 = vpop.f32.mrb[0].mxu0
        %v3973 = vadd.f32 0.0, %v3972
        %v3974 = vpop.f32.mrb[0].mxu0
        %v3975 = vpop.f32.mrb[0].mxu0
        %v3976 = vadd.f32 0.0, %v3975
        %v3977 = vpop.f32.mrb[0].mxu0
        %3978 = vdwg.mxu0
        %v3979 = vadd.f32 %v3829, %v3949
        %v3980 = vadd.f32 %v3830, %v3952
        %v3981 = vadd.f32 %v3831, %v3957
        %v3982 = vadd.f32 %v3832, %v3960
        %v3983 = vadd.f32 %v3833, %v3965
        %v3984 = vadd.f32 %v3834, %v3968
        %v3985 = vadd.f32 %v3835, %v3973
        %v3986 = vadd.f32 %v3836, %v3976
        %3987 = vrot.lane.b32.xlu0 %v2832, 119
        %v3988 = vpop.permute.xlu0 %3987
        %3989 = vrot.lane.b32.xlu0 %v2833, 119
        %v3990 = vpop.permute.xlu0 %3989
        %3991 = vrot.lane.b32.xlu0 %v2834, 119
        %v3992 = vpop.permute.xlu0 %3991
        %3993 = vrot.lane.b32.xlu0 %v2835, 119
        %v3994 = vpop.permute.xlu0 %3993
        %3995 = vrot.lane.b32.xlu0 %v2832, 55
        %v3996 = vpop.permute.xlu0 %3995
        %3997 = vrot.lane.b32.xlu0 %v2833, 55
        %v3998 = vpop.permute.xlu0 %3997
        %3999 = vrot.lane.b32.xlu0 %v2834, 55
        %v4000 = vpop.permute.xlu0 %3999
        %4001 = vrot.lane.b32.xlu0 %v2835, 55
        %v4002 = vpop.permute.xlu0 %4001
        %v4005 = vsel %vm1979, %v3988, %v3996
        %v4009 = vsel %vm1979, %v3990, %v3998
        %v4013 = vsel %vm1979, %v3992, %v4000
        %v4017 = vsel %vm1979, %v3994, %v4002
        %v4019 = vmul.bf16 %v4005, %v1996
        %v4020 = vmul.bf16 %v4009, %v1996
        %v4021 = vmul.bf16 %v4013, %v1996
        %v4022 = vmul.bf16 %v4017, %v1996
        %s4023 = scalar_lea.vmem %s13, 256
        %v4024 = vld [vmem:[%s4023] sm:$0xf]
        %v4025 = vld [vmem:[%s4023 + $0x4] sm:$0xf]
        %v4026 = vld [vmem:[%s4023 + $0x8] sm:$0xf]
        %v4027 = vld [vmem:[%s4023 + $0xc] sm:$0xf]
        %v4028 = vld [vmem:[%s4023 + $0x10] sm:$0xf]
        %v4029 = vld [vmem:[%s4023 + $0x14] sm:$0xf]
        %v4030 = vld [vmem:[%s4023 + $0x18] sm:$0xf]
        %v4031 = vld [vmem:[%s4023 + $0x1c] sm:$0xf]
        %v4040 = vunpack.c.l.b16 %v4024
        %v4041 = vunpack.c.l.b16 %v4025
        %v4042 = vunpack.c.l.b16 %v4026
        %v4043 = vunpack.c.l.b16 %v4027
        %v4044 = vunpack.c.l.b16 %v4028
        %v4045 = vunpack.c.l.b16 %v4029
        %v4046 = vunpack.c.l.b16 %v4030
        %v4047 = vunpack.c.l.b16 %v4031
        %v4048 = vpack.c.b16 %v4041, %v4040
        %v4049 = vpack.c.b16 %v4043, %v4042
        %v4050 = vpack.c.b16 %v4045, %v4044
        %v4051 = vpack.c.b16 %v4047, %v4046
        %v4053 = vsel %vm566, %v4048, 0
        %v4056 = vsel %vm566, %v4049, 0
        %v4059 = vsel %vm566, %v4050, 0
        %v4062 = vsel %vm566, %v4051, 0
        %4064 = vmatprep.subr.bf16.mxu0 0
        %4065 = vmatpush1.bf16.msra.mxu0 %v4019
        %4066 = vmatprep.subr.bf16.mxu0 0
        %4067 = vmatpush1.bf16.msra.mxu0 %v4020
        %4068 = vmatprep.subr.bf16.mxu0 0
        %4069 = vmatpush1.bf16.msra.mxu0 %v4021
        %4070 = vmatprep.subr.bf16.mxu0 0
        %4071 = vmatpush1.bf16.msra.mxu0 %v4022
        %4072 = vmatprep.subr.bf16.mxu0 0
        %4073 = vmatpush1.bf16.msra.mxu0 0
        %4074 = vmatprep.subr.bf16.mxu0 0
        %4075 = vmatpush1.bf16.msra.mxu0 0
        %4076 = vmatprep.subr.bf16.mxu0 0
        %4077 = vmatpush1.bf16.msra.mxu0 0
        %4078 = vmatprep.subr.bf16.mxu0 0
        %4079 = vmatpush1.bf16.msra.mxu0 0
        %4080 = vmatprep.subr.bf16.mxu0 0
        %4081 = vmatpush1.bf16.msra.mxu0 0
        %4082 = vmatprep.subr.bf16.mxu0 0
        %4083 = vmatpush1.bf16.msra.mxu0 0
        %4084 = vmatprep.subr.bf16.mxu0 0
        %4085 = vmatpush1.bf16.msra.mxu0 0
        %4086 = vmatprep.subr.bf16.mxu0 0
        %4087 = vmatpush1.bf16.msra.mxu0 0
        %4088 = vmatprep.subr.bf16.mxu0 0
        %4089 = vmatpush1.bf16.msra.mxu0 0
        %4090 = vmatprep.subr.bf16.mxu0 0
        %4091 = vmatpush1.bf16.msra.mxu0 0
        %4092 = vmatprep.subr.bf16.mxu0 0
        %4093 = vmatpush1.bf16.msra.mxu0 0
        %4094 = vmatprep.subr.bf16.mxu0 0
        %4095 = vmatpush1.bf16.msra.mxu0 0
        %4096 = vmatprep.mubr.bf16.mxu0 0
        %4097 = vmatmul.mubr.bf16.gmra.mrb[0].mxu0 %v4053
        %v4098 = vpop.f32.mrb[0].mxu0
        %v4099 = vadd.f32 0.0, %v4098
        %v4100 = vpop.f32.mrb[0].mxu0
        %v4101 = vpop.f32.mrb[0].mxu0
        %v4102 = vadd.f32 0.0, %v4101
        %v4103 = vpop.f32.mrb[0].mxu0
        %4104 = vmatprep.mubr.bf16.mxu0 0
        %4105 = vmatmul.mubr.bf16.gmra.mrb[0].mxu0 %v4056
        %v4106 = vpop.f32.mrb[0].mxu0
        %v4107 = vadd.f32 0.0, %v4106
        %v4108 = vpop.f32.mrb[0].mxu0
        %v4109 = vpop.f32.mrb[0].mxu0
        %v4110 = vadd.f32 0.0, %v4109
        %v4111 = vpop.f32.mrb[0].mxu0
        %4112 = vmatprep.mubr.bf16.mxu0 0
        %4113 = vmatmul.mubr.bf16.gmra.mrb[0].mxu0 %v4059
        %v4114 = vpop.f32.mrb[0].mxu0
        %v4115 = vadd.f32 0.0, %v4114
        %v4116 = vpop.f32.mrb[0].mxu0
        %v4117 = vpop.f32.mrb[0].mxu0
        %v4118 = vadd.f32 0.0, %v4117
        %v4119 = vpop.f32.mrb[0].mxu0
        %4120 = vmatprep.mubr.bf16.mxu0 0
        %4121 = vmatmul.mubr.bf16.gmra.mrb[0].mxu0 %v4062
        %v4122 = vpop.f32.mrb[0].mxu0
        %v4123 = vadd.f32 0.0, %v4122
        %v4124 = vpop.f32.mrb[0].mxu0
        %v4125 = vpop.f32.mrb[0].mxu0
        %v4126 = vadd.f32 0.0, %v4125
        %v4127 = vpop.f32.mrb[0].mxu0
        %4128 = vdwg.mxu0
        %v4129 = vadd.f32 %v3979, %v4099
        %v4130 = vadd.f32 %v3980, %v4102
        %v4131 = vadd.f32 %v3981, %v4107
        %v4132 = vadd.f32 %v3982, %v4110
        %v4133 = vadd.f32 %v3983, %v4115
        %v4134 = vadd.f32 %v3984, %v4118
        %v4135 = vadd.f32 %v3985, %v4123
        %v4136 = vadd.f32 %v3986, %v4126
        %v4137 = vld [vmem:[%s14] sm:$0xff]
        %v4138 = vld [vmem:[%s14 + $0x8] sm:$0xff]
        %v4139 = vld [vmem:[%s14 + $0x10] sm:$0xff]
        %v4140 = vld [vmem:[%s14 + $0x18] sm:$0xff]
        %v4141 = vld [vmem:[%s14 + $0x20] sm:$0xff]
        %v4142 = vld [vmem:[%s14 + $0x28] sm:$0xff]
        %v4143 = vld [vmem:[%s14 + $0x30] sm:$0xff]
        %v4144 = vld [vmem:[%s14 + $0x38] sm:$0xff]
        %4146 = vset.pattern.permute.xlu0 0
        %4147 = vperm.xlu0 %4146, %v4137
        %v4148 = vpop.permute.xlu0 %4147
        %4151 = vset.pattern.permute.xlu0 0
        %4152 = vperm.xlu0 %4151, %v4138
        %v4153 = vpop.permute.xlu0 %4152
        %4156 = vset.pattern.permute.xlu0 0
        %4157 = vperm.xlu0 %4156, %v4139
        %v4158 = vpop.permute.xlu0 %4157
        %4161 = vset.pattern.permute.xlu0 0
        %4162 = vperm.xlu0 %4161, %v4140
        %v4163 = vpop.permute.xlu0 %4162
        %4166 = vset.pattern.permute.xlu0 0
        %4167 = vperm.xlu0 %4166, %v4141
        %v4168 = vpop.permute.xlu0 %4167
        %4171 = vset.pattern.permute.xlu0 0
        %4172 = vperm.xlu0 %4171, %v4142
        %v4173 = vpop.permute.xlu0 %4172
        %4176 = vset.pattern.permute.xlu0 0
        %4177 = vperm.xlu0 %4176, %v4143
        %v4178 = vpop.permute.xlu0 %4177
        %4181 = vset.pattern.permute.xlu0 0
        %4182 = vperm.xlu0 %4181, %v4144
        %v4183 = vpop.permute.xlu0 %4182
        %v4185 = vadd.f32 %v4129, %v4148
        %v4186 = vadd.f32 %v4130, %v4153
        %v4187 = vadd.f32 %v4131, %v4158
        %v4188 = vadd.f32 %v4132, %v4163
        %v4189 = vadd.f32 %v4133, %v4168
        %v4190 = vadd.f32 %v4134, %v4173
        %v4191 = vadd.f32 %v4135, %v4178
        %v4192 = vadd.f32 %v4136, %v4183
        %v4193 = vld [vmem:[%s15] sm:$0xf]
        %v4194 = vld [vmem:[%s15 + $0x4] sm:$0xf]
        %v4195 = vld [vmem:[%s15 + $0x8] sm:$0xf]
        %v4196 = vld [vmem:[%s15 + $0xc] sm:$0xf]
        %v4197 = vld [vmem:[%s15 + $0x10] sm:$0xf]
        %v4198 = vld [vmem:[%s15 + $0x14] sm:$0xf]
        %v4199 = vld [vmem:[%s15 + $0x18] sm:$0xf]
        %v4200 = vld [vmem:[%s15 + $0x1c] sm:$0xf]
        %v4201 = vpack.c.bf16 %v563, %v562
        %v4202 = vpack.c.bf16 %v565, %v564
        %v4203 = vld [vmem:[%s16] sm:$0xff]
        %v4204 = vld [vmem:[%s16 + $0x8] sm:$0xff]
        %v4205 = vld [vmem:[%s16 + $0x10] sm:$0xff]
        %v4206 = vld [vmem:[%s16 + $0x18] sm:$0xff]
        %v4207 = vld [vmem:[%s16 + $0x20] sm:$0xff]
        %v4208 = vld [vmem:[%s16 + $0x28] sm:$0xff]
        %v4209 = vld [vmem:[%s16 + $0x30] sm:$0xff]
        %v4210 = vld [vmem:[%s16 + $0x38] sm:$0xff]
        %4212 = vset.pattern.permute.xlu0 0
        %4213 = vperm.xlu0 %4212, %v4203
        %v4214 = vpop.permute.xlu0 %4213
        %4217 = vset.pattern.permute.xlu0 0
        %4218 = vperm.xlu0 %4217, %v4204
        %v4219 = vpop.permute.xlu0 %4218
        %4222 = vset.pattern.permute.xlu0 0
        %4223 = vperm.xlu0 %4222, %v4205
        %v4224 = vpop.permute.xlu0 %4223
        %4227 = vset.pattern.permute.xlu0 0
        %4228 = vperm.xlu0 %4227, %v4206
        %v4229 = vpop.permute.xlu0 %4228
        %4232 = vset.pattern.permute.xlu0 0
        %4233 = vperm.xlu0 %4232, %v4207
        %v4234 = vpop.permute.xlu0 %4233
        %4237 = vset.pattern.permute.xlu0 0
        %4238 = vperm.xlu0 %4237, %v4208
        %v4239 = vpop.permute.xlu0 %4238
        %4242 = vset.pattern.permute.xlu0 0
        %4243 = vperm.xlu0 %4242, %v4209
        %v4244 = vpop.permute.xlu0 %4243
        %4247 = vset.pattern.permute.xlu0 0
        %4248 = vperm.xlu0 %4247, %v4210
        %v4249 = vpop.permute.xlu0 %4248
        %v4259 = vunpack.c.l.b16 %v4193
        %v4260 = vunpack.c.l.b16 %v4194
        %v4261 = vunpack.c.l.b16 %v4195
        %v4262 = vunpack.c.l.b16 %v4196
        %v4263 = vunpack.c.l.b16 %v4197
        %v4264 = vunpack.c.l.b16 %v4198
        %v4265 = vunpack.c.l.b16 %v4199
        %v4266 = vunpack.c.l.b16 %v4200
        %v4267 = vpack.c.b16 %v4260, %v4259
        %v4268 = vpack.c.b16 %v4262, %v4261
        %v4269 = vpack.c.b16 %v4264, %v4263
        %v4270 = vpack.c.b16 %v4266, %v4265
        %v4272 = vsel %vm615, %v4267, 0
        %v4275 = vsel %vm615, %v4268, 0
        %v4278 = vsel %vm615, %v4269, 0
        %v4281 = vsel %vm615, %v4270, 0
        %4283 = vmatprep.subr.bf16.mxu0 0
        %4284 = vmatpush1.bf16.msra.mxu0 %v4201
        %4285 = vmatprep.subr.bf16.mxu0 0
        %4286 = vmatpush1.bf16.msra.mxu0 %v4202
        %4287 = vmatprep.subr.bf16.mxu0 0
        %4288 = vmatpush1.bf16.msra.mxu0 0
        %4289 = vmatprep.subr.bf16.mxu0 0
        %4290 = vmatpush1.bf16.msra.mxu0 0
        %4291 = vmatprep.subr.bf16.mxu0 0
        %4292 = vmatpush1.bf16.msra.mxu0 0
        %4293 = vmatprep.subr.bf16.mxu0 0
        %4294 = vmatpush1.bf16.msra.mxu0 0
        %4295 = vmatprep.subr.bf16.mxu0 0
        %4296 = vmatpush1.bf16.msra.mxu0 0
        %4297 = vmatprep.subr.bf16.mxu0 0
        %4298 = vmatpush1.bf16.msra.mxu0 0
        %4299 = vmatprep.subr.bf16.mxu0 0
        %4300 = vmatpush1.bf16.msra.mxu0 0
        %4301 = vmatprep.subr.bf16.mxu0 0
        %4302 = vmatpush1.bf16.msra.mxu0 0
        %4303 = vmatprep.subr.bf16.mxu0 0
        %4304 = vmatpush1.bf16.msra.mxu0 0
        %4305 = vmatprep.subr.bf16.mxu0 0
        %4306 = vmatpush1.bf16.msra.mxu0 0
        %4307 = vmatprep.subr.bf16.mxu0 0
        %4308 = vmatpush1.bf16.msra.mxu0 0
        %4309 = vmatprep.subr.bf16.mxu0 0
        %4310 = vmatpush1.bf16.msra.mxu0 0
        %4311 = vmatprep.subr.bf16.mxu0 0
        %4312 = vmatpush1.bf16.msra.mxu0 0
        %4313 = vmatprep.subr.bf16.mxu0 0
        %4314 = vmatpush1.bf16.msra.mxu0 0
        %4315 = vmatprep.mubr.bf16.mxu0 0
        %4316 = vmatmul.mubr.bf16.gmra.mrb[0].mxu0 %v4272
        %v4317 = vpop.f32.mrb[0].mxu0
        %v4318 = vadd.f32 %v4214, %v4317
        %v4319 = vpop.f32.mrb[0].mxu0
        %v4320 = vpop.f32.mrb[0].mxu0
        %v4321 = vadd.f32 %v4219, %v4320
        %v4322 = vpop.f32.mrb[0].mxu0
        %4323 = vmatprep.mubr.bf16.mxu0 0
        %4324 = vmatmul.mubr.bf16.gmra.mrb[0].mxu0 %v4275
        %v4325 = vpop.f32.mrb[0].mxu0
        %v4326 = vadd.f32 %v4224, %v4325
        %v4327 = vpop.f32.mrb[0].mxu0
        %v4328 = vpop.f32.mrb[0].mxu0
        %v4329 = vadd.f32 %v4229, %v4328
        %v4330 = vpop.f32.mrb[0].mxu0
        %4331 = vmatprep.mubr.bf16.mxu0 0
        %4332 = vmatmul.mubr.bf16.gmra.mrb[0].mxu0 %v4278
        %v4333 = vpop.f32.mrb[0].mxu0
        %v4334 = vadd.f32 %v4234, %v4333
        %v4335 = vpop.f32.mrb[0].mxu0
        %v4336 = vpop.f32.mrb[0].mxu0
        %v4337 = vadd.f32 %v4239, %v4336
        %v4338 = vpop.f32.mrb[0].mxu0
        %4339 = vmatprep.mubr.bf16.mxu0 0
        %4340 = vmatmul.mubr.bf16.gmra.mrb[0].mxu0 %v4281
        %v4341 = vpop.f32.mrb[0].mxu0
        %v4342 = vadd.f32 %v4244, %v4341
        %v4343 = vpop.f32.mrb[0].mxu0
        %v4344 = vpop.f32.mrb[0].mxu0
        %v4345 = vadd.f32 %v4249, %v4344
        %v4346 = vpop.f32.mrb[0].mxu0
        %4347 = vdwg.mxu0
        %v4348 = vadd.f32 %v4318, %v4185
        %v4349 = vadd.f32 %v4321, %v4186
        %v4350 = vadd.f32 %v4326, %v4187
        %v4351 = vadd.f32 %v4329, %v4188
        %v4352 = vadd.f32 %v4334, %v4189
        %v4353 = vadd.f32 %v4337, %v4190
        %v4354 = vadd.f32 %v4342, %v4191
        %v4355 = vadd.f32 %v4345, %v4192
        %4356 = vst.msk [vmem:[%s552] sm:$0xff] %vm566, %v4348
        %4357 = vst.msk [vmem:[%s552 + $0x8] sm:$0xff] %vm566, %v4349
        %4358 = vst.msk [vmem:[%s552 + $0x10] sm:$0xff] %vm566, %v4350
        %4359 = vst.msk [vmem:[%s552 + $0x18] sm:$0xff] %vm566, %v4351
        %4360 = vst.msk [vmem:[%s552 + $0x20] sm:$0xff] %vm566, %v4352
        %4361 = vst.msk [vmem:[%s552 + $0x28] sm:$0xff] %vm566, %v4353
        %4362 = vst.msk [vmem:[%s552 + $0x30] sm:$0xff] %vm566, %v4354
        %4363 = vst.msk [vmem:[%s552 + $0x38] sm:$0xff] %vm566, %v4355
        %s4364 = sand.u32 %s406, 1
        %s4365 = scalar_lea.sflag [#allocation3], %s4364
        %s4366 = sand.u32 %s406, 1
        %s4367 = smul.addr %s4366, 64
        %s4368 = scalar_lea.vmem [#allocation2], %s4367
        // Predicated region
        $region89: #{tpu_custom_call.1} parent=87 // pred_check
          %p4369 = pneg %p416
        $region90: #{tpu_custom_call.1} parent=87 // pred_check_branch
          %4371 = sbr.rel (%p4369) target = $region92
        $region91: #{tpu_custom_call.1} parent=87 // pred_region
          %s4373 = ssub.s32 1024, 1024
          %4374 = vsyncadd %s4365, %s4373
          %s4375 = smul.addr %s31, 8
          %s4376 = smul.addr %s4375, 128
          %s4377 = scalar_lea.hbm %s17, %s4376
          %s4378 = sshll.u32 %s4368, 4
          %s4379 = int_to_ptr.vmem [resolvable:$true] %s4378
          %4384 = dma.vmem_to_hbm [thread:$0]  %s4379, 1024, %s4377, %s4365, 128, 128, 8
        $region92: #{tpu_custom_call.1} parent=87 // pred_fallthru
          _
      $region88: #{tpu_custom_call.1} parent=5 // pred_fallthru
        _
      %p4385 = scmp.le.s32.totalorder 2, %s26
      // Predicated region
      $region93: #{tpu_custom_call.1} parent=5 // pred_check
        %p4386 = pneg %p4385
      $region94: #{tpu_custom_call.1} parent=5 // pred_check_branch
        %4388 = sbr.rel (%p4386) target = $region96
      $region95: #{tpu_custom_call.1} parent=5 // pred_region
        %s4389 = ssub.s32 %s26, 2
        // Predicated region
        $region97: #{tpu_custom_call.1} parent=95 // pred_check
          %p4390 = pneg %p422
        $region98: #{tpu_custom_call.1} parent=95 // pred_check_branch
          %4392 = sbr.rel (%p4390) target = $region100
        $region99: #{tpu_custom_call.1} parent=95 // pred_region
          %s4393 = sand.u32 %s407, 1
          %s4394 = scalar_lea.sflag [#allocation3], %s4393
          %s4395 = sand.u32 %s407, 1
          %s4396 = smul.addr %s4395, 64
          %s4397 = scalar_lea.vmem [#allocation2], %s4396
          %4398 = dma.done %s4394, 1024
        $region100: #{tpu_custom_call.1} parent=95 // pred_fallthru
          _
      $region96: #{tpu_custom_call.1} parent=5 // pred_fallthru
        _
    $region6: #{tpu_custom_call.1} parent=1 // loop_footer
      %s30 = sadd.s32 1, %s26
    $region7: #{tpu_custom_call.1} parent=1 // loop_footer_branch
      %25 = sbr.rel target = $region3
    $region8: #{tpu_custom_call.1} parent=1 // loop_exit
      _
    %4399 = vsyncpa [#allocation3], 1
    %s4400 = scalar_lea.sflag [#allocation3], 1
    %4401 = vsyncpa %s4400, 1

</llo_original>
